<compile_context>
chip_gen: v7x
topology: tpu7x:2x2x1
jax: 0.10.0
libtpu: 0.0.40
codegen_flags: <defaults>
</compile_context>

<pallas_src>
import math
import functools
import numpy as np

import jax
import jax.numpy as jnp
from jax.experimental import pallas as pl
from jax.experimental.pallas import tpu as pltpu


def _round_up(x, m):
    return ((x + m - 1) // m) * m


# ----------------------------- kernels -------------------------------------


def _layer_norm(y, g, b, d_real, fmask, eps=1e-5):
    """LayerNorm over the first `d_real` features of a lane-padded tensor.

    Padded lanes of y are zero on entry; gamma/beta are zero-padded, so the
    padded lanes stay exactly zero on exit.
    """
    mu = jnp.sum(y, axis=-1, keepdims=True) / d_real
    diff = (y - mu) * fmask
    var = jnp.sum(diff * diff, axis=-1, keepdims=True) / d_real
    return diff * jax.lax.rsqrt(var + eps) * g + b


def _decoder_stack_kernel(x0_ref, mask_ref,
                          wq_ref, bq_ref, wk_ref, bk_ref, wv_ref, bv_ref,
                          wo_ref, bo_ref, g1_ref, b1n_ref,
                          w1_ref, b1_ref, w2_ref, b2_ref, g2_ref, b2n_ref,
                          out_ref, attn_ref, x_sc, *, d_real, n_heads, dh_pad):
    """grid = (batch, layer).  One step = one decoder layer for one sequence."""
    l = pl.program_id(1)

    # First layer of each sequence: load the embedded input into the carry.
    @pl.when(l == 0)
    def _():
        x_sc[...] = x0_ref[0]

    x = x_sc[...]                                   # (S, Dp) f32 hidden state
    S, Dp = x.shape
    H, Dhp = n_heads, dh_pad

    col = jax.lax.broadcasted_iota(jnp.int32, (1, Dp), 1)
    fmask = (col < d_real).astype(jnp.float32)      # 1 on real features, 0 on pad

    # ---- masked multi-head self-attention (bf16 MXU, f32 accumulate) ------
    x16 = x.astype(jnp.bfloat16)
    q = jnp.dot(x16, wq_ref[0], preferred_element_type=jnp.float32) + bq_ref[0]
    k = jnp.dot(x16, wk_ref[0], preferred_element_type=jnp.float32) + bk_ref[0]
    v = jnp.dot(x16, wv_ref[0], preferred_element_type=jnp.float32) + bv_ref[0]

    # Head axis becomes a batch dim of a single einsum (no Python head loop).
    qh = q.reshape(S, H, Dhp).swapaxes(0, 1).astype(jnp.bfloat16)   # (H,S,Dhp)
    kh = k.reshape(S, H, Dhp).swapaxes(0, 1).astype(jnp.bfloat16)
    vh = v.reshape(S, H, Dhp).swapaxes(0, 1).astype(jnp.bfloat16)

    m_add = mask_ref[0]                              # (S,S) additive mask (0 / -1e9)
    # 1/sqrt(d_head) is folded into wq/bq by the wrapper.
    s = jnp.einsum("hqd,hkd->hqk", qh, kh,
                   preferred_element_type=jnp.float32) + m_add[None]
    s_max = jnp.max(s, axis=-1, keepdims=True)
    e = jnp.exp(s - s_max)
    a = e * pl.reciprocal(jnp.sum(e, axis=-1, keepdims=True), approx=True)
    # Guard degenerate fully-masked query rows -> zero attention / context.
    row_ok = (jnp.max(m_add, axis=-1, keepdims=True) > -0.5).astype(jnp.float32)
    a = a * row_ok[None]                             # (H,S,S) f32 softmax

    ctx = jnp.einsum("hqk,hkd->hqd", a.astype(jnp.bfloat16), vh,
                     preferred_element_type=jnp.float32)
    ctx = ctx.swapaxes(0, 1).reshape(S, Dp)
    attn_out = (jnp.dot(ctx.astype(jnp.bfloat16), wo_ref[0],
                        preferred_element_type=jnp.float32) + bo_ref[0])

    # TODO(synk): dropout omitted (eval/inference semantics; dropout_rate unused).
    y = _layer_norm(x + attn_out, g1_ref[0], b1n_ref[0], d_real, fmask)

    # ---- position-wise feed-forward ---------------------------------------
    hdn = jnp.maximum(
        jnp.dot(y.astype(jnp.bfloat16), w1_ref[0],
                preferred_element_type=jnp.float32) + b1_ref[0], 0.0)
    ff = (jnp.dot(hdn.astype(jnp.bfloat16), w2_ref[0],
                  preferred_element_type=jnp.float32) + b2_ref[0])
    x_new = _layer_norm(y + ff, g2_ref[0], b2n_ref[0], d_real, fmask)

    x_sc[...] = x_new

    # Only the last layer's hidden state and attention leave the kernel.
    @pl.when(l == pl.num_programs(1) - 1)
    def _():
        out_ref[0] = x_new
        attn_ref[0] = a.astype(attn_ref.dtype)


def _fc_kernel(x_ref, w_ref, b_ref, o_ref):
    """Vocabulary projection tile: (B*S, Dp) @ (Dp, tile_v) + (1, tile_v)."""
    o_ref[...] = (jnp.dot(x_ref[...].astype(jnp.bfloat16), w_ref[...],
                          preferred_element_type=jnp.float32)
                  + b_ref[...]).astype(o_ref.dtype)


# ----------------------------- wrappers ------------------------------------


def decoder_stack(x0, mask_add, stk, *, n_heads, d_real):
    B, S, Dp = x0.shape
    L = stk["wq"].shape[0]
    Fp = stk["w1"].shape[-1]
    H = n_heads
    dh_pad = Dp // H

    def lmap(nd):                      # per-layer parameter blocks
        zeros = (0,) * (nd - 1)
        return lambda b, l: (l,) + zeros

    def bmap(nd):                      # per-batch activation blocks
        zeros = (0,) * (nd - 1)
        return lambda b, l: (b,) + zeros

    in_specs = [
        pl.BlockSpec((1, S, Dp), bmap(3)),      # x0 (embedded input)
        pl.BlockSpec((1, S, S), bmap(3)),       # additive attention mask
        pl.BlockSpec((1, Dp, Dp), lmap(3)),     # wq
        pl.BlockSpec((1, 1, Dp), lmap(3)),      # bq
        pl.BlockSpec((1, Dp, Dp), lmap(3)),     # wk
        pl.BlockSpec((1, 1, Dp), lmap(3)),      # bk
        pl.BlockSpec((1, Dp, Dp), lmap(3)),     # wv
        pl.BlockSpec((1, 1, Dp), lmap(3)),      # bv
        pl.BlockSpec((1, Dp, Dp), lmap(3)),     # wo
        pl.BlockSpec((1, 1, Dp), lmap(3)),      # bo
        pl.BlockSpec((1, 1, Dp), lmap(3)),      # ln1 gamma
        pl.BlockSpec((1, 1, Dp), lmap(3)),      # ln1 beta
        pl.BlockSpec((1, Dp, Fp), lmap(3)),     # w1
        pl.BlockSpec((1, 1, Fp), lmap(3)),      # b1
        pl.BlockSpec((1, Fp, Dp), lmap(3)),     # w2
        pl.BlockSpec((1, 1, Dp), lmap(3)),      # b2
        pl.BlockSpec((1, 1, Dp), lmap(3)),      # ln2 gamma
        pl.BlockSpec((1, 1, Dp), lmap(3)),      # ln2 beta
    ]
    out_specs = (pl.BlockSpec((1, S, Dp), bmap(3)),
                 pl.BlockSpec((1, H, S, S), lambda b, l: (b, 0, 0, 0)))

    args = (x0, mask_add,
            stk["wq"], stk["bq"], stk["wk"], stk["bk"], stk["wv"], stk["bv"],
            stk["wo"], stk["bo"], stk["g1"], stk["b1n"],
            stk["w1"], stk["b1"], stk["w2"], stk["b2"], stk["g2"], stk["b2n"])

    return pl.pallas_call(
        functools.partial(_decoder_stack_kernel, d_real=d_real,
                          n_heads=H, dh_pad=dh_pad),
        out_shape=(jax.ShapeDtypeStruct((B, S, Dp), jnp.float32),
                   jax.ShapeDtypeStruct((B, H, S, S), jnp.float32)),
        grid_spec=pltpu.PrefetchScalarGridSpec(
            num_scalar_prefetch=0,
            grid=(B, L),
            in_specs=in_specs,
            out_specs=out_specs,
            scratch_shapes=[pltpu.VMEM((S, Dp), jnp.float32)]),
        compiler_params=pltpu.CompilerParams(
            dimension_semantics=("parallel", "arbitrary"),
            vmem_limit_bytes=64 * 1024 * 1024),
    )(*args)


def fc_linear(x_flat, w_p, b_p, *, tile_v=128):
    R, Dp = x_flat.shape
    Vp = w_p.shape[-1]
    return pl.pallas_call(
        _fc_kernel,
        out_shape=jax.ShapeDtypeStruct((R, Vp), jnp.float32),
        grid_spec=pltpu.PrefetchScalarGridSpec(
            num_scalar_prefetch=0,
            grid=(Vp // tile_v,),
            in_specs=[pl.BlockSpec((R, Dp), lambda j: (0, 0)),
                      pl.BlockSpec((Dp, tile_v), lambda j: (0, j)),
                      pl.BlockSpec((1, tile_v), lambda j: (0, j))],
            out_specs=pl.BlockSpec((R, tile_v), lambda j: (0, j))),
        compiler_params=pltpu.CompilerParams(
            dimension_semantics=("parallel",)),
    )(x_flat, w_p, b_p)


def sinusoidal_pe(max_len, d_model):
    pos = np.arange(max_len, dtype=np.float32)[:, None]
    div = np.exp(np.arange(0, d_model, 2, dtype=np.float32)
                 * (-math.log(10000.0) / d_model))
    pe = np.zeros((max_len, d_model), dtype=np.float32)
    pe[:, 0::2] = np.sin(pos * div)
    pe[:, 1::2] = np.cos(pos * div)
    return jnp.asarray(pe)


def transformer_forward(tokens, packed, pe_p, *, pad_index, n_heads,
                        d_model, vocab_size):
    """Returns (logits [B,S,V], attention [B,H,S,S]) — last layer's attention."""
    B, S = tokens.shape
    Dp = packed["embedding"].shape[1]
    # Embedding gather + scale + positional encoding: plain-JAX glue.
    x = jnp.take(packed["embedding"], tokens, axis=0) * math.sqrt(d_model)
    x = (x + pe_p[:S][None, :, :]).astype(jnp.float32)        # (B, S, Dp)

    # additive attention mask: 0 where (non-pad key AND causal), else -1e9
    keep = jnp.logical_and((tokens != pad_index)[:, None, :],
                           jnp.tril(jnp.ones((S, S), dtype=bool))[None])
    mask_add = jnp.where(keep, 0.0, -1e9).astype(jnp.float32)  # (B, S, S)

    out, attention = decoder_stack(x, mask_add, packed["layers"],
                                   n_heads=n_heads, d_real=d_model)
    logits_p = fc_linear(out.reshape(B * S, Dp), packed["fc_w"], packed["fc_b"])
    logits = logits_p[:, :vocab_size].reshape(B, S, vocab_size)
    return logits, attention


# ----------------------------- parameters ----------------------------------


def init_params(key, *, vocab_size, d_model, ff_dim, n_layers):
    def dense(k, fan_in, fan_out):
        kw, kb = jax.random.split(k)
        w = jax.random.normal(kw, (fan_in, fan_out), jnp.float32) * 0.02
        b = jax.random.normal(kb, (1, fan_out), jnp.float32) * 0.02
        return w, b

    keys = jax.random.split(key, n_layers + 2)
    params = {
        "embedding": jax.random.normal(keys[0], (vocab_size, d_model),
                                       jnp.float32) * 0.02,
    }
    params["fc_w"], params["fc_b"] = dense(keys[1], d_model, vocab_size)

    layers = []
    for li in range(n_layers):
        lk = jax.random.split(keys[2 + li], 6)
        wq, bq = dense(lk[0], d_model, d_model)
        wk, bk = dense(lk[1], d_model, d_model)
        wv, bv = dense(lk[2], d_model, d_model)
        wo, bo = dense(lk[3], d_model, d_model)
        w1, b1 = dense(lk[4], d_model, ff_dim)
        w2, b2 = dense(lk[5], ff_dim, d_model)
        layers.append({
            "wq": wq, "bq": bq, "wk": wk, "bk": bk, "wv": wv, "bv": bv,
            "wo": wo, "bo": bo,
            "ln1_g": jnp.ones((1, d_model), jnp.float32),
            "ln1_b": jnp.zeros((1, d_model), jnp.float32),
            "w1": w1, "b1": b1, "w2": w2, "b2": b2,
            "ln2_g": jnp.ones((1, d_model), jnp.float32),
            "ln2_b": jnp.zeros((1, d_model), jnp.float32),
        })
    params["layers"] = layers
    return params


def pack_params(params, *, n_heads, lane=128):
    """Pad to lane-dense shapes, head-block the QKV/WO layouts, fold the
    attention scale into Wq, stack layers on a leading axis, cast MXU weights
    to bf16."""
    D = params["embedding"].shape[1]
    H = n_heads
    Dh = D // H
    Dp = _round_up(D, lane)
    assert Dp % H == 0, "lane-padded d_model must stay divisible by n_heads"
    Dhp = Dp // H
    V = params["fc_w"].shape[1]
    Vp = _round_up(V, lane)
    F = params["layers"][0]["w1"].shape[1]
    Fp = _round_up(F, lane)
    bf = jnp.bfloat16

    def pad2(a, r, c):
        return jnp.pad(a, ((0, r - a.shape[0]), (0, c - a.shape[1])))

    def head_cols(w):   # (D,D): rows padded at end, output cols head-blocked
        w = w.reshape(D, H, Dh)
        w = jnp.pad(w, ((0, Dp - D), (0, 0), (0, Dhp - Dh)))
        return w.reshape(Dp, Dp)

    def head_cols_bias(b):
        b = b.reshape(1, H, Dh)
        b = jnp.pad(b, ((0, 0), (0, 0), (0, Dhp - Dh)))
        return b.reshape(1, Dp)

    def head_rows(w):   # (D,D): input rows head-blocked, cols padded at end
        w = w.reshape(H, Dh, D)
        w = jnp.pad(w, ((0, 0), (0, Dhp - Dh), (0, Dp - D)))
        return w.reshape(Dp, Dp)

    scale = 1.0 / math.sqrt(Dh)
    keys = ("wq", "bq", "wk", "bk", "wv", "bv", "wo", "bo",
            "g1", "b1n", "w1", "b1", "w2", "b2", "g2", "b2n")
    stk = {k: [] for k in keys}
    for lp in params["layers"]:
        stk["wq"].append(head_cols(lp["wq"] * scale).astype(bf))
        stk["bq"].append(head_cols_bias(lp["bq"] * scale))
        stk["wk"].append(head_cols(lp["wk"]).astype(bf))
        stk["bk"].append(head_cols_bias(lp["bk"]))
        stk["wv"].append(head_cols(lp["wv"]).astype(bf))
        stk["bv"].append(head_cols_bias(lp["bv"]))
        stk["wo"].append(head_rows(lp["wo"]).astype(bf))
        stk["bo"].append(pad2(lp["bo"], 1, Dp))
        stk["g1"].append(pad2(lp["ln1_g"], 1, Dp))
        stk["b1n"].append(pad2(lp["ln1_b"], 1, Dp))
        stk["w1"].append(pad2(lp["w1"], Dp, Fp).astype(bf))
        stk["b1"].append(pad2(lp["b1"], 1, Fp))
        stk["w2"].append(pad2(lp["w2"], Fp, Dp).astype(bf))
        stk["b2"].append(pad2(lp["b2"], 1, Dp))
        stk["g2"].append(pad2(lp["ln2_g"], 1, Dp))
        stk["b2n"].append(pad2(lp["ln2_b"], 1, Dp))
    stk = {k: jnp.stack(v) for k, v in stk.items()}

    return {
        "layers": stk,
        "embedding": jnp.pad(params["embedding"], ((0, 0), (0, Dp - D))),
        "fc_w": pad2(params["fc_w"], Dp, Vp).astype(bf),
        "fc_b": pad2(params["fc_b"], 1, Vp),
    }


# ----------------------------- main -----------------------------------------


if __name__ == "__main__":
    pad_index = 0
    vocab_size = 50
    d_model = 32
    max_seq_len = 16
    n_heads = 4
    n_layers = 2
    ff_dim = 64
    batch_size = 2
    seq_len = 8

    root = jax.random.PRNGKey(0)
    tok_key, param_key = jax.random.split(root)

    params = init_params(param_key, vocab_size=vocab_size, d_model=d_model,
                         ff_dim=ff_dim, n_layers=n_layers)
    packed = pack_params(params, n_heads=n_heads)
    Dp = packed["embedding"].shape[1]
    pe = sinusoidal_pe(max_seq_len, d_model)
    pe_p = jnp.pad(pe, ((0, 0), (0, Dp - d_model)))

    tokens = jax.random.randint(tok_key, (batch_size, seq_len), 1, vocab_size,
                                dtype=jnp.int32)
    # Put a couple of [PAD] tokens at the end of batch 1 to exercise the pad mask.
    tokens = tokens.at[1, seq_len - 2:].set(pad_index)

    fwd = jax.jit(functools.partial(transformer_forward,
                                    pad_index=pad_index, n_heads=n_heads,
                                    d_model=d_model, vocab_size=vocab_size))
    logits, attention = fwd(tokens, packed, pe_p)
    jax.block_until_ready((logits, attention))

    assert logits.shape == (batch_size, seq_len, vocab_size)
    assert attention.shape == (batch_size, n_heads, seq_len, seq_len)
    assert bool(jnp.all(jnp.isfinite(logits)))
    assert bool(jnp.all(jnp.isfinite(attention)))
    # Causality check: attention to strictly-future positions must be ~0.
    future = jnp.triu(jnp.ones((seq_len, seq_len)), k=1)[None, None]
    assert float(jnp.max(attention * future)) < 1e-6
    # Attention rows for valid (non-degenerate) queries sum to ~1.
    row_sums = jnp.sum(attention[0], axis=-1)
    assert float(jnp.max(jnp.abs(row_sums - 1.0))) < 1e-2

    print("KERNEL_OK")
</pallas_src>

<mosaic_0001>
module attributes {stable_mosaic.version = 11 : i64} {
  func.func @_fc_kernel(%arg0: i32, %arg1: memref<16x128xf32, #tpu.memory_space<vmem>>, %arg2: memref<128x128xbf16, #tpu.memory_space<vmem>>, %arg3: memref<1x128xf32, #tpu.memory_space<vmem>>, %arg4: memref<16x128xf32, #tpu.memory_space<vmem>>) attributes {dimension_semantics = [#tpu.dimension_semantics<parallel>], iteration_bounds = array<i64: 1>, scalar_prefetch = 0 : i64, scratch_operands = 0 : i64, tpu.core_type = #tpu.core_type<tc>, window_params = [{pipeline_mode = #tpu.pipeline_mode<synchronous>, transform_indices = @transform_0, window_bounds = array<i64: 16, 128>}, {transform_indices = @transform_1, window_bounds = array<i64: 128, 128>}, {transform_indices = @transform_2, window_bounds = array<i64: 1, 128>}, {transform_indices = @transform_3, window_bounds = array<i64: 16, 128>}]} {
    %c0 = arith.constant 0 : index
    %c0_0 = arith.constant 0 : index
    %0 = vector.load %arg1[%c0, %c0_0] : memref<16x128xf32, #tpu.memory_space<vmem>>, vector<16x128xf32>
    %1 = arith.truncf %0 : vector<16x128xf32> to vector<16x128xbf16>
    %c0_1 = arith.constant 0 : index
    %c0_2 = arith.constant 0 : index
    %2 = vector.load %arg2[%c0_1, %c0_2] : memref<128x128xbf16, #tpu.memory_space<vmem>>, vector<128x128xbf16>
    %cst = arith.constant dense<0.000000e+00> : vector<16x128xf32>
    %3 = tpu.matmul %1, %2, %cst {dimension_numbers = #tpu.dot_dimension_numbers<[1], [0], [0], [1], [0, 0, 1, 1], [], []>} : vector<16x128xbf16>, vector<128x128xbf16>, vector<16x128xf32> -> vector<16x128xf32>
    %c0_3 = arith.constant 0 : index
    %c0_4 = arith.constant 0 : index
    %4 = vector.load %arg3[%c0_3, %c0_4] : memref<1x128xf32, #tpu.memory_space<vmem>>, vector<1x128xf32>
    %5 = vector.broadcast %4 : vector<1x128xf32> to vector<16x128xf32>
    %6 = arith.addf %3, %5 : vector<16x128xf32>
    %c0_5 = arith.constant 0 : index
    %c0_6 = arith.constant 0 : index
    %7 = vector.load %arg4[%c0_5, %c0_6] : memref<16x128xf32, #tpu.memory_space<vmem>>, vector<16x128xf32>
    tpu.vector_store %arg4[%c0_5, %c0_6], %6 {strides = array<i32>} : memref<16x128xf32, #tpu.memory_space<vmem>>, vector<16x128xf32>,
    return
  }
  func.func @transform_0(%arg0: i32) -> (i32, i32) {
    %c0_i32 = arith.constant 0 : i32
    %c0_i32_0 = arith.constant 0 : i32
    %c0_i32_1 = arith.constant 0 : i32
    return %c0_i32, %c0_i32_0 : i32, i32
  }
  func.func @transform_1(%arg0: i32) -> (i32, i32) {
    %c0_i32 = arith.constant 0 : i32
    %c0_i32_0 = arith.constant 0 : i32
    return %c0_i32, %arg0 : i32, i32
  }
  func.func @transform_2(%arg0: i32) -> (i32, i32) {
    %c0_i32 = arith.constant 0 : i32
    %c0_i32_0 = arith.constant 0 : i32
    return %c0_i32, %arg0 : i32, i32
  }
  func.func @transform_3(%arg0: i32) -> (i32, i32) {
    %c0_i32 = arith.constant 0 : i32
    %c0_i32_0 = arith.constant 0 : i32
    return %c0_i32, %arg0 : i32, i32
  }
}

module attributes {stable_mosaic.version = 11 : i64} {
  func.func @_decoder_stack_kernel(%arg0: i32, %arg1: i32, %arg2: memref<1x8x128xf32, #tpu.memory_space<vmem>>, %arg3: memref<1x8x8xf32, #tpu.memory_space<vmem>>, %arg4: memref<1x128x128xbf16, #tpu.memory_space<vmem>>, %arg5: memref<1x1x128xf32, #tpu.memory_space<vmem>>, %arg6: memref<1x128x128xbf16, #tpu.memory_space<vmem>>, %arg7: memref<1x1x128xf32, #tpu.memory_space<vmem>>, %arg8: memref<1x128x128xbf16, #tpu.memory_space<vmem>>, %arg9: memref<1x1x128xf32, #tpu.memory_space<vmem>>, %arg10: memref<1x128x128xbf16, #tpu.memory_space<vmem>>, %arg11: memref<1x1x128xf32, #tpu.memory_space<vmem>>, %arg12: memref<1x1x128xf32, #tpu.memory_space<vmem>>, %arg13: memref<1x1x128xf32, #tpu.memory_space<vmem>>, %arg14: memref<1x128x128xbf16, #tpu.memory_space<vmem>>, %arg15: memref<1x1x128xf32, #tpu.memory_space<vmem>>, %arg16: memref<1x128x128xbf16, #tpu.memory_space<vmem>>, %arg17: memref<1x1x128xf32, #tpu.memory_space<vmem>>, %arg18: memref<1x1x128xf32, #tpu.memory_space<vmem>>, %arg19: memref<1x1x128xf32, #tpu.memory_space<vmem>>, %arg20: memref<1x8x128xf32, #tpu.memory_space<vmem>>, %arg21: memref<1x4x8x8xf32, #tpu.memory_space<vmem>>, %arg22: memref<8x128xf32, #tpu.memory_space<vmem>>) attributes {dimension_semantics = [#tpu.dimension_semantics<parallel>, #tpu.dimension_semantics<arbitrary>], iteration_bounds = array<i64: 2, 2>, scalar_prefetch = 0 : i64, scratch_operands = 1 : i64, tpu.core_type = #tpu.core_type<tc>, window_params = [{transform_indices = @transform_0, window_bounds = array<i64: 1, 8, 128>}, {transform_indices = @transform_1, window_bounds = array<i64: 1, 8, 8>}, {transform_indices = @transform_2, window_bounds = array<i64: 1, 128, 128>}, {transform_indices = @transform_3, window_bounds = array<i64: 1, 1, 128>}, {transform_indices = @transform_4, window_bounds = array<i64: 1, 128, 128>}, {transform_indices = @transform_5, window_bounds = array<i64: 1, 1, 128>}, {transform_indices = @transform_6, window_bounds = array<i64: 1, 128, 128>}, {transform_indices = @transform_7, window_bounds = array<i64: 1, 1, 128>}, {transform_indices = @transform_8, window_bounds = array<i64: 1, 128, 128>}, {transform_indices = @transform_9, window_bounds = array<i64: 1, 1, 128>}, {transform_indices = @transform_10, window_bounds = array<i64: 1, 1, 128>}, {transform_indices = @transform_11, window_bounds = array<i64: 1, 1, 128>}, {transform_indices = @transform_12, window_bounds = array<i64: 1, 128, 128>}, {transform_indices = @transform_13, window_bounds = array<i64: 1, 1, 128>}, {transform_indices = @transform_14, window_bounds = array<i64: 1, 128, 128>}, {transform_indices = @transform_15, window_bounds = array<i64: 1, 1, 128>}, {transform_indices = @transform_16, window_bounds = array<i64: 1, 1, 128>}, {transform_indices = @transform_17, window_bounds = array<i64: 1, 1, 128>}, {transform_indices = @transform_18, window_bounds = array<i64: 1, 8, 128>}, {transform_indices = @transform_19, window_bounds = array<i64: 1, 4, 8, 8>}]} {
    %c0_i32 = arith.constant 0 : i32
    %0 = arith.cmpi eq, %arg1, %c0_i32 : i32
    %1 = arith.extui %0 : i1 to i32
    %c0_i32_0 = arith.constant 0 : i32
    %2 = arith.cmpi ne, %1, %c0_i32_0 : i32
    scf.if %2 {
      %c0_78 = arith.constant 0 : index
      %c0_79 = arith.constant 0 : index
      %c0_80 = arith.constant 0 : index
      %153 = vector.load %arg2[%c0_78, %c0_79, %c0_80] : memref<1x8x128xf32, #tpu.memory_space<vmem>>, vector<1x8x128xf32>
      %154 = vector.shape_cast %153 : vector<1x8x128xf32> to vector<8x128xf32>
      %c0_81 = arith.constant 0 : index
      %c0_82 = arith.constant 0 : index
      %155 = vector.load %arg22[%c0_81, %c0_82] : memref<8x128xf32, #tpu.memory_space<vmem>>, vector<8x128xf32>
      tpu.vector_store %arg22[%c0_81, %c0_82], %154 {strides = array<i32>} : memref<8x128xf32, #tpu.memory_space<vmem>>, vector<8x128xf32>,
    } else {
    }
    %c0 = arith.constant 0 : index
    %c0_1 = arith.constant 0 : index
    %3 = vector.load %arg22[%c0, %c0_1] : memref<8x128xf32, #tpu.memory_space<vmem>>, vector<8x128xf32>
    %4 = tpu.iota {dimensions = array<i32: 1>} : vector<1x128xi32>
    %c32_i32 = arith.constant 32 : i32
    %5 = vector.broadcast %c32_i32 : i32 to vector<1x128xi32>
    %6 = arith.cmpi slt, %4, %5 : vector<1x128xi32>
    %7 = arith.extui %6 : vector<1x128xi1> to vector<1x128xi32>
    %8 = arith.sitofp %7 : vector<1x128xi32> to vector<1x128xf32>
    %9 = arith.truncf %3 : vector<8x128xf32> to vector<8x128xbf16>
    %c0_2 = arith.constant 0 : index
    %c0_3 = arith.constant 0 : index
    %c0_4 = arith.constant 0 : index
    %10 = vector.load %arg4[%c0_2, %c0_3, %c0_4] : memref<1x128x128xbf16, #tpu.memory_space<vmem>>, vector<1x128x128xbf16>
    %11 = vector.shape_cast %10 : vector<1x128x128xbf16> to vector<128x128xbf16>
    %cst = arith.constant dense<0.000000e+00> : vector<8x128xf32>
    %12 = tpu.matmul %9, %11, %cst {dimension_numbers = #tpu.dot_dimension_numbers<[1], [0], [0], [1], [0, 0, 1, 1], [], []>} : vector<8x128xbf16>, vector<128x128xbf16>, vector<8x128xf32> -> vector<8x128xf32>
    %c0_5 = arith.constant 0 : index
    %c0_6 = arith.constant 0 : index
    %c0_7 = arith.constant 0 : index
    %13 = vector.load %arg5[%c0_5, %c0_6, %c0_7] : memref<1x1x128xf32, #tpu.memory_space<vmem>>, vector<1x1x128xf32>
    %14 = vector.shape_cast %13 : vector<1x1x128xf32> to vector<1x128xf32>
    %15 = vector.broadcast %14 : vector<1x128xf32> to vector<8x128xf32>
    %16 = arith.addf %12, %15 : vector<8x128xf32>
    %c0_8 = arith.constant 0 : index
    %c0_9 = arith.constant 0 : index
    %c0_10 = arith.constant 0 : index
    %17 = vector.load %arg6[%c0_8, %c0_9, %c0_10] : memref<1x128x128xbf16, #tpu.memory_space<vmem>>, vector<1x128x128xbf16>
    %18 = vector.shape_cast %17 : vector<1x128x128xbf16> to vector<128x128xbf16>
    %cst_11 = arith.constant dense<0.000000e+00> : vector<8x128xf32>
    %19 = tpu.matmul %9, %18, %cst_11 {dimension_numbers = #tpu.dot_dimension_numbers<[1], [0], [0], [1], [0, 0, 1, 1], [], []>} : vector<8x128xbf16>, vector<128x128xbf16>, vector<8x128xf32> -> vector<8x128xf32>
    %c0_12 = arith.constant 0 : index
    %c0_13 = arith.constant 0 : index
    %c0_14 = arith.constant 0 : index
    %20 = vector.load %arg7[%c0_12, %c0_13, %c0_14] : memref<1x1x128xf32, #tpu.memory_space<vmem>>, vector<1x1x128xf32>
    %21 = vector.shape_cast %20 : vector<1x1x128xf32> to vector<1x128xf32>
    %22 = vector.broadcast %21 : vector<1x128xf32> to vector<8x128xf32>
    %23 = arith.addf %19, %22 : vector<8x128xf32>
    %c0_15 = arith.constant 0 : index
    %c0_16 = arith.constant 0 : index
    %c0_17 = arith.constant 0 : index
    %24 = vector.load %arg8[%c0_15, %c0_16, %c0_17] : memref<1x128x128xbf16, #tpu.memory_space<vmem>>, vector<1x128x128xbf16>
    %25 = vector.shape_cast %24 : vector<1x128x128xbf16> to vector<128x128xbf16>
    %cst_18 = arith.constant dense<0.000000e+00> : vector<8x128xf32>
    %26 = tpu.matmul %9, %25, %cst_18 {dimension_numbers = #tpu.dot_dimension_numbers<[1], [0], [0], [1], [0, 0, 1, 1], [], []>} : vector<8x128xbf16>, vector<128x128xbf16>, vector<8x128xf32> -> vector<8x128xf32>
    %c0_19 = arith.constant 0 : index
    %c0_20 = arith.constant 0 : index
    %c0_21 = arith.constant 0 : index
    %27 = vector.load %arg9[%c0_19, %c0_20, %c0_21] : memref<1x1x128xf32, #tpu.memory_space<vmem>>, vector<1x1x128xf32>
    %28 = vector.shape_cast %27 : vector<1x1x128xf32> to vector<1x128xf32>
    %29 = vector.broadcast %28 : vector<1x128xf32> to vector<8x128xf32>
    %30 = arith.addf %26, %29 : vector<8x128xf32>
    %31 = vector.shape_cast %16 : vector<8x128xf32> to vector<8x4x32xf32>
    %32 = tpu.transpose %31, [1, 0, 2] : vector<8x4x32xf32> -> vector<4x8x32xf32>
    %33 = arith.truncf %32 : vector<4x8x32xf32> to vector<4x8x32xbf16>
    %34 = vector.shape_cast %23 : vector<8x128xf32> to vector<8x4x32xf32>
    %35 = tpu.transpose %34, [1, 0, 2] : vector<8x4x32xf32> -> vector<4x8x32xf32>
    %36 = arith.truncf %35 : vector<4x8x32xf32> to vector<4x8x32xbf16>
    %37 = vector.shape_cast %30 : vector<8x128xf32> to vector<8x4x32xf32>
    %38 = tpu.transpose %37, [1, 0, 2] : vector<8x4x32xf32> -> vector<4x8x32xf32>
    %39 = arith.truncf %38 : vector<4x8x32xf32> to vector<4x8x32xbf16>
    %c0_22 = arith.constant 0 : index
    %c0_23 = arith.constant 0 : index
    %c0_24 = arith.constant 0 : index
    %40 = vector.load %arg3[%c0_22, %c0_23, %c0_24] : memref<1x8x8xf32, #tpu.memory_space<vmem>>, vector<1x8x8xf32>
    %41 = vector.shape_cast %40 : vector<1x8x8xf32> to vector<8x8xf32>
    "tpu.trace_start"() <{level = 10 : i32, message = "hqd,hkd->hqk"}> : () -> ()
    %cst_25 = arith.constant dense<0.000000e+00> : vector<4x8x8xf32>
    %42 = tpu.matmul %33, %36, %cst_25 {dimension_numbers = #tpu.dot_dimension_numbers<[2], [2], [1], [1], [0, 0, 0, 1, 1, 1], [0], [0]>} : vector<4x8x32xbf16>, vector<4x8x32xbf16>, vector<4x8x8xf32> -> vector<4x8x8xf32>
    "tpu.trace_stop"() : () -> ()
    %43 = vector.shape_cast %41 : vector<8x8xf32> to vector<1x8x8xf32>
    %44 = vector.broadcast %43 : vector<1x8x8xf32> to vector<4x8x8xf32>
    %45 = arith.addf %42, %44 : vector<4x8x8xf32>
    %cst_26 = arith.constant dense<0xFF800000> : vector<4x8xf32>
    %46 = vector.multi_reduction <maximumf>, %45, %cst_26 [2] : vector<4x8x8xf32> to vector<4x8xf32>
    %47 = vector.shape_cast %46 : vector<4x8xf32> to vector<4x8x1xf32>
    %48 = vector.broadcast %47 : vector<4x8x1xf32> to vector<4x8x8xf32>
    %49 = arith.subf %45, %48 : vector<4x8x8xf32>
    %50 = math.exp %49 : vector<4x8x8xf32>
    %cst_27 = arith.constant dense<0.000000e+00> : vector<4x8xf32>
    %51 = vector.multi_reduction <add>, %50, %cst_27 [2] : vector<4x8x8xf32> to vector<4x8xf32>
    %52 = vector.shape_cast %51 : vector<4x8xf32> to vector<4x8x1xf32>
    %53 = tpu.reciprocal %52 {approx = true} : vector<4x8x1xf32> -> vector<4x8x1xf32>
    %54 = vector.broadcast %53 : vector<4x8x1xf32> to vector<4x8x8xf32>
    %55 = arith.mulf %50, %54 : vector<4x8x8xf32>
    %cst_28 = arith.constant dense<0xFF800000> : vector<8xf32>
    %56 = vector.multi_reduction <maximumf>, %41, %cst_28 [1] : vector<8x8xf32> to vector<8xf32>
    %57 = vector.shape_cast %56 : vector<8xf32> to vector<8x1xf32>
    %cst_29 = arith.constant -5.000000e-01 : f32
    %58 = vector.broadcast %cst_29 : f32 to vector<8x1xf32>
    %59 = arith.cmpf ogt, %57, %58 : vector<8x1xf32>
    %60 = arith.extui %59 : vector<8x1xi1> to vector<8x1xi32>
    %61 = arith.sitofp %60 : vector<8x1xi32> to vector<8x1xf32>
    %62 = vector.shape_cast %61 : vector<8x1xf32> to vector<1x8x1xf32>
    %63 = vector.broadcast %62 : vector<1x8x1xf32> to vector<4x8x8xf32>
    %64 = arith.mulf %55, %63 : vector<4x8x8xf32>
    %65 = arith.truncf %64 : vector<4x8x8xf32> to vector<4x8x8xbf16>
    "tpu.trace_start"() <{level = 10 : i32, message = "hqk,hkd->hqd"}> : () -> ()
    %cst_30 = arith.constant dense<0.000000e+00> : vector<4x8x32xf32>
    %66 = tpu.matmul %65, %39, %cst_30 {dimension_numbers = #tpu.dot_dimension_numbers<[2], [1], [1], [2], [0, 0, 0, 1, 1, 2], [0], [0]>} : vector<4x8x8xbf16>, vector<4x8x32xbf16>, vector<4x8x32xf32> -> vector<4x8x32xf32>
    "tpu.trace_stop"() : () -> ()
    %67 = tpu.transpose %66, [1, 0, 2] : vector<4x8x32xf32> -> vector<8x4x32xf32>
    %68 = vector.shape_cast %67 : vector<8x4x32xf32> to vector<8x128xf32>
    %69 = arith.truncf %68 : vector<8x128xf32> to vector<8x128xbf16>
    %c0_31 = arith.constant 0 : index
    %c0_32 = arith.constant 0 : index
    %c0_33 = arith.constant 0 : index
    %70 = vector.load %arg10[%c0_31, %c0_32, %c0_33] : memref<1x128x128xbf16, #tpu.memory_space<vmem>>, vector<1x128x128xbf16>
    %71 = vector.shape_cast %70 : vector<1x128x128xbf16> to vector<128x128xbf16>
    %cst_34 = arith.constant dense<0.000000e+00> : vector<8x128xf32>
    %72 = tpu.matmul %69, %71, %cst_34 {dimension_numbers = #tpu.dot_dimension_numbers<[1], [0], [0], [1], [0, 0, 1, 1], [], []>} : vector<8x128xbf16>, vector<128x128xbf16>, vector<8x128xf32> -> vector<8x128xf32>
    %c0_35 = arith.constant 0 : index
    %c0_36 = arith.constant 0 : index
    %c0_37 = arith.constant 0 : index
    %73 = vector.load %arg11[%c0_35, %c0_36, %c0_37] : memref<1x1x128xf32, #tpu.memory_space<vmem>>, vector<1x1x128xf32>
    %74 = vector.shape_cast %73 : vector<1x1x128xf32> to vector<1x128xf32>
    %75 = vector.broadcast %74 : vector<1x128xf32> to vector<8x128xf32>
    %76 = arith.addf %72, %75 : vector<8x128xf32>
    %77 = arith.addf %3, %76 : vector<8x128xf32>
    %c0_38 = arith.constant 0 : index
    %c0_39 = arith.constant 0 : index
    %c0_40 = arith.constant 0 : index
    %78 = vector.load %arg12[%c0_38, %c0_39, %c0_40] : memref<1x1x128xf32, #tpu.memory_space<vmem>>, vector<1x1x128xf32>
    %79 = vector.shape_cast %78 : vector<1x1x128xf32> to vector<1x128xf32>
    %c0_41 = arith.constant 0 : index
    %c0_42 = arith.constant 0 : index
    %c0_43 = arith.constant 0 : index
    %80 = vector.load %arg13[%c0_41, %c0_42, %c0_43] : memref<1x1x128xf32, #tpu.memory_space<vmem>>, vector<1x1x128xf32>
    %81 = vector.shape_cast %80 : vector<1x1x128xf32> to vector<1x128xf32>
    %cst_44 = arith.constant dense<0.000000e+00> : vector<8xf32>
    %82 = vector.multi_reduction <add>, %77, %cst_44 [1] : vector<8x128xf32> to vector<8xf32>
    %83 = vector.shape_cast %82 : vector<8xf32> to vector<8x1xf32>
    %cst_45 = arith.constant 3.200000e+01 : f32
    %84 = vector.broadcast %cst_45 : f32 to vector<8x1xf32>
    %85 = arith.divf %83, %84 : vector<8x1xf32>
    %86 = vector.broadcast %85 : vector<8x1xf32> to vector<8x128xf32>
    %87 = arith.subf %77, %86 : vector<8x128xf32>
    %88 = vector.broadcast %8 : vector<1x128xf32> to vector<8x128xf32>
    %89 = arith.mulf %87, %88 : vector<8x128xf32>
    %90 = arith.mulf %89, %89 : vector<8x128xf32>
    %cst_46 = arith.constant dense<0.000000e+00> : vector<8xf32>
    %91 = vector.multi_reduction <add>, %90, %cst_46 [1] : vector<8x128xf32> to vector<8xf32>
    %92 = vector.shape_cast %91 : vector<8xf32> to vector<8x1xf32>
    %cst_47 = arith.constant 3.200000e+01 : f32
    %93 = vector.broadcast %cst_47 : f32 to vector<8x1xf32>
    %94 = arith.divf %92, %93 : vector<8x1xf32>
    %cst_48 = arith.constant 9.99999974E-6 : f32
    %95 = vector.broadcast %cst_48 : f32 to vector<8x1xf32>
    %96 = arith.addf %94, %95 : vector<8x1xf32>
    %97 = math.rsqrt %96 : vector<8x1xf32>
    %98 = vector.broadcast %97 : vector<8x1xf32> to vector<8x128xf32>
    %99 = arith.mulf %89, %98 : vector<8x128xf32>
    %100 = vector.broadcast %79 : vector<1x128xf32> to vector<8x128xf32>
    %101 = arith.mulf %99, %100 : vector<8x128xf32>
    %102 = vector.broadcast %81 : vector<1x128xf32> to vector<8x128xf32>
    %103 = arith.addf %101, %102 : vector<8x128xf32>
    %104 = arith.truncf %103 : vector<8x128xf32> to vector<8x128xbf16>
    %c0_49 = arith.constant 0 : index
    %c0_50 = arith.constant 0 : index
    %c0_51 = arith.constant 0 : index
    %105 = vector.load %arg14[%c0_49, %c0_50, %c0_51] : memref<1x128x128xbf16, #tpu.memory_space<vmem>>, vector<1x128x128xbf16>
    %106 = vector.shape_cast %105 : vector<1x128x128xbf16> to vector<128x128xbf16>
    %cst_52 = arith.constant dense<0.000000e+00> : vector<8x128xf32>
    %107 = tpu.matmul %104, %106, %cst_52 {dimension_numbers = #tpu.dot_dimension_numbers<[1], [0], [0], [1], [0, 0, 1, 1], [], []>} : vector<8x128xbf16>, vector<128x128xbf16>, vector<8x128xf32> -> vector<8x128xf32>
    %c0_53 = arith.constant 0 : index
    %c0_54 = arith.constant 0 : index
    %c0_55 = arith.constant 0 : index
    %108 = vector.load %arg15[%c0_53, %c0_54, %c0_55] : memref<1x1x128xf32, #tpu.memory_space<vmem>>, vector<1x1x128xf32>
    %109 = vector.shape_cast %108 : vector<1x1x128xf32> to vector<1x128xf32>
    %110 = vector.broadcast %109 : vector<1x128xf32> to vector<8x128xf32>
    %111 = arith.addf %107, %110 : vector<8x128xf32>
    %cst_56 = arith.constant 0.000000e+00 : f32
    %112 = vector.broadcast %cst_56 : f32 to vector<8x128xf32>
    %113 = arith.maximumf %111, %112 : vector<8x128xf32>
    %114 = arith.truncf %113 : vector<8x128xf32> to vector<8x128xbf16>
    %c0_57 = arith.constant 0 : index
    %c0_58 = arith.constant 0 : index
    %c0_59 = arith.constant 0 : index
    %115 = vector.load %arg16[%c0_57, %c0_58, %c0_59] : memref<1x128x128xbf16, #tpu.memory_space<vmem>>, vector<1x128x128xbf16>
    %116 = vector.shape_cast %115 : vector<1x128x128xbf16> to vector<128x128xbf16>
    %cst_60 = arith.constant dense<0.000000e+00> : vector<8x128xf32>
    %117 = tpu.matmul %114, %116, %cst_60 {dimension_numbers = #tpu.dot_dimension_numbers<[1], [0], [0], [1], [0, 0, 1, 1], [], []>} : vector<8x128xbf16>, vector<128x128xbf16>, vector<8x128xf32> -> vector<8x128xf32>
    %c0_61 = arith.constant 0 : index
    %c0_62 = arith.constant 0 : index
    %c0_63 = arith.constant 0 : index
    %118 = vector.load %arg17[%c0_61, %c0_62, %c0_63] : memref<1x1x128xf32, #tpu.memory_space<vmem>>, vector<1x1x128xf32>
    %119 = vector.shape_cast %118 : vector<1x1x128xf32> to vector<1x128xf32>
    %120 = vector.broadcast %119 : vector<1x128xf32> to vector<8x128xf32>
    %121 = arith.addf %117, %120 : vector<8x128xf32>
    %122 = arith.addf %103, %121 : vector<8x128xf32>
    %c0_64 = arith.constant 0 : index
    %c0_65 = arith.constant 0 : index
    %c0_66 = arith.constant 0 : index
    %123 = vector.load %arg18[%c0_64, %c0_65, %c0_66] : memref<1x1x128xf32, #tpu.memory_space<vmem>>, vector<1x1x128xf32>
    %124 = vector.shape_cast %123 : vector<1x1x128xf32> to vector<1x128xf32>
    %c0_67 = arith.constant 0 : index
    %c0_68 = arith.constant 0 : index
    %c0_69 = arith.constant 0 : index
    %125 = vector.load %arg19[%c0_67, %c0_68, %c0_69] : memref<1x1x128xf32, #tpu.memory_space<vmem>>, vector<1x1x128xf32>
    %126 = vector.shape_cast %125 : vector<1x1x128xf32> to vector<1x128xf32>
    %cst_70 = arith.constant dense<0.000000e+00> : vector<8xf32>
    %127 = vector.multi_reduction <add>, %122, %cst_70 [1] : vector<8x128xf32> to vector<8xf32>
    %128 = vector.shape_cast %127 : vector<8xf32> to vector<8x1xf32>
    %cst_71 = arith.constant 3.200000e+01 : f32
    %129 = vector.broadcast %cst_71 : f32 to vector<8x1xf32>
    %130 = arith.divf %128, %129 : vector<8x1xf32>
    %131 = vector.broadcast %130 : vector<8x1xf32> to vector<8x128xf32>
    %132 = arith.subf %122, %131 : vector<8x128xf32>
    %133 = vector.broadcast %8 : vector<1x128xf32> to vector<8x128xf32>
    %134 = arith.mulf %132, %133 : vector<8x128xf32>
    %135 = arith.mulf %134, %134 : vector<8x128xf32>
    %cst_72 = arith.constant dense<0.000000e+00> : vector<8xf32>
    %136 = vector.multi_reduction <add>, %135, %cst_72 [1] : vector<8x128xf32> to vector<8xf32>
    %137 = vector.shape_cast %136 : vector<8xf32> to vector<8x1xf32>
    %cst_73 = arith.constant 3.200000e+01 : f32
    %138 = vector.broadcast %cst_73 : f32 to vector<8x1xf32>
    %139 = arith.divf %137, %138 : vector<8x1xf32>
    %cst_74 = arith.constant 9.99999974E-6 : f32
    %140 = vector.broadcast %cst_74 : f32 to vector<8x1xf32>
    %141 = arith.addf %139, %140 : vector<8x1xf32>
    %142 = math.rsqrt %141 : vector<8x1xf32>
    %143 = vector.broadcast %142 : vector<8x1xf32> to vector<8x128xf32>
    %144 = arith.mulf %134, %143 : vector<8x128xf32>
    %145 = vector.broadcast %124 : vector<1x128xf32> to vector<8x128xf32>
    %146 = arith.mulf %144, %145 : vector<8x128xf32>
    %147 = vector.broadcast %126 : vector<1x128xf32> to vector<8x128xf32>
    %148 = arith.addf %146, %147 : vector<8x128xf32>
    %c0_75 = arith.constant 0 : index
    %c0_76 = arith.constant 0 : index
    %149 = vector.load %arg22[%c0_75, %c0_76] : memref<8x128xf32, #tpu.memory_space<vmem>>, vector<8x128xf32>
    tpu.vector_store %arg22[%c0_75, %c0_76], %148 {strides = array<i32>} : memref<8x128xf32, #tpu.memory_space<vmem>>, vector<8x128xf32>,
    %c1_i32 = arith.constant 1 : i32
    %150 = arith.cmpi eq, %arg1, %c1_i32 : i32
    %151 = arith.extui %150 : i1 to i32
    %c0_i32_77 = arith.constant 0 : i32
    %152 = arith.cmpi ne, %151, %c0_i32_77 : i32
    scf.if %152 {
      %c0_78 = arith.constant 0 : index
      %c0_79 = arith.constant 0 : index
      %c0_80 = arith.constant 0 : index
      %153 = vector.load %arg20[%c0_78, %c0_79, %c0_80] : memref<1x8x128xf32, #tpu.memory_space<vmem>>, vector<1x8x128xf32>
      %154 = vector.shape_cast %153 : vector<1x8x128xf32> to vector<8x128xf32>
      %155 = vector.shape_cast %148 : vector<8x128xf32> to vector<1x8x128xf32>
      tpu.vector_store %arg20[%c0_78, %c0_79, %c0_80], %155 {strides = array<i32>} : memref<1x8x128xf32, #tpu.memory_space<vmem>>, vector<1x8x128xf32>,
      %c0_81 = arith.constant 0 : index
      %c0_82 = arith.constant 0 : index
      %c0_83 = arith.constant 0 : index
      %c0_84 = arith.constant 0 : index
      %156 = vector.load %arg21[%c0_81, %c0_82, %c0_83, %c0_84] : memref<1x4x8x8xf32, #tpu.memory_space<vmem>>, vector<1x4x8x8xf32>
      %157 = vector.shape_cast %156 : vector<1x4x8x8xf32> to vector<4x8x8xf32>
      %158 = vector.shape_cast %64 : vector<4x8x8xf32> to vector<1x4x8x8xf32>
      tpu.vector_store %arg21[%c0_81, %c0_82, %c0_83, %c0_84], %158 {strides = array<i32>} : memref<1x4x8x8xf32, #tpu.memory_space<vmem>>, vector<1x4x8x8xf32>,
    } else {
    }
    return
  }
  func.func @transform_0(%arg0: i32, %arg1: i32) -> (i32, i32, i32) {
    %c0_i32 = arith.constant 0 : i32
    %c0_i32_0 = arith.constant 0 : i32
    %c0_i32_1 = arith.constant 0 : i32
    return %arg0, %c0_i32, %c0_i32_0 : i32, i32, i32
  }
  func.func @transform_1(%arg0: i32, %arg1: i32) -> (i32, i32, i32) {
    %c0_i32 = arith.constant 0 : i32
    %c0_i32_0 = arith.constant 0 : i32
    %c0_i32_1 = arith.constant 0 : i32
    return %arg0, %c0_i32, %c0_i32_0 : i32, i32, i32
  }
  func.func @transform_2(%arg0: i32, %arg1: i32) -> (i32, i32, i32) {
    %c0_i32 = arith.constant 0 : i32
    %c0_i32_0 = arith.constant 0 : i32
    %c0_i32_1 = arith.constant 0 : i32
    return %arg1, %c0_i32, %c0_i32_0 : i32, i32, i32
  }
  func.func @transform_3(%arg0: i32, %arg1: i32) -> (i32, i32, i32) {
    %c0_i32 = arith.constant 0 : i32
    %c0_i32_0 = arith.constant 0 : i32
    %c0_i32_1 = arith.constant 0 : i32
    return %arg1, %c0_i32, %c0_i32_0 : i32, i32, i32
  }
  func.func @transform_4(%arg0: i32, %arg1: i32) -> (i32, i32, i32) {
    %c0_i32 = arith.constant 0 : i32
    %c0_i32_0 = arith.constant 0 : i32
    %c0_i32_1 = arith.constant 0 : i32
    return %arg1, %c0_i32, %c0_i32_0 : i32, i32, i32
  }
  func.func @transform_5(%arg0: i32, %arg1: i32) -> (i32, i32, i32) {
    %c0_i32 = arith.constant 0 : i32
    %c0_i32_0 = arith.constant 0 : i32
    %c0_i32_1 = arith.constant 0 : i32
    return %arg1, %c0_i32, %c0_i32_0 : i32, i32, i32
  }
  func.func @transform_6(%arg0: i32, %arg1: i32) -> (i32, i32, i32) {
    %c0_i32 = arith.constant 0 : i32
    %c0_i32_0 = arith.constant 0 : i32
    %c0_i32_1 = arith.constant 0 : i32
    return %arg1, %c0_i32, %c0_i32_0 : i32, i32, i32
  }
  func.func @transform_7(%arg0: i32, %arg1: i32) -> (i32, i32, i32) {
    %c0_i32 = arith.constant 0 : i32
    %c0_i32_0 = arith.constant 0 : i32
    %c0_i32_1 = arith.constant 0 : i32
    return %arg1, %c0_i32, %c0_i32_0 : i32, i32, i32
  }
  func.func @transform_8(%arg0: i32, %arg1: i32) -> (i32, i32, i32) {
    %c0_i32 = arith.constant 0 : i32
    %c0_i32_0 = arith.constant 0 : i32
    %c0_i32_1 = arith.constant 0 : i32
    return %arg1, %c0_i32, %c0_i32_0 : i32, i32, i32
  }
  func.func @transform_9(%arg0: i32, %arg1: i32) -> (i32, i32, i32) {
    %c0_i32 = arith.constant 0 : i32
    %c0_i32_0 = arith.constant 0 : i32
    %c0_i32_1 = arith.constant 0 : i32
    return %arg1, %c0_i32, %c0_i32_0 : i32, i32, i32
  }
  func.func @transform_10(%arg0: i32, %arg1: i32) -> (i32, i32, i32) {
    %c0_i32 = arith.constant 0 : i32
    %c0_i32_0 = arith.constant 0 : i32
    %c0_i32_1 = arith.constant 0 : i32
    return %arg1, %c0_i32, %c0_i32_0 : i32, i32, i32
  }
  func.func @transform_11(%arg0: i32, %arg1: i32) -> (i32, i32, i32) {
    %c0_i32 = arith.constant 0 : i32
    %c0_i32_0 = arith.constant 0 : i32
    %c0_i32_1 = arith.constant 0 : i32
    return %arg1, %c0_i32, %c0_i32_0 : i32, i32, i32
  }
  func.func @transform_12(%arg0: i32, %arg1: i32) -> (i32, i32, i32) {
    %c0_i32 = arith.constant 0 : i32
    %c0_i32_0 = arith.constant 0 : i32
    %c0_i32_1 = arith.constant 0 : i32
    return %arg1, %c0_i32, %c0_i32_0 : i32, i32, i32
  }
  func.func @transform_13(%arg0: i32, %arg1: i32) -> (i32, i32, i32) {
    %c0_i32 = arith.constant 0 : i32
    %c0_i32_0 = arith.constant 0 : i32
    %c0_i32_1 = arith.constant 0 : i32
    return %arg1, %c0_i32, %c0_i32_0 : i32, i32, i32
  }
  func.func @transform_14(%arg0: i32, %arg1: i32) -> (i32, i32, i32) {
    %c0_i32 = arith.constant 0 : i32
    %c0_i32_0 = arith.constant 0 : i32
    %c0_i32_1 = arith.constant 0 : i32
    return %arg1, %c0_i32, %c0_i32_0 : i32, i32, i32
  }
  func.func @transform_15(%arg0: i32, %arg1: i32) -> (i32, i32, i32) {
    %c0_i32 = arith.constant 0 : i32
    %c0_i32_0 = arith.constant 0 : i32
    %c0_i32_1 = arith.constant 0 : i32
    return %arg1, %c0_i32, %c0_i32_0 : i32, i32, i32
  }
  func.func @transform_16(%arg0: i32, %arg1: i32) -> (i32, i32, i32) {
    %c0_i32 = arith.constant 0 : i32
    %c0_i32_0 = arith.constant 0 : i32
    %c0_i32_1 = arith.constant 0 : i32
    return %arg1, %c0_i32, %c0_i32_0 : i32, i32, i32
  }
  func.func @transform_17(%arg0: i32, %arg1: i32) -> (i32, i32, i32) {
    %c0_i32 = arith.constant 0 : i32
    %c0_i32_0 = arith.constant 0 : i32
    %c0_i32_1 = arith.constant 0 : i32
    return %arg1, %c0_i32, %c0_i32_0 : i32, i32, i32
  }
  func.func @transform_18(%arg0: i32, %arg1: i32) -> (i32, i32, i32) {
    %c0_i32 = arith.constant 0 : i32
    %c0_i32_0 = arith.constant 0 : i32
    %c0_i32_1 = arith.constant 0 : i32
    return %arg0, %c0_i32, %c0_i32_0 : i32, i32, i32
  }
  func.func @transform_19(%arg0: i32, %arg1: i32) -> (i32, i32, i32, i32) {
    %c0_i32 = arith.constant 0 : i32
    %c0_i32_0 = arith.constant 0 : i32
    %c0_i32_1 = arith.constant 0 : i32
    %c0_i32_2 = arith.constant 0 : i32
    return %arg0, %c0_i32, %c0_i32_0, %c0_i32_1 : i32, i32, i32, i32
  }
}

</mosaic_0001>

<llo_original>
// kernel: transformer_forward.3
$region0: #{transformer_forward.3}
  #allocation0 [shape = 'u32[]', space=smem, size = 0x4, offset = 0x4, fixed_abs, tag = 'smem constant byte address 0x4 - core index']
  #allocation1 [shape = 'u32[144,128]{1,0:T(1,128)}', space=vmem, size = 0x12000, scoped, tag = 'internal scratch']
  %s0 = inlined_call_operand.hbm [shape: f32[16,128], index: 0, kind: input, shape index: {}]
  %s1 = inlined_call_operand.hbm [shape: bf16[128,128], index: 1, kind: input, shape index: {}]
  %s2 = inlined_call_operand.vmem [shape: f32[1,128], index: 2, kind: input, shape index: {}]
  %s3 = inlined_call_operand.vmem [shape: f32[16,128], index: 3, kind: output, shape index: {}]
  %s4 = sld [smem:[#allocation0]]
  $region30: #{transformer_forward.3} parent=0
    _
  %s6 = ssub.s32 1, %s4
  %s7 = scalar_select 0, %s6, %s4
  $region1: #{transformer_forward.3} parent=0
    #allocation2 [shape = 'u8[8192]{0}', space=vmem, size = 0x2000, scoped, tag = 'input window, operand 0, single buffered']
    #allocation3 [shape = 's32[1]{0}', space=sflag, size = 0x4, scoped, tag = 'scoped memory for transformer_forward.3']
    #allocation4 [shape = 'u8[32768]{0}', space=vmem, size = 0x8000, scoped, tag = 'input window, operand 1, single buffered']
    #allocation5 [shape = 's32[1]{0}', space=sflag, size = 0x4, scoped, tag = 'scoped memory for transformer_forward.3']
    %8 = vsyncpa [#allocation3], 0
    %9 = vsyncpa [#allocation5], 0
    // Predicated region
    $region2: #{transformer_forward.3} parent=1 // pred_check
      _
    $region3: #{transformer_forward.3} parent=1 // pred_check_branch
      %11 = sbr.rel (0) target = $region5
    $region4: #{transformer_forward.3} parent=1 // pred_region
      %s13 = ssub.s32 256, 256
      %14 = vsyncadd [#allocation3], %s13
      %s15 = sshll.u32 [#allocation2], 4
      %s16 = int_to_ptr.vmem [resolvable:$true] %s15
      %21 = dma.hbm_to_vmem [thread:$0]  %s0, 256, %s16, [#allocation3], 128, 128, 8
    $region5: #{transformer_forward.3} parent=1 // pred_fallthru
      _
    // Predicated region
    $region6: #{transformer_forward.3} parent=1 // pred_check
      _
    $region7: #{transformer_forward.3} parent=1 // pred_check_branch
      %23 = sbr.rel (0) target = $region9
    $region8: #{transformer_forward.3} parent=1 // pred_region
      %s25 = ssub.s32 1024, 1024
      %26 = vsyncadd [#allocation5], %s25
      %s27 = sshll.u32 [#allocation4], 4
      %s28 = int_to_ptr.vmem [resolvable:$true] %s27
      %33 = dma.hbm_to_vmem [thread:$0]  %s1, 1024, %s28, [#allocation5], 64, 64, 4
    $region9: #{transformer_forward.3} parent=1 // pred_fallthru
      _
    // Predicated region
    $region10: #{transformer_forward.3} parent=1 // pred_check
      _
    $region11: #{transformer_forward.3} parent=1 // pred_check_branch
      %35 = sbr.rel (0) target = $region13
    $region12: #{transformer_forward.3} parent=1 // pred_region
      _
    $region13: #{transformer_forward.3} parent=1 // pred_fallthru
      _
    // Predicated region
    $region14: #{transformer_forward.3} parent=1 // pred_check
      _
    $region15: #{transformer_forward.3} parent=1 // pred_check_branch
      %37 = sbr.rel (0) target = $region17
    $region16: #{transformer_forward.3} parent=1 // pred_region
      %38 = dma.done [#allocation3], 256
    $region17: #{transformer_forward.3} parent=1 // pred_fallthru
      _
    // Predicated region
    $region18: #{transformer_forward.3} parent=1 // pred_check
      _
    $region19: #{transformer_forward.3} parent=1 // pred_check_branch
      %40 = sbr.rel (0) target = $region21
    $region20: #{transformer_forward.3} parent=1 // pred_region
      %41 = dma.done [#allocation5], 1024
    $region21: #{transformer_forward.3} parent=1 // pred_fallthru
      _
    %v43 = vld [vmem:[#allocation2] sm:$0xff]
    %v44 = vld [vmem:[#allocation2 + $0x8] sm:$0xff]
    %v45 = vpack.c.bf16 %v44, %v43
    %v46 = vld [vmem:[#allocation4] sm:$0xf]
    %v47 = vld [vmem:[#allocation4 + $0x4] sm:$0xf]
    %v48 = vld [vmem:[#allocation4 + $0x8] sm:$0xf]
    %v49 = vld [vmem:[#allocation4 + $0xc] sm:$0xf]
    %v50 = vld [vmem:[#allocation4 + $0x10] sm:$0xf]
    %v51 = vld [vmem:[#allocation4 + $0x14] sm:$0xf]
    %v52 = vld [vmem:[#allocation4 + $0x18] sm:$0xf]
    %v53 = vld [vmem:[#allocation4 + $0x1c] sm:$0xf]
    %v54 = vld [vmem:[#allocation4 + $0x20] sm:$0xf]
    %v55 = vld [vmem:[#allocation4 + $0x24] sm:$0xf]
    %v56 = vld [vmem:[#allocation4 + $0x28] sm:$0xf]
    %v57 = vld [vmem:[#allocation4 + $0x2c] sm:$0xf]
    %v58 = vld [vmem:[#allocation4 + $0x30] sm:$0xf]
    %v59 = vld [vmem:[#allocation4 + $0x34] sm:$0xf]
    %v60 = vld [vmem:[#allocation4 + $0x38] sm:$0xf]
    %v61 = vld [vmem:[#allocation4 + $0x3c] sm:$0xf]
    %v62 = vld [vmem:[%s2] sm:$0x1]
    %v64 = vlaneseq
    %v65 = vshrl.u32 %v64, 7
    %v66 = vsub.s32 0, %v65
    %v67 = vrot.slane %v62, %v66
    %v85 = vunpack.c.l.b16 %v46
    %v86 = vunpack.c.l.b16 %v47
    %v87 = vunpack.c.l.b16 %v48
    %v88 = vunpack.c.l.b16 %v49
    %v89 = vunpack.c.l.b16 %v50
    %v90 = vunpack.c.l.b16 %v51
    %v91 = vunpack.c.l.b16 %v52
    %v92 = vunpack.c.l.b16 %v53
    %v93 = vunpack.c.l.b16 %v54
    %v94 = vunpack.c.l.b16 %v55
    %v95 = vunpack.c.l.b16 %v56
    %v96 = vunpack.c.l.b16 %v57
    %v97 = vunpack.c.l.b16 %v58
    %v98 = vunpack.c.l.b16 %v59
    %v99 = vunpack.c.l.b16 %v60
    %v100 = vunpack.c.l.b16 %v61
    %v101 = vpack.c.b16 %v86, %v85
    %v102 = vpack.c.b16 %v88, %v87
    %v103 = vpack.c.b16 %v90, %v89
    %v104 = vpack.c.b16 %v92, %v91
    %v105 = vpack.c.b16 %v94, %v93
    %v106 = vpack.c.b16 %v96, %v95
    %v107 = vpack.c.b16 %v98, %v97
    %v108 = vpack.c.b16 %v100, %v99
    %117 = vmatprep.subr.bf16.mxu0 0
    %118 = vmatpush1.bf16.msra.mxu0 %v101
    %119 = vmatprep.subr.bf16.mxu0 0
    %120 = vmatpush1.bf16.msra.mxu0 %v102
    %121 = vmatprep.subr.bf16.mxu0 0
    %122 = vmatpush1.bf16.msra.mxu0 %v103
    %123 = vmatprep.subr.bf16.mxu0 0
    %124 = vmatpush1.bf16.msra.mxu0 %v104
    %125 = vmatprep.subr.bf16.mxu0 0
    %126 = vmatpush1.bf16.msra.mxu0 %v105
    %127 = vmatprep.subr.bf16.mxu0 0
    %128 = vmatpush1.bf16.msra.mxu0 %v106
    %129 = vmatprep.subr.bf16.mxu0 0
    %130 = vmatpush1.bf16.msra.mxu0 %v107
    %131 = vmatprep.subr.bf16.mxu0 0
    %132 = vmatpush1.bf16.msra.mxu0 %v108
    %133 = vmatprep.subr.bf16.mxu0 0
    %134 = vmatpush1.bf16.msra.mxu0 0
    %135 = vmatprep.subr.bf16.mxu0 0
    %136 = vmatpush1.bf16.msra.mxu0 0
    %137 = vmatprep.subr.bf16.mxu0 0
    %138 = vmatpush1.bf16.msra.mxu0 0
    %139 = vmatprep.subr.bf16.mxu0 0
    %140 = vmatpush1.bf16.msra.mxu0 0
    %141 = vmatprep.subr.bf16.mxu0 0
    %142 = vmatpush1.bf16.msra.mxu0 0
    %143 = vmatprep.subr.bf16.mxu0 0
    %144 = vmatpush1.bf16.msra.mxu0 0
    %145 = vmatprep.subr.bf16.mxu0 0
    %146 = vmatpush1.bf16.msra.mxu0 0
    %147 = vmatprep.subr.bf16.mxu0 0
    %148 = vmatpush1.bf16.msra.mxu0 0
    %149 = vmatprep.mubr.bf16.mxu0 0
    %150 = vmatmul.mubr.bf16.gmra.mrb[0].mxu0 %v45
    %v151 = vpop.f32.mrb[0].mxu0
    %v152 = vadd.f32 %v67, %v151
    %v153 = vpop.f32.mrb[0].mxu0
    %v154 = vpop.f32.mrb[0].mxu0
    %v155 = vadd.f32 %v67, %v154
    %v156 = vpop.f32.mrb[0].mxu0
    %157 = vdwg.mxu0
    %158 = vst [vmem:[%s3] sm:$0xff] %v152
    %159 = vst [vmem:[%s3 + $0x8] sm:$0xff] %v155
    // Predicated region
    $region22: #{transformer_forward.3} parent=1 // pred_check
      _
    $region23: #{transformer_forward.3} parent=1 // pred_check_branch
      %161 = sbr.rel (0) target = $region25
    $region24: #{transformer_forward.3} parent=1 // pred_region
      _
    $region25: #{transformer_forward.3} parent=1 // pred_fallthru
      _
    // Predicated region
    $region26: #{transformer_forward.3} parent=1 // pred_check
      _
    $region27: #{transformer_forward.3} parent=1 // pred_check_branch
      %163 = sbr.rel (0) target = $region29
    $region28: #{transformer_forward.3} parent=1 // pred_region
      _
    $region29: #{transformer_forward.3} parent=1 // pred_fallthru
      _
    %164 = vsyncpa [#allocation3], 1
    %165 = vsyncpa [#allocation5], 1

// kernel: transformer_forward.2
$region0: #{transformer_forward.2}
  #allocation0 [shape = 'u32[]', space=smem, size = 0x4, offset = 0x4, fixed_abs, tag = 'smem constant byte address 0x4 - core index']
  #allocation1 [shape = 'u32[144,128]{1,0:T(1,128)}', space=vmem, size = 0x12000, scoped, tag = 'internal scratch']
  #allocation2 [shape = 'f32[8,128]{1,0:T(8,128)}', space=vmem, size = 0x1000, scoped, tag = 'scratch operand']
  %s0 = inlined_call_operand.hbm [shape: f32[2,8,128], index: 0, kind: input, shape index: {}]
  %s1 = inlined_call_operand.hbm [shape: f32[2,8,8], index: 1, kind: input, shape index: {}]
  %s2 = inlined_call_operand.hbm [shape: bf16[2,128,128], index: 2, kind: input, shape index: {}]
  %s3 = inlined_call_operand.hbm [shape: f32[2,1,128], index: 3, kind: input, shape index: {}]
  %s4 = inlined_call_operand.hbm [shape: bf16[2,128,128], index: 4, kind: input, shape index: {}]
  %s5 = inlined_call_operand.hbm [shape: f32[2,1,128], index: 5, kind: input, shape index: {}]
  %s6 = inlined_call_operand.hbm [shape: bf16[2,128,128], index: 6, kind: input, shape index: {}]
  %s7 = inlined_call_operand.hbm [shape: f32[2,1,128], index: 7, kind: input, shape index: {}]
  %s8 = inlined_call_operand.hbm [shape: bf16[2,128,128], index: 8, kind: input, shape index: {}]
  %s9 = inlined_call_operand.hbm [shape: f32[2,1,128], index: 9, kind: input, shape index: {}]
  %s10 = inlined_call_operand.hbm [shape: f32[2,1,128], index: 10, kind: input, shape index: {}]
  %s11 = inlined_call_operand.hbm [shape: f32[2,1,128], index: 11, kind: input, shape index: {}]
  %s12 = inlined_call_operand.hbm [shape: bf16[2,128,128], index: 12, kind: input, shape index: {}]
  %s13 = inlined_call_operand.hbm [shape: f32[2,1,128], index: 13, kind: input, shape index: {}]
  %s14 = inlined_call_operand.hbm [shape: bf16[2,128,128], index: 14, kind: input, shape index: {}]
  %s15 = inlined_call_operand.hbm [shape: f32[2,1,128], index: 15, kind: input, shape index: {}]
  %s16 = inlined_call_operand.hbm [shape: f32[2,1,128], index: 16, kind: input, shape index: {}]
  %s17 = inlined_call_operand.hbm [shape: f32[2,1,128], index: 17, kind: input, shape index: {}]
  %s18 = inlined_call_operand.hbm [shape: f32[2,8,128], index: 18, kind: output, shape index: {0}]
  %s19 = inlined_call_operand.hbm [shape: f32[2,4,8,8], index: 19, kind: output, shape index: {1}]
  %20 = xla_tuple %s18, %s19
  %s21 = sld [smem:[#allocation0]]
  $region193: #{transformer_forward.2} parent=0
    _
  %s23 = ssub.s32 1, %s21
  %s24 = scalar_select 0, %s23, %s21
  $region1: #{transformer_forward.2} parent=0
    #allocation3 [shape = 'u8[8192]{0}', space=vmem, size = 0x2000, scoped, tag = 'input window, operand 0']
    #allocation4 [shape = 's32[2]{0}', space=sflag, size = 0x8, scoped, tag = 'scoped memory for transformer_forward.2']
    #allocation5 [shape = 's32[2]{0}', space=sflag, size = 0x8, scoped, tag = 'scoped memory for transformer_forward.2']
    #allocation6 [shape = 'u8[8192]{0}', space=vmem, size = 0x2000, scoped, tag = 'input window, operand 1']
    #allocation7 [shape = 's32[2]{0}', space=sflag, size = 0x8, scoped, tag = 'scoped memory for transformer_forward.2']
    #allocation8 [shape = 'u8[65536]{0}', space=vmem, size = 0x10000, scoped, tag = 'input window, operand 2']
    #allocation9 [shape = 'u8[1024]{0}', space=vmem, size = 0x400, scoped, tag = 'input window, operand 3']
    #allocation10 [shape = 's32[2]{0}', space=sflag, size = 0x8, scoped, tag = 'scoped memory for transformer_forward.2']
    #allocation11 [shape = 'u8[65536]{0}', space=vmem, size = 0x10000, scoped, tag = 'input window, operand 4']
    #allocation12 [shape = 'u8[1024]{0}', space=vmem, size = 0x400, scoped, tag = 'input window, operand 5']
    #allocation13 [shape = 's32[2]{0}', space=sflag, size = 0x8, scoped, tag = 'scoped memory for transformer_forward.2']
    #allocation14 [shape = 'u8[65536]{0}', space=vmem, size = 0x10000, scoped, tag = 'input window, operand 6']
    #allocation15 [shape = 'u8[1024]{0}', space=vmem, size = 0x400, scoped, tag = 'input window, operand 7']
    #allocation16 [shape = 's32[2]{0}', space=sflag, size = 0x8, scoped, tag = 'scoped memory for transformer_forward.2']
    #allocation17 [shape = 'u8[65536]{0}', space=vmem, size = 0x10000, scoped, tag = 'input window, operand 8']
    #allocation18 [shape = 'u8[1024]{0}', space=vmem, size = 0x400, scoped, tag = 'input window, operand 9']
    #allocation19 [shape = 's32[2]{0}', space=sflag, size = 0x8, scoped, tag = 'scoped memory for transformer_forward.2']
    #allocation20 [shape = 'u8[1024]{0}', space=vmem, size = 0x400, scoped, tag = 'input window, operand 10']
    #allocation21 [shape = 'u8[1024]{0}', space=vmem, size = 0x400, scoped, tag = 'input window, operand 11']
    #allocation22 [shape = 's32[2]{0}', space=sflag, size = 0x8, scoped, tag = 'scoped memory for transformer_forward.2']
    #allocation23 [shape = 'u8[65536]{0}', space=vmem, size = 0x10000, scoped, tag = 'input window, operand 12']
    #allocation24 [shape = 'u8[1024]{0}', space=vmem, size = 0x400, scoped, tag = 'input window, operand 13']
    #allocation25 [shape = 's32[2]{0}', space=sflag, size = 0x8, scoped, tag = 'scoped memory for transformer_forward.2']
    #allocation26 [shape = 'u8[65536]{0}', space=vmem, size = 0x10000, scoped, tag = 'input window, operand 14']
    #allocation27 [shape = 'u8[1024]{0}', space=vmem, size = 0x400, scoped, tag = 'input window, operand 15']
    #allocation28 [shape = 's32[2]{0}', space=sflag, size = 0x8, scoped, tag = 'scoped memory for transformer_forward.2']
    #allocation29 [shape = 'u8[1024]{0}', space=vmem, size = 0x400, scoped, tag = 'input window, operand 16']
    #allocation30 [shape = 'u8[1024]{0}', space=vmem, size = 0x400, scoped, tag = 'input window, operand 17']
    #allocation31 [shape = 's32[2]{0}', space=sflag, size = 0x8, scoped, tag = 'scoped memory for transformer_forward.2']
    #allocation32 [shape = 'u8[8192]{0}', space=vmem, size = 0x2000, scoped, tag = 'output window, operand 0']
    #allocation33 [shape = 'u8[32768]{0}', space=vmem, size = 0x8000, scoped, tag = 'output window, operand 1']
    #allocation34 [shape = 's32[2]{0}', space=sflag, size = 0x8, scoped, tag = 'scoped memory for transformer_forward.2']
    %25 = vsyncpa [#allocation4], 0
    %s26 = scalar_lea.sflag [#allocation4], 1
    %27 = vsyncpa %s26, 0
    %28 = vsyncpa [#allocation7], 0
    %s29 = scalar_lea.sflag [#allocation7], 1
    %30 = vsyncpa %s29, 0
    %31 = vsyncpa [#allocation10], 0
    %s32 = scalar_lea.sflag [#allocation10], 1
    %33 = vsyncpa %s32, 0
    %34 = vsyncpa [#allocation13], 0
    %s35 = scalar_lea.sflag [#allocation13], 1
    %36 = vsyncpa %s35, 0
    %37 = vsyncpa [#allocation16], 0
    %s38 = scalar_lea.sflag [#allocation16], 1
    %39 = vsyncpa %s38, 0
    %40 = vsyncpa [#allocation19], 0
    %s41 = scalar_lea.sflag [#allocation19], 1
    %42 = vsyncpa %s41, 0
    %43 = vsyncpa [#allocation22], 0
    %s44 = scalar_lea.sflag [#allocation22], 1
    %45 = vsyncpa %s44, 0
    %46 = vsyncpa [#allocation25], 0
    %s47 = scalar_lea.sflag [#allocation25], 1
    %48 = vsyncpa %s47, 0
    %49 = vsyncpa [#allocation28], 0
    %s50 = scalar_lea.sflag [#allocation28], 1
    %51 = vsyncpa %s50, 0
    %52 = vsyncpa [#allocation31], 0
    %s53 = scalar_lea.sflag [#allocation31], 1
    %54 = vsyncpa %s53, 0
    %55 = vsyncpa [#allocation5], 0
    %s56 = scalar_lea.sflag [#allocation5], 1
    %57 = vsyncpa %s56, 0
    %58 = vsyncpa [#allocation34], 0
    %s59 = scalar_lea.sflag [#allocation34], 1
    %60 = vsyncpa %s59, 0
    loop: start=0, step=1, limit=6
    $region2: #{transformer_forward.2} parent=1 // loop_pre_header
      _
    $region3: #{transformer_forward.2} parent=1 // loop_header
      %s62 = sphi 0, %s66
      %p63 = scmp.ge.s32.totalorder %s62, 6
      %s69 = sphi 0, %s81
      %s70 = sphi 0, %s77
      %s71 = sphi 0, %s69
      %s72 = sphi 0, %s70
      %s73 = sphi 0, %s71
      %s74 = sphi 0, %s72
      %s84 = sphi 0, %s86
      %s87 = sphi 0, %s84
      %s88 = sphi 0, %s87
      %s104 = sphi 0, %s88
      %s110 = sphi 0, %s112
      %s113 = sphi 0, %s110
      %s114 = sphi 0, %s113
      %s130 = sphi 0, %s114
      %s136 = sphi 0, %s138
      %s139 = sphi 0, %s136
      %s140 = sphi 0, %s139
      %s156 = sphi 0, %s140
      %s162 = sphi 0, %s164
      %s165 = sphi 0, %s162
      %s166 = sphi 0, %s165
      %s182 = sphi 0, %s166
      %s188 = sphi 0, %s190
      %s191 = sphi 0, %s188
      %s192 = sphi 0, %s191
      %s208 = sphi 0, %s192
      %s214 = sphi 0, %s216
      %s217 = sphi 0, %s214
      %s218 = sphi 0, %s217
      %s234 = sphi 0, %s218
      %s240 = sphi 0, %s242
      %s243 = sphi 0, %s240
      %s244 = sphi 0, %s243
      %s260 = sphi 0, %s244
      %s266 = sphi 0, %s268
      %s269 = sphi 0, %s266
      %s270 = sphi 0, %s269
      %s286 = sphi 0, %s270
      %s292 = sphi 0, %s294
      %s295 = sphi 0, %s292
      %s296 = sphi 0, %s295
      %s312 = sphi 0, %s296
      %s318 = sphi 0, %s320
      %s321 = sphi 0, %s318
      %s322 = sphi 0, %s321
      %s338 = sphi 0, %s322
      %s344 = sphi 0, %s346
      %s347 = sphi 0, %s344
      %s348 = sphi 0, %s347
      %s364 = sphi 0, %s348
      %s370 = sphi 0, %s372
      %s373 = sphi 0, %s370
      %s374 = sphi 0, %s373
      %s390 = sphi 0, %s374
      %s396 = sphi 0, %s398
      %s399 = sphi 0, %s396
      %s400 = sphi 0, %s399
      %s416 = sphi 0, %s400
      %s422 = sphi 0, %s424
      %s425 = sphi 0, %s422
      %s426 = sphi 0, %s425
      %s442 = sphi 0, %s426
      %s448 = sphi 0, %s450
      %s451 = sphi 0, %s448
      %s452 = sphi 0, %s451
      %s468 = sphi 0, %s452
      %s474 = sphi 0, %s476
      %s477 = sphi 0, %s474
      %s478 = sphi 0, %s477
      %s494 = sphi 0, %s478
      %s500 = sphi 0, %s502
      %s503 = sphi 0, %s500
      %s504 = sphi 0, %s503
      %s520 = sphi 0, %s504
      %s526 = sphi 0, %s528
      %s529 = sphi 0, %s526
      %s530 = sphi 0, %s529
      %s546 = sphi 0, %s530
      %s552 = sphi 0, %s554
      %s555 = sphi 0, %s552
      %s556 = sphi 0, %s555
      %s572 = sphi 0, %s556
      %s578 = sphi 0, %s580
      %s581 = sphi 0, %s578
      %s582 = sphi 0, %s581
      %s598 = sphi 0, %s582
    $region4: #{transformer_forward.2} parent=1 // loop_header_branch
      %65 = sbr.rel (%p63) target = $region8
    $region5: #{transformer_forward.2} parent=1 // loop_body
      %s67 = ssub.s32 %s62, 1
      %s68 = ssub.s32 %s62, 2
      %s75 = sadd.s32 1, %s70
      %p76 = scmp.ge.s32.totalorder %s75, 2
      %s77 = scalar_select %p76, 0, %s75
      %s78 = sadd.s32 1, %s69
      %s79 = scalar_select %p76, %s78, %s69
      %p80 = scmp.ge.s32.totalorder %s79, 2
      %s81 = scalar_select %p80, 0, %s79
      %s82 = ssub.s32 %s69, %s81
      %p83 = scmp.eq.s32.totalorder %s82, 0
      %s85 = sadd.s32 %s84, 1
      %s86 = scalar_select %p83, %s84, %s85
      %p89 = pneg %p83
      %p90 = scmp.eq.s32.totalorder %s62, 3
      %p91 = por %p89, %p90
      %p92 = scmp.ne.s32.totalorder %s84, %s87
      %p93 = scmp.eq.s32.totalorder %s62, 0
      %p94 = por %p92, %p93
      %p95 = scmp.ne.s32.totalorder %s84, %s87
      %p96 = scmp.eq.s32.totalorder %s67, 3
      %p97 = por %p95, %p96
      %p98 = scmp.ne.s32.totalorder %s87, %s88
      %p99 = scmp.eq.s32.totalorder %s67, 0
      %p100 = por %p98, %p99
      %p101 = scmp.ne.s32.totalorder %s87, %s88
      %p102 = scmp.eq.s32.totalorder %s68, 3
      %p103 = por %p101, %p102
      %p105 = scmp.ne.s32.totalorder %s88, %s104
      %p106 = scmp.eq.s32.totalorder %s68, 0
      %p107 = por %p105, %p106
      %s108 = ssub.s32 %s69, %s81
      %p109 = scmp.eq.s32.totalorder %s108, 0
      %s111 = sadd.s32 %s110, 1
      %s112 = scalar_select %p109, %s110, %s111
      %p115 = pneg %p109
      %p116 = scmp.eq.s32.totalorder %s62, 3
      %p117 = por %p115, %p116
      %p118 = scmp.ne.s32.totalorder %s110, %s113
      %p119 = scmp.eq.s32.totalorder %s62, 0
      %p120 = por %p118, %p119
      %p121 = scmp.ne.s32.totalorder %s110, %s113
      %p122 = scmp.eq.s32.totalorder %s67, 3
      %p123 = por %p121, %p122
      %p124 = scmp.ne.s32.totalorder %s113, %s114
      %p125 = scmp.eq.s32.totalorder %s67, 0
      %p126 = por %p124, %p125
      %p127 = scmp.ne.s32.totalorder %s113, %s114
      %p128 = scmp.eq.s32.totalorder %s68, 3
      %p129 = por %p127, %p128
      %p131 = scmp.ne.s32.totalorder %s114, %s130
      %p132 = scmp.eq.s32.totalorder %s68, 0
      %p133 = por %p131, %p132
      %s134 = ssub.s32 %s70, %s77
      %p135 = scmp.eq.s32.totalorder %s134, 0
      %s137 = sadd.s32 %s136, 1
      %s138 = scalar_select %p135, %s136, %s137
      %p141 = pneg %p135
      %p142 = scmp.eq.s32.totalorder %s62, 3
      %p143 = por %p141, %p142
      %p144 = scmp.ne.s32.totalorder %s136, %s139
      %p145 = scmp.eq.s32.totalorder %s62, 0
      %p146 = por %p144, %p145
      %p147 = scmp.ne.s32.totalorder %s136, %s139
      %p148 = scmp.eq.s32.totalorder %s67, 3
      %p149 = por %p147, %p148
      %p150 = scmp.ne.s32.totalorder %s139, %s140
      %p151 = scmp.eq.s32.totalorder %s67, 0
      %p152 = por %p150, %p151
      %p153 = scmp.ne.s32.totalorder %s139, %s140
      %p154 = scmp.eq.s32.totalorder %s68, 3
      %p155 = por %p153, %p154
      %p157 = scmp.ne.s32.totalorder %s140, %s156
      %p158 = scmp.eq.s32.totalorder %s68, 0
      %p159 = por %p157, %p158
      %s160 = ssub.s32 %s70, %s77
      %p161 = scmp.eq.s32.totalorder %s160, 0
      %s163 = sadd.s32 %s162, 1
      %s164 = scalar_select %p161, %s162, %s163
      %p167 = pneg %p161
      %p168 = scmp.eq.s32.totalorder %s62, 3
      %p169 = por %p167, %p168
      %p170 = scmp.ne.s32.totalorder %s162, %s165
      %p171 = scmp.eq.s32.totalorder %s62, 0
      %p172 = por %p170, %p171
      %p173 = scmp.ne.s32.totalorder %s162, %s165
      %p174 = scmp.eq.s32.totalorder %s67, 3
      %p175 = por %p173, %p174
      %p176 = scmp.ne.s32.totalorder %s165, %s166
      %p177 = scmp.eq.s32.totalorder %s67, 0
      %p178 = por %p176, %p177
      %p179 = scmp.ne.s32.totalorder %s165, %s166
      %p180 = scmp.eq.s32.totalorder %s68, 3
      %p181 = por %p179, %p180
      %p183 = scmp.ne.s32.totalorder %s166, %s182
      %p184 = scmp.eq.s32.totalorder %s68, 0
      %p185 = por %p183, %p184
      %s186 = ssub.s32 %s70, %s77
      %p187 = scmp.eq.s32.totalorder %s186, 0
      %s189 = sadd.s32 %s188, 1
      %s190 = scalar_select %p187, %s188, %s189
      %p193 = pneg %p187
      %p194 = scmp.eq.s32.totalorder %s62, 3
      %p195 = por %p193, %p194
      %p196 = scmp.ne.s32.totalorder %s188, %s191
      %p197 = scmp.eq.s32.totalorder %s62, 0
      %p198 = por %p196, %p197
      %p199 = scmp.ne.s32.totalorder %s188, %s191
      %p200 = scmp.eq.s32.totalorder %s67, 3
      %p201 = por %p199, %p200
      %p202 = scmp.ne.s32.totalorder %s191, %s192
      %p203 = scmp.eq.s32.totalorder %s67, 0
      %p204 = por %p202, %p203
      %p205 = scmp.ne.s32.totalorder %s191, %s192
      %p206 = scmp.eq.s32.totalorder %s68, 3
      %p207 = por %p205, %p206
      %p209 = scmp.ne.s32.totalorder %s192, %s208
      %p210 = scmp.eq.s32.totalorder %s68, 0
      %p211 = por %p209, %p210
      %s212 = ssub.s32 %s70, %s77
      %p213 = scmp.eq.s32.totalorder %s212, 0
      %s215 = sadd.s32 %s214, 1
      %s216 = scalar_select %p213, %s214, %s215
      %p219 = pneg %p213
      %p220 = scmp.eq.s32.totalorder %s62, 3
      %p221 = por %p219, %p220
      %p222 = scmp.ne.s32.totalorder %s214, %s217
      %p223 = scmp.eq.s32.totalorder %s62, 0
      %p224 = por %p222, %p223
      %p225 = scmp.ne.s32.totalorder %s214, %s217
      %p226 = scmp.eq.s32.totalorder %s67, 3
      %p227 = por %p225, %p226
      %p228 = scmp.ne.s32.totalorder %s217, %s218
      %p229 = scmp.eq.s32.totalorder %s67, 0
      %p230 = por %p228, %p229
      %p231 = scmp.ne.s32.totalorder %s217, %s218
      %p232 = scmp.eq.s32.totalorder %s68, 3
      %p233 = por %p231, %p232
      %p235 = scmp.ne.s32.totalorder %s218, %s234
      %p236 = scmp.eq.s32.totalorder %s68, 0
      %p237 = por %p235, %p236
      %s238 = ssub.s32 %s70, %s77
      %p239 = scmp.eq.s32.totalorder %s238, 0
      %s241 = sadd.s32 %s240, 1
      %s242 = scalar_select %p239, %s240, %s241
      %p245 = pneg %p239
      %p246 = scmp.eq.s32.totalorder %s62, 3
      %p247 = por %p245, %p246
      %p248 = scmp.ne.s32.totalorder %s240, %s243
      %p249 = scmp.eq.s32.totalorder %s62, 0
      %p250 = por %p248, %p249
      %p251 = scmp.ne.s32.totalorder %s240, %s243
      %p252 = scmp.eq.s32.totalorder %s67, 3
      %p253 = por %p251, %p252
      %p254 = scmp.ne.s32.totalorder %s243, %s244
      %p255 = scmp.eq.s32.totalorder %s67, 0
      %p256 = por %p254, %p255
      %p257 = scmp.ne.s32.totalorder %s243, %s244
      %p258 = scmp.eq.s32.totalorder %s68, 3
      %p259 = por %p257, %p258
      %p261 = scmp.ne.s32.totalorder %s244, %s260
      %p262 = scmp.eq.s32.totalorder %s68, 0
      %p263 = por %p261, %p262
      %s264 = ssub.s32 %s70, %s77
      %p265 = scmp.eq.s32.totalorder %s264, 0
      %s267 = sadd.s32 %s266, 1
      %s268 = scalar_select %p265, %s266, %s267
      %p271 = pneg %p265
      %p272 = scmp.eq.s32.totalorder %s62, 3
      %p273 = por %p271, %p272
      %p274 = scmp.ne.s32.totalorder %s266, %s269
      %p275 = scmp.eq.s32.totalorder %s62, 0
      %p276 = por %p274, %p275
      %p277 = scmp.ne.s32.totalorder %s266, %s269
      %p278 = scmp.eq.s32.totalorder %s67, 3
      %p279 = por %p277, %p278
      %p280 = scmp.ne.s32.totalorder %s269, %s270
      %p281 = scmp.eq.s32.totalorder %s67, 0
      %p282 = por %p280, %p281
      %p283 = scmp.ne.s32.totalorder %s269, %s270
      %p284 = scmp.eq.s32.totalorder %s68, 3
      %p285 = por %p283, %p284
      %p287 = scmp.ne.s32.totalorder %s270, %s286
      %p288 = scmp.eq.s32.totalorder %s68, 0
      %p289 = por %p287, %p288
      %s290 = ssub.s32 %s70, %s77
      %p291 = scmp.eq.s32.totalorder %s290, 0
      %s293 = sadd.s32 %s292, 1
      %s294 = scalar_select %p291, %s292, %s293
      %p297 = pneg %p291
      %p298 = scmp.eq.s32.totalorder %s62, 3
      %p299 = por %p297, %p298
      %p300 = scmp.ne.s32.totalorder %s292, %s295
      %p301 = scmp.eq.s32.totalorder %s62, 0
      %p302 = por %p300, %p301
      %p303 = scmp.ne.s32.totalorder %s292, %s295
      %p304 = scmp.eq.s32.totalorder %s67, 3
      %p305 = por %p303, %p304
      %p306 = scmp.ne.s32.totalorder %s295, %s296
      %p307 = scmp.eq.s32.totalorder %s67, 0
      %p308 = por %p306, %p307
      %p309 = scmp.ne.s32.totalorder %s295, %s296
      %p310 = scmp.eq.s32.totalorder %s68, 3
      %p311 = por %p309, %p310
      %p313 = scmp.ne.s32.totalorder %s296, %s312
      %p314 = scmp.eq.s32.totalorder %s68, 0
      %p315 = por %p313, %p314
      %s316 = ssub.s32 %s70, %s77
      %p317 = scmp.eq.s32.totalorder %s316, 0
      %s319 = sadd.s32 %s318, 1
      %s320 = scalar_select %p317, %s318, %s319
      %p323 = pneg %p317
      %p324 = scmp.eq.s32.totalorder %s62, 3
      %p325 = por %p323, %p324
      %p326 = scmp.ne.s32.totalorder %s318, %s321
      %p327 = scmp.eq.s32.totalorder %s62, 0
      %p328 = por %p326, %p327
      %p329 = scmp.ne.s32.totalorder %s318, %s321
      %p330 = scmp.eq.s32.totalorder %s67, 3
      %p331 = por %p329, %p330
      %p332 = scmp.ne.s32.totalorder %s321, %s322
      %p333 = scmp.eq.s32.totalorder %s67, 0
      %p334 = por %p332, %p333
      %p335 = scmp.ne.s32.totalorder %s321, %s322
      %p336 = scmp.eq.s32.totalorder %s68, 3
      %p337 = por %p335, %p336
      %p339 = scmp.ne.s32.totalorder %s322, %s338
      %p340 = scmp.eq.s32.totalorder %s68, 0
      %p341 = por %p339, %p340
      %s342 = ssub.s32 %s70, %s77
      %p343 = scmp.eq.s32.totalorder %s342, 0
      %s345 = sadd.s32 %s344, 1
      %s346 = scalar_select %p343, %s344, %s345
      %p349 = pneg %p343
      %p350 = scmp.eq.s32.totalorder %s62, 3
      %p351 = por %p349, %p350
      %p352 = scmp.ne.s32.totalorder %s344, %s347
      %p353 = scmp.eq.s32.totalorder %s62, 0
      %p354 = por %p352, %p353
      %p355 = scmp.ne.s32.totalorder %s344, %s347
      %p356 = scmp.eq.s32.totalorder %s67, 3
      %p357 = por %p355, %p356
      %p358 = scmp.ne.s32.totalorder %s347, %s348
      %p359 = scmp.eq.s32.totalorder %s67, 0
      %p360 = por %p358, %p359
      %p361 = scmp.ne.s32.totalorder %s347, %s348
      %p362 = scmp.eq.s32.totalorder %s68, 3
      %p363 = por %p361, %p362
      %p365 = scmp.ne.s32.totalorder %s348, %s364
      %p366 = scmp.eq.s32.totalorder %s68, 0
      %p367 = por %p365, %p366
      %s368 = ssub.s32 %s70, %s77
      %p369 = scmp.eq.s32.totalorder %s368, 0
      %s371 = sadd.s32 %s370, 1
      %s372 = scalar_select %p369, %s370, %s371
      %p375 = pneg %p369
      %p376 = scmp.eq.s32.totalorder %s62, 3
      %p377 = por %p375, %p376
      %p378 = scmp.ne.s32.totalorder %s370, %s373
      %p379 = scmp.eq.s32.totalorder %s62, 0
      %p380 = por %p378, %p379
      %p381 = scmp.ne.s32.totalorder %s370, %s373
      %p382 = scmp.eq.s32.totalorder %s67, 3
      %p383 = por %p381, %p382
      %p384 = scmp.ne.s32.totalorder %s373, %s374
      %p385 = scmp.eq.s32.totalorder %s67, 0
      %p386 = por %p384, %p385
      %p387 = scmp.ne.s32.totalorder %s373, %s374
      %p388 = scmp.eq.s32.totalorder %s68, 3
      %p389 = por %p387, %p388
      %p391 = scmp.ne.s32.totalorder %s374, %s390
      %p392 = scmp.eq.s32.totalorder %s68, 0
      %p393 = por %p391, %p392
      %s394 = ssub.s32 %s70, %s77
      %p395 = scmp.eq.s32.totalorder %s394, 0
      %s397 = sadd.s32 %s396, 1
      %s398 = scalar_select %p395, %s396, %s397
      %p401 = pneg %p395
      %p402 = scmp.eq.s32.totalorder %s62, 3
      %p403 = por %p401, %p402
      %p404 = scmp.ne.s32.totalorder %s396, %s399
      %p405 = scmp.eq.s32.totalorder %s62, 0
      %p406 = por %p404, %p405
      %p407 = scmp.ne.s32.totalorder %s396, %s399
      %p408 = scmp.eq.s32.totalorder %s67, 3
      %p409 = por %p407, %p408
      %p410 = scmp.ne.s32.totalorder %s399, %s400
      %p411 = scmp.eq.s32.totalorder %s67, 0
      %p412 = por %p410, %p411
      %p413 = scmp.ne.s32.totalorder %s399, %s400
      %p414 = scmp.eq.s32.totalorder %s68, 3
      %p415 = por %p413, %p414
      %p417 = scmp.ne.s32.totalorder %s400, %s416
      %p418 = scmp.eq.s32.totalorder %s68, 0
      %p419 = por %p417, %p418
      %s420 = ssub.s32 %s70, %s77
      %p421 = scmp.eq.s32.totalorder %s420, 0
      %s423 = sadd.s32 %s422, 1
      %s424 = scalar_select %p421, %s422, %s423
      %p427 = pneg %p421
      %p428 = scmp.eq.s32.totalorder %s62, 3
      %p429 = por %p427, %p428
      %p430 = scmp.ne.s32.totalorder %s422, %s425
      %p431 = scmp.eq.s32.totalorder %s62, 0
      %p432 = por %p430, %p431
      %p433 = scmp.ne.s32.totalorder %s422, %s425
      %p434 = scmp.eq.s32.totalorder %s67, 3
      %p435 = por %p433, %p434
      %p436 = scmp.ne.s32.totalorder %s425, %s426
      %p437 = scmp.eq.s32.totalorder %s67, 0
      %p438 = por %p436, %p437
      %p439 = scmp.ne.s32.totalorder %s425, %s426
      %p440 = scmp.eq.s32.totalorder %s68, 3
      %p441 = por %p439, %p440
      %p443 = scmp.ne.s32.totalorder %s426, %s442
      %p444 = scmp.eq.s32.totalorder %s68, 0
      %p445 = por %p443, %p444
      %s446 = ssub.s32 %s70, %s77
      %p447 = scmp.eq.s32.totalorder %s446, 0
      %s449 = sadd.s32 %s448, 1
      %s450 = scalar_select %p447, %s448, %s449
      %p453 = pneg %p447
      %p454 = scmp.eq.s32.totalorder %s62, 3
      %p455 = por %p453, %p454
      %p456 = scmp.ne.s32.totalorder %s448, %s451
      %p457 = scmp.eq.s32.totalorder %s62, 0
      %p458 = por %p456, %p457
      %p459 = scmp.ne.s32.totalorder %s448, %s451
      %p460 = scmp.eq.s32.totalorder %s67, 3
      %p461 = por %p459, %p460
      %p462 = scmp.ne.s32.totalorder %s451, %s452
      %p463 = scmp.eq.s32.totalorder %s67, 0
      %p464 = por %p462, %p463
      %p465 = scmp.ne.s32.totalorder %s451, %s452
      %p466 = scmp.eq.s32.totalorder %s68, 3
      %p467 = por %p465, %p466
      %p469 = scmp.ne.s32.totalorder %s452, %s468
      %p470 = scmp.eq.s32.totalorder %s68, 0
      %p471 = por %p469, %p470
      %s472 = ssub.s32 %s70, %s77
      %p473 = scmp.eq.s32.totalorder %s472, 0
      %s475 = sadd.s32 %s474, 1
      %s476 = scalar_select %p473, %s474, %s475
      %p479 = pneg %p473
      %p480 = scmp.eq.s32.totalorder %s62, 3
      %p481 = por %p479, %p480
      %p482 = scmp.ne.s32.totalorder %s474, %s477
      %p483 = scmp.eq.s32.totalorder %s62, 0
      %p484 = por %p482, %p483
      %p485 = scmp.ne.s32.totalorder %s474, %s477
      %p486 = scmp.eq.s32.totalorder %s67, 3
      %p487 = por %p485, %p486
      %p488 = scmp.ne.s32.totalorder %s477, %s478
      %p489 = scmp.eq.s32.totalorder %s67, 0
      %p490 = por %p488, %p489
      %p491 = scmp.ne.s32.totalorder %s477, %s478
      %p492 = scmp.eq.s32.totalorder %s68, 3
      %p493 = por %p491, %p492
      %p495 = scmp.ne.s32.totalorder %s478, %s494
      %p496 = scmp.eq.s32.totalorder %s68, 0
      %p497 = por %p495, %p496
      %s498 = ssub.s32 %s70, %s77
      %p499 = scmp.eq.s32.totalorder %s498, 0
      %s501 = sadd.s32 %s500, 1
      %s502 = scalar_select %p499, %s500, %s501
      %p505 = pneg %p499
      %p506 = scmp.eq.s32.totalorder %s62, 3
      %p507 = por %p505, %p506
      %p508 = scmp.ne.s32.totalorder %s500, %s503
      %p509 = scmp.eq.s32.totalorder %s62, 0
      %p510 = por %p508, %p509
      %p511 = scmp.ne.s32.totalorder %s500, %s503
      %p512 = scmp.eq.s32.totalorder %s67, 3
      %p513 = por %p511, %p512
      %p514 = scmp.ne.s32.totalorder %s503, %s504
      %p515 = scmp.eq.s32.totalorder %s67, 0
      %p516 = por %p514, %p515
      %p517 = scmp.ne.s32.totalorder %s503, %s504
      %p518 = scmp.eq.s32.totalorder %s68, 3
      %p519 = por %p517, %p518
      %p521 = scmp.ne.s32.totalorder %s504, %s520
      %p522 = scmp.eq.s32.totalorder %s68, 0
      %p523 = por %p521, %p522
      %s524 = ssub.s32 %s70, %s77
      %p525 = scmp.eq.s32.totalorder %s524, 0
      %s527 = sadd.s32 %s526, 1
      %s528 = scalar_select %p525, %s526, %s527
      %p531 = pneg %p525
      %p532 = scmp.eq.s32.totalorder %s62, 3
      %p533 = por %p531, %p532
      %p534 = scmp.ne.s32.totalorder %s526, %s529
      %p535 = scmp.eq.s32.totalorder %s62, 0
      %p536 = por %p534, %p535
      %p537 = scmp.ne.s32.totalorder %s526, %s529
      %p538 = scmp.eq.s32.totalorder %s67, 3
      %p539 = por %p537, %p538
      %p540 = scmp.ne.s32.totalorder %s529, %s530
      %p541 = scmp.eq.s32.totalorder %s67, 0
      %p542 = por %p540, %p541
      %p543 = scmp.ne.s32.totalorder %s529, %s530
      %p544 = scmp.eq.s32.totalorder %s68, 3
      %p545 = por %p543, %p544
      %p547 = scmp.ne.s32.totalorder %s530, %s546
      %p548 = scmp.eq.s32.totalorder %s68, 0
      %p549 = por %p547, %p548
      %s550 = ssub.s32 %s69, %s81
      %p551 = scmp.eq.s32.totalorder %s550, 0
      %s553 = sadd.s32 %s552, 1
      %s554 = scalar_select %p551, %s552, %s553
      %p557 = pneg %p551
      %p558 = scmp.eq.s32.totalorder %s62, 3
      %p559 = por %p557, %p558
      %p560 = scmp.ne.s32.totalorder %s552, %s555
      %p561 = scmp.eq.s32.totalorder %s62, 0
      %p562 = por %p560, %p561
      %p563 = scmp.ne.s32.totalorder %s552, %s555
      %p564 = scmp.eq.s32.totalorder %s67, 3
      %p565 = por %p563, %p564
      %p566 = scmp.ne.s32.totalorder %s555, %s556
      %p567 = scmp.eq.s32.totalorder %s67, 0
      %p568 = por %p566, %p567
      %p569 = scmp.ne.s32.totalorder %s555, %s556
      %p570 = scmp.eq.s32.totalorder %s68, 3
      %p571 = por %p569, %p570
      %p573 = scmp.ne.s32.totalorder %s556, %s572
      %p574 = scmp.eq.s32.totalorder %s68, 0
      %p575 = por %p573, %p574
      %s576 = ssub.s32 %s69, %s81
      %p577 = scmp.eq.s32.totalorder %s576, 0
      %s579 = sadd.s32 %s578, 1
      %s580 = scalar_select %p577, %s578, %s579
      %p583 = pneg %p577
      %p584 = scmp.eq.s32.totalorder %s62, 3
      %p585 = por %p583, %p584
      %p586 = scmp.ne.s32.totalorder %s578, %s581
      %p587 = scmp.eq.s32.totalorder %s62, 0
      %p588 = por %p586, %p587
      %p589 = scmp.ne.s32.totalorder %s578, %s581
      %p590 = scmp.eq.s32.totalorder %s67, 3
      %p591 = por %p589, %p590
      %p592 = scmp.ne.s32.totalorder %s581, %s582
      %p593 = scmp.eq.s32.totalorder %s67, 0
      %p594 = por %p592, %p593
      %p595 = scmp.ne.s32.totalorder %s581, %s582
      %p596 = scmp.eq.s32.totalorder %s68, 3
      %p597 = por %p595, %p596
      %p599 = scmp.ne.s32.totalorder %s582, %s598
      %p600 = scmp.eq.s32.totalorder %s68, 0
      %p601 = por %p599, %p600
      %p602 = scmp.le.s32.totalorder 1, %s62
      %p603 = scmp.lt.s32.totalorder %s62, 5
      %p604 = pnand %p602, %p603
      %p605 = pneg %p604
      // Predicated region
      $region9: #{transformer_forward.2} parent=5 // pred_check
        _
      $region10: #{transformer_forward.2} parent=5 // pred_check_branch
        %607 = sbr.rel (%p604) target = $region12
      $region11: #{transformer_forward.2} parent=5 // pred_region
        %s608 = ssub.s32 %s62, 1
      $region12: #{transformer_forward.2} parent=5 // pred_fallthru
        _
      %p609 = scmp.lt.s32.totalorder %s62, 4
      // Predicated region
      $region13: #{transformer_forward.2} parent=5 // pred_check
        %p610 = pneg %p609
      $region14: #{transformer_forward.2} parent=5 // pred_check_branch
        %612 = sbr.rel (%p610) target = $region16
      $region15: #{transformer_forward.2} parent=5 // pred_region
        // Predicated region
        $region17: #{transformer_forward.2} parent=15 // pred_check
          %p613 = pneg %p94
        $region18: #{transformer_forward.2} parent=15 // pred_check_branch
          %615 = sbr.rel (%p613) target = $region20
        $region19: #{transformer_forward.2} parent=15 // pred_region
          %s616 = sand.u32 %s84, 1
          %s617 = scalar_lea.sflag [#allocation4], %s616
          %s618 = sand.u32 %s84, 1
          %s619 = smul.addr %s618, 8
          %s620 = scalar_lea.vmem [#allocation3], %s619
          %s622 = ssub.s32 128, 128
          %623 = vsyncadd %s617, %s622
          %s624 = smul.addr %s69, 128
          %s625 = scalar_lea.hbm %s0, %s624
          %s627 = sshll.u32 %s620, 4
          %s628 = int_to_ptr.vmem [resolvable:$true] %s627
          %630 = dma.hbm_to_vmem [thread:$0]  %s625, 128, %s628, %s617
        $region20: #{transformer_forward.2} parent=15 // pred_fallthru
          _
        // Predicated region
        $region21: #{transformer_forward.2} parent=15 // pred_check
          %p631 = pneg %p120
        $region22: #{transformer_forward.2} parent=15 // pred_check_branch
          %633 = sbr.rel (%p631) target = $region24
        $region23: #{transformer_forward.2} parent=15 // pred_region
          %s634 = sand.u32 %s62, 1
          %s635 = scalar_lea.sflag [#allocation7], %s634
          %s636 = sand.u32 %s110, 1
          %s637 = smul.addr %s636, 8
          %s638 = scalar_lea.vmem [#allocation6], %s637
          %s640 = ssub.s32 128, 128
          %641 = vsyncadd %s635, %s640
          %s642 = smul.addr %s69, 128
          %s643 = scalar_lea.hbm %s1, %s642
          %s645 = sshll.u32 %s638, 4
          %s646 = int_to_ptr.vmem [resolvable:$true] %s645
          %648 = dma.hbm_to_vmem [thread:$0]  %s643, 128, %s646, %s635
        $region24: #{transformer_forward.2} parent=15 // pred_fallthru
          _
        // Predicated region
        $region25: #{transformer_forward.2} parent=15 // pred_check
          %p649 = pneg %p146
        $region26: #{transformer_forward.2} parent=15 // pred_check_branch
          %651 = sbr.rel (%p649) target = $region28
        $region27: #{transformer_forward.2} parent=15 // pred_region
          %s652 = sand.u32 %s62, 1
          %s653 = scalar_lea.sflag [#allocation7], %s652
          %s654 = sand.u32 %s136, 1
          %s655 = smul.addr %s654, 64
          %s656 = scalar_lea.vmem [#allocation8], %s655
          %s658 = ssub.s32 1024, 1024
          %659 = vsyncadd %s653, %s658
          %s660 = smul.addr %s70, 16
          %s661 = smul.addr %s660, 64
          %s662 = scalar_lea.hbm %s2, %s661
          %s663 = sshll.u32 %s656, 4
          %s664 = int_to_ptr.vmem [resolvable:$true] %s663
          %669 = dma.hbm_to_vmem [thread:$0]  %s662, 1024, %s664, %s653, 64, 64, 4
        $region28: #{transformer_forward.2} parent=15 // pred_fallthru
          _
        // Predicated region
        $region29: #{transformer_forward.2} parent=15 // pred_check
          %p670 = pneg %p172
        $region30: #{transformer_forward.2} parent=15 // pred_check_branch
          %672 = sbr.rel (%p670) target = $region32
        $region31: #{transformer_forward.2} parent=15 // pred_region
          %s673 = sand.u32 %s62, 1
          %s674 = scalar_lea.sflag [#allocation10], %s673
          %s675 = sand.u32 %s162, 1
          %s676 = scalar_lea.vmem [#allocation9], %s675
          %s678 = ssub.s32 16, 16
          %679 = vsyncadd %s674, %s678
          %s680 = smul.addr %s70, 16
          %s681 = scalar_lea.hbm %s3, %s680
          %s683 = sshll.u32 %s676, 4
          %s684 = int_to_ptr.vmem [resolvable:$true] %s683
          %686 = dma.hbm_to_vmem [thread:$0]  %s681, 16, %s684, %s674
        $region32: #{transformer_forward.2} parent=15 // pred_fallthru
          _
        // Predicated region
        $region33: #{transformer_forward.2} parent=15 // pred_check
          %p687 = pneg %p198
        $region34: #{transformer_forward.2} parent=15 // pred_check_branch
          %689 = sbr.rel (%p687) target = $region36
        $region35: #{transformer_forward.2} parent=15 // pred_region
          %s690 = sand.u32 %s62, 1
          %s691 = scalar_lea.sflag [#allocation10], %s690
          %s692 = sand.u32 %s188, 1
          %s693 = smul.addr %s692, 64
          %s694 = scalar_lea.vmem [#allocation11], %s693
          %s696 = ssub.s32 1024, 1024
          %697 = vsyncadd %s691, %s696
          %s698 = smul.addr %s70, 16
          %s699 = smul.addr %s698, 64
          %s700 = scalar_lea.hbm %s4, %s699
          %s701 = sshll.u32 %s694, 4
          %s702 = int_to_ptr.vmem [resolvable:$true] %s701
          %707 = dma.hbm_to_vmem [thread:$0]  %s700, 1024, %s702, %s691, 64, 64, 4
        $region36: #{transformer_forward.2} parent=15 // pred_fallthru
          _
        // Predicated region
        $region37: #{transformer_forward.2} parent=15 // pred_check
          %p708 = pneg %p224
        $region38: #{transformer_forward.2} parent=15 // pred_check_branch
          %710 = sbr.rel (%p708) target = $region40
        $region39: #{transformer_forward.2} parent=15 // pred_region
          %s711 = sand.u32 %s62, 1
          %s712 = scalar_lea.sflag [#allocation13], %s711
          %s713 = sand.u32 %s214, 1
          %s714 = scalar_lea.vmem [#allocation12], %s713
          %s716 = ssub.s32 16, 16
          %717 = vsyncadd %s712, %s716
          %s718 = smul.addr %s70, 16
          %s719 = scalar_lea.hbm %s5, %s718
          %s721 = sshll.u32 %s714, 4
          %s722 = int_to_ptr.vmem [resolvable:$true] %s721
          %724 = dma.hbm_to_vmem [thread:$0]  %s719, 16, %s722, %s712
        $region40: #{transformer_forward.2} parent=15 // pred_fallthru
          _
        // Predicated region
        $region41: #{transformer_forward.2} parent=15 // pred_check
          %p725 = pneg %p250
        $region42: #{transformer_forward.2} parent=15 // pred_check_branch
          %727 = sbr.rel (%p725) target = $region44
        $region43: #{transformer_forward.2} parent=15 // pred_region
          %s728 = sand.u32 %s62, 1
          %s729 = scalar_lea.sflag [#allocation13], %s728
          %s730 = sand.u32 %s240, 1
          %s731 = smul.addr %s730, 64
          %s732 = scalar_lea.vmem [#allocation14], %s731
          %s734 = ssub.s32 1024, 1024
          %735 = vsyncadd %s729, %s734
          %s736 = smul.addr %s70, 16
          %s737 = smul.addr %s736, 64
          %s738 = scalar_lea.hbm %s6, %s737
          %s739 = sshll.u32 %s732, 4
          %s740 = int_to_ptr.vmem [resolvable:$true] %s739
          %745 = dma.hbm_to_vmem [thread:$0]  %s738, 1024, %s740, %s729, 64, 64, 4
        $region44: #{transformer_forward.2} parent=15 // pred_fallthru
          _
        // Predicated region
        $region45: #{transformer_forward.2} parent=15 // pred_check
          %p746 = pneg %p276
        $region46: #{transformer_forward.2} parent=15 // pred_check_branch
          %748 = sbr.rel (%p746) target = $region48
        $region47: #{transformer_forward.2} parent=15 // pred_region
          %s749 = sand.u32 %s62, 1
          %s750 = scalar_lea.sflag [#allocation16], %s749
          %s751 = sand.u32 %s266, 1
          %s752 = scalar_lea.vmem [#allocation15], %s751
          %s754 = ssub.s32 16, 16
          %755 = vsyncadd %s750, %s754
          %s756 = smul.addr %s70, 16
          %s757 = scalar_lea.hbm %s7, %s756
          %s759 = sshll.u32 %s752, 4
          %s760 = int_to_ptr.vmem [resolvable:$true] %s759
          %762 = dma.hbm_to_vmem [thread:$0]  %s757, 16, %s760, %s750
        $region48: #{transformer_forward.2} parent=15 // pred_fallthru
          _
        // Predicated region
        $region49: #{transformer_forward.2} parent=15 // pred_check
          %p763 = pneg %p302
        $region50: #{transformer_forward.2} parent=15 // pred_check_branch
          %765 = sbr.rel (%p763) target = $region52
        $region51: #{transformer_forward.2} parent=15 // pred_region
          %s766 = sand.u32 %s62, 1
          %s767 = scalar_lea.sflag [#allocation16], %s766
          %s768 = sand.u32 %s292, 1
          %s769 = smul.addr %s768, 64
          %s770 = scalar_lea.vmem [#allocation17], %s769
          %s772 = ssub.s32 1024, 1024
          %773 = vsyncadd %s767, %s772
          %s774 = smul.addr %s70, 16
          %s775 = smul.addr %s774, 64
          %s776 = scalar_lea.hbm %s8, %s775
          %s777 = sshll.u32 %s770, 4
          %s778 = int_to_ptr.vmem [resolvable:$true] %s777
          %783 = dma.hbm_to_vmem [thread:$0]  %s776, 1024, %s778, %s767, 64, 64, 4
        $region52: #{transformer_forward.2} parent=15 // pred_fallthru
          _
        // Predicated region
        $region53: #{transformer_forward.2} parent=15 // pred_check
          %p784 = pneg %p328
        $region54: #{transformer_forward.2} parent=15 // pred_check_branch
          %786 = sbr.rel (%p784) target = $region56
        $region55: #{transformer_forward.2} parent=15 // pred_region
          %s787 = sand.u32 %s62, 1
          %s788 = scalar_lea.sflag [#allocation19], %s787
          %s789 = sand.u32 %s318, 1
          %s790 = scalar_lea.vmem [#allocation18], %s789
          %s792 = ssub.s32 16, 16
          %793 = vsyncadd %s788, %s792
          %s794 = smul.addr %s70, 16
          %s795 = scalar_lea.hbm %s9, %s794
          %s797 = sshll.u32 %s790, 4
          %s798 = int_to_ptr.vmem [resolvable:$true] %s797
          %800 = dma.hbm_to_vmem [thread:$0]  %s795, 16, %s798, %s788
        $region56: #{transformer_forward.2} parent=15 // pred_fallthru
          _
        // Predicated region
        $region57: #{transformer_forward.2} parent=15 // pred_check
          %p801 = pneg %p354
        $region58: #{transformer_forward.2} parent=15 // pred_check_branch
          %803 = sbr.rel (%p801) target = $region60
        $region59: #{transformer_forward.2} parent=15 // pred_region
          %s804 = sand.u32 %s62, 1
          %s805 = scalar_lea.sflag [#allocation19], %s804
          %s806 = sand.u32 %s344, 1
          %s807 = scalar_lea.vmem [#allocation20], %s806
          %s809 = ssub.s32 16, 16
          %810 = vsyncadd %s805, %s809
          %s811 = smul.addr %s70, 16
          %s812 = scalar_lea.hbm %s10, %s811
          %s814 = sshll.u32 %s807, 4
          %s815 = int_to_ptr.vmem [resolvable:$true] %s814
          %817 = dma.hbm_to_vmem [thread:$0]  %s812, 16, %s815, %s805
        $region60: #{transformer_forward.2} parent=15 // pred_fallthru
          _
        // Predicated region
        $region61: #{transformer_forward.2} parent=15 // pred_check
          %p818 = pneg %p380
        $region62: #{transformer_forward.2} parent=15 // pred_check_branch
          %820 = sbr.rel (%p818) target = $region64
        $region63: #{transformer_forward.2} parent=15 // pred_region
          %s821 = sand.u32 %s62, 1
          %s822 = scalar_lea.sflag [#allocation22], %s821
          %s823 = sand.u32 %s370, 1
          %s824 = scalar_lea.vmem [#allocation21], %s823
          %s826 = ssub.s32 16, 16
          %827 = vsyncadd %s822, %s826
          %s828 = smul.addr %s70, 16
          %s829 = scalar_lea.hbm %s11, %s828
          %s831 = sshll.u32 %s824, 4
          %s832 = int_to_ptr.vmem [resolvable:$true] %s831
          %834 = dma.hbm_to_vmem [thread:$0]  %s829, 16, %s832, %s822
        $region64: #{transformer_forward.2} parent=15 // pred_fallthru
          _
        // Predicated region
        $region65: #{transformer_forward.2} parent=15 // pred_check
          %p835 = pneg %p406
        $region66: #{transformer_forward.2} parent=15 // pred_check_branch
          %837 = sbr.rel (%p835) target = $region68
        $region67: #{transformer_forward.2} parent=15 // pred_region
          %s838 = sand.u32 %s62, 1
          %s839 = scalar_lea.sflag [#allocation22], %s838
          %s840 = sand.u32 %s396, 1
          %s841 = smul.addr %s840, 64
          %s842 = scalar_lea.vmem [#allocation23], %s841
          %s844 = ssub.s32 1024, 1024
          %845 = vsyncadd %s839, %s844
          %s846 = smul.addr %s70, 16
          %s847 = smul.addr %s846, 64
          %s848 = scalar_lea.hbm %s12, %s847
          %s849 = sshll.u32 %s842, 4
          %s850 = int_to_ptr.vmem [resolvable:$true] %s849
          %855 = dma.hbm_to_vmem [thread:$0]  %s848, 1024, %s850, %s839, 64, 64, 4
        $region68: #{transformer_forward.2} parent=15 // pred_fallthru
          _
        // Predicated region
        $region69: #{transformer_forward.2} parent=15 // pred_check
          %p856 = pneg %p432
        $region70: #{transformer_forward.2} parent=15 // pred_check_branch
          %858 = sbr.rel (%p856) target = $region72
        $region71: #{transformer_forward.2} parent=15 // pred_region
          %s859 = sand.u32 %s62, 1
          %s860 = scalar_lea.sflag [#allocation25], %s859
          %s861 = sand.u32 %s422, 1
          %s862 = scalar_lea.vmem [#allocation24], %s861
          %s864 = ssub.s32 16, 16
          %865 = vsyncadd %s860, %s864
          %s866 = smul.addr %s70, 16
          %s867 = scalar_lea.hbm %s13, %s866
          %s869 = sshll.u32 %s862, 4
          %s870 = int_to_ptr.vmem [resolvable:$true] %s869
          %872 = dma.hbm_to_vmem [thread:$0]  %s867, 16, %s870, %s860
        $region72: #{transformer_forward.2} parent=15 // pred_fallthru
          _
        // Predicated region
        $region73: #{transformer_forward.2} parent=15 // pred_check
          %p873 = pneg %p458
        $region74: #{transformer_forward.2} parent=15 // pred_check_branch
          %875 = sbr.rel (%p873) target = $region76
        $region75: #{transformer_forward.2} parent=15 // pred_region
          %s876 = sand.u32 %s62, 1
          %s877 = scalar_lea.sflag [#allocation25], %s876
          %s878 = sand.u32 %s448, 1
          %s879 = smul.addr %s878, 64
          %s880 = scalar_lea.vmem [#allocation26], %s879
          %s882 = ssub.s32 1024, 1024
          %883 = vsyncadd %s877, %s882
          %s884 = smul.addr %s70, 16
          %s885 = smul.addr %s884, 64
          %s886 = scalar_lea.hbm %s14, %s885
          %s887 = sshll.u32 %s880, 4
          %s888 = int_to_ptr.vmem [resolvable:$true] %s887
          %893 = dma.hbm_to_vmem [thread:$0]  %s886, 1024, %s888, %s877, 64, 64, 4
        $region76: #{transformer_forward.2} parent=15 // pred_fallthru
          _
        // Predicated region
        $region77: #{transformer_forward.2} parent=15 // pred_check
          %p894 = pneg %p484
        $region78: #{transformer_forward.2} parent=15 // pred_check_branch
          %896 = sbr.rel (%p894) target = $region80
        $region79: #{transformer_forward.2} parent=15 // pred_region
          %s897 = sand.u32 %s62, 1
          %s898 = scalar_lea.sflag [#allocation28], %s897
          %s899 = sand.u32 %s474, 1
          %s900 = scalar_lea.vmem [#allocation27], %s899
          %s902 = ssub.s32 16, 16
          %903 = vsyncadd %s898, %s902
          %s904 = smul.addr %s70, 16
          %s905 = scalar_lea.hbm %s15, %s904
          %s907 = sshll.u32 %s900, 4
          %s908 = int_to_ptr.vmem [resolvable:$true] %s907
          %910 = dma.hbm_to_vmem [thread:$0]  %s905, 16, %s908, %s898
        $region80: #{transformer_forward.2} parent=15 // pred_fallthru
          _
        // Predicated region
        $region81: #{transformer_forward.2} parent=15 // pred_check
          %p911 = pneg %p510
        $region82: #{transformer_forward.2} parent=15 // pred_check_branch
          %913 = sbr.rel (%p911) target = $region84
        $region83: #{transformer_forward.2} parent=15 // pred_region
          %s914 = sand.u32 %s62, 1
          %s915 = scalar_lea.sflag [#allocation28], %s914
          %s916 = sand.u32 %s500, 1
          %s917 = scalar_lea.vmem [#allocation29], %s916
          %s919 = ssub.s32 16, 16
          %920 = vsyncadd %s915, %s919
          %s921 = smul.addr %s70, 16
          %s922 = scalar_lea.hbm %s16, %s921
          %s924 = sshll.u32 %s917, 4
          %s925 = int_to_ptr.vmem [resolvable:$true] %s924
          %927 = dma.hbm_to_vmem [thread:$0]  %s922, 16, %s925, %s915
        $region84: #{transformer_forward.2} parent=15 // pred_fallthru
          _
        // Predicated region
        $region85: #{transformer_forward.2} parent=15 // pred_check
          %p928 = pneg %p536
        $region86: #{transformer_forward.2} parent=15 // pred_check_branch
          %930 = sbr.rel (%p928) target = $region88
        $region87: #{transformer_forward.2} parent=15 // pred_region
          %s931 = sand.u32 %s526, 1
          %s932 = scalar_lea.sflag [#allocation31], %s931
          %s933 = sand.u32 %s526, 1
          %s934 = scalar_lea.vmem [#allocation30], %s933
          %s936 = ssub.s32 16, 16
          %937 = vsyncadd %s932, %s936
          %s938 = smul.addr %s70, 16
          %s939 = scalar_lea.hbm %s17, %s938
          %s941 = sshll.u32 %s934, 4
          %s942 = int_to_ptr.vmem [resolvable:$true] %s941
          %944 = dma.hbm_to_vmem [thread:$0]  %s939, 16, %s942, %s932
        $region88: #{transformer_forward.2} parent=15 // pred_fallthru
          _
      $region16: #{transformer_forward.2} parent=5 // pred_fallthru
        _
      %p945 = scmp.le.s32.totalorder 1, %s62
      %p946 = scmp.lt.s32.totalorder %s62, 5
      %p947 = pnand %p945, %p946
      %p948 = pneg %p947
      // Predicated region
      $region89: #{transformer_forward.2} parent=5 // pred_check
        _
      $region90: #{transformer_forward.2} parent=5 // pred_check_branch
        %950 = sbr.rel (%p947) target = $region92
      $region91: #{transformer_forward.2} parent=5 // pred_region
        %s951 = ssub.s32 %s62, 1
        %s952 = sand.u32 %s87, 1
        %s953 = scalar_lea.sflag [#allocation4], %s952
        %s954 = sand.u32 %s87, 1
        %s955 = smul.addr %s954, 8
        %s956 = scalar_lea.vmem [#allocation3], %s955
        // Predicated region
        $region93: #{transformer_forward.2} parent=91 // pred_check
          %p957 = pneg %p100
        $region94: #{transformer_forward.2} parent=91 // pred_check_branch
          %959 = sbr.rel (%p957) target = $region96
        $region95: #{transformer_forward.2} parent=91 // pred_region
          %960 = dma.done %s953, 128
        $region96: #{transformer_forward.2} parent=91 // pred_fallthru
          _
        %s961 = sand.u32 %s67, 1
        %s962 = scalar_lea.sflag [#allocation7], %s961
        %s963 = sand.u32 %s113, 1
        %s964 = smul.addr %s963, 8
        %s965 = scalar_lea.vmem [#allocation6], %s964
        // Predicated region
        $region97: #{transformer_forward.2} parent=91 // pred_check
          %p966 = pneg %p126
        $region98: #{transformer_forward.2} parent=91 // pred_check_branch
          %968 = sbr.rel (%p966) target = $region100
        $region99: #{transformer_forward.2} parent=91 // pred_region
          %969 = dma.done %s962, 128
        $region100: #{transformer_forward.2} parent=91 // pred_fallthru
          _
        %s970 = sand.u32 %s67, 1
        %s971 = scalar_lea.sflag [#allocation7], %s970
        %s972 = sand.u32 %s139, 1
        %s973 = smul.addr %s972, 64
        %s974 = scalar_lea.vmem [#allocation8], %s973
        // Predicated region
        $region101: #{transformer_forward.2} parent=91 // pred_check
          %p975 = pneg %p152
        $region102: #{transformer_forward.2} parent=91 // pred_check_branch
          %977 = sbr.rel (%p975) target = $region104
        $region103: #{transformer_forward.2} parent=91 // pred_region
          %978 = dma.done %s971, 1024
        $region104: #{transformer_forward.2} parent=91 // pred_fallthru
          _
        %s979 = sand.u32 %s67, 1
        %s980 = scalar_lea.sflag [#allocation10], %s979
        %s981 = sand.u32 %s165, 1
        %s982 = scalar_lea.vmem [#allocation9], %s981
        // Predicated region
        $region105: #{transformer_forward.2} parent=91 // pred_check
          %p983 = pneg %p178
        $region106: #{transformer_forward.2} parent=91 // pred_check_branch
          %985 = sbr.rel (%p983) target = $region108
        $region107: #{transformer_forward.2} parent=91 // pred_region
          %986 = dma.done %s980, 16
        $region108: #{transformer_forward.2} parent=91 // pred_fallthru
          _
        %s987 = sand.u32 %s67, 1
        %s988 = scalar_lea.sflag [#allocation10], %s987
        %s989 = sand.u32 %s191, 1
        %s990 = smul.addr %s989, 64
        %s991 = scalar_lea.vmem [#allocation11], %s990
        // Predicated region
        $region109: #{transformer_forward.2} parent=91 // pred_check
          %p992 = pneg %p204
        $region110: #{transformer_forward.2} parent=91 // pred_check_branch
          %994 = sbr.rel (%p992) target = $region112
        $region111: #{transformer_forward.2} parent=91 // pred_region
          %995 = dma.done %s988, 1024
        $region112: #{transformer_forward.2} parent=91 // pred_fallthru
          _
        %s996 = sand.u32 %s67, 1
        %s997 = scalar_lea.sflag [#allocation13], %s996
        %s998 = sand.u32 %s217, 1
        %s999 = scalar_lea.vmem [#allocation12], %s998
        // Predicated region
        $region113: #{transformer_forward.2} parent=91 // pred_check
          %p1000 = pneg %p230
        $region114: #{transformer_forward.2} parent=91 // pred_check_branch
          %1002 = sbr.rel (%p1000) target = $region116
        $region115: #{transformer_forward.2} parent=91 // pred_region
          %1003 = dma.done %s997, 16
        $region116: #{transformer_forward.2} parent=91 // pred_fallthru
          _
        %s1004 = sand.u32 %s67, 1
        %s1005 = scalar_lea.sflag [#allocation13], %s1004
        %s1006 = sand.u32 %s243, 1
        %s1007 = smul.addr %s1006, 64
        %s1008 = scalar_lea.vmem [#allocation14], %s1007
        // Predicated region
        $region117: #{transformer_forward.2} parent=91 // pred_check
          %p1009 = pneg %p256
        $region118: #{transformer_forward.2} parent=91 // pred_check_branch
          %1011 = sbr.rel (%p1009) target = $region120
        $region119: #{transformer_forward.2} parent=91 // pred_region
          %1012 = dma.done %s1005, 1024
        $region120: #{transformer_forward.2} parent=91 // pred_fallthru
          _
        %s1013 = sand.u32 %s67, 1
        %s1014 = scalar_lea.sflag [#allocation16], %s1013
        %s1015 = sand.u32 %s269, 1
        %s1016 = scalar_lea.vmem [#allocation15], %s1015
        // Predicated region
        $region121: #{transformer_forward.2} parent=91 // pred_check
          %p1017 = pneg %p282
        $region122: #{transformer_forward.2} parent=91 // pred_check_branch
          %1019 = sbr.rel (%p1017) target = $region124
        $region123: #{transformer_forward.2} parent=91 // pred_region
          %1020 = dma.done %s1014, 16
        $region124: #{transformer_forward.2} parent=91 // pred_fallthru
          _
        %s1021 = sand.u32 %s67, 1
        %s1022 = scalar_lea.sflag [#allocation16], %s1021
        %s1023 = sand.u32 %s295, 1
        %s1024 = smul.addr %s1023, 64
        %s1025 = scalar_lea.vmem [#allocation17], %s1024
        // Predicated region
        $region125: #{transformer_forward.2} parent=91 // pred_check
          %p1026 = pneg %p308
        $region126: #{transformer_forward.2} parent=91 // pred_check_branch
          %1028 = sbr.rel (%p1026) target = $region128
        $region127: #{transformer_forward.2} parent=91 // pred_region
          %1029 = dma.done %s1022, 1024
        $region128: #{transformer_forward.2} parent=91 // pred_fallthru
          _
        %s1030 = sand.u32 %s67, 1
        %s1031 = scalar_lea.sflag [#allocation19], %s1030
        %s1032 = sand.u32 %s321, 1
        %s1033 = scalar_lea.vmem [#allocation18], %s1032
        // Predicated region
        $region129: #{transformer_forward.2} parent=91 // pred_check
          %p1034 = pneg %p334
        $region130: #{transformer_forward.2} parent=91 // pred_check_branch
          %1036 = sbr.rel (%p1034) target = $region132
        $region131: #{transformer_forward.2} parent=91 // pred_region
          %1037 = dma.done %s1031, 16
        $region132: #{transformer_forward.2} parent=91 // pred_fallthru
          _
        %s1038 = sand.u32 %s67, 1
        %s1039 = scalar_lea.sflag [#allocation19], %s1038
        %s1040 = sand.u32 %s347, 1
        %s1041 = scalar_lea.vmem [#allocation20], %s1040
        // Predicated region
        $region133: #{transformer_forward.2} parent=91 // pred_check
          %p1042 = pneg %p360
        $region134: #{transformer_forward.2} parent=91 // pred_check_branch
          %1044 = sbr.rel (%p1042) target = $region136
        $region135: #{transformer_forward.2} parent=91 // pred_region
          %1045 = dma.done %s1039, 16
        $region136: #{transformer_forward.2} parent=91 // pred_fallthru
          _
        %s1046 = sand.u32 %s67, 1
        %s1047 = scalar_lea.sflag [#allocation22], %s1046
        %s1048 = sand.u32 %s373, 1
        %s1049 = scalar_lea.vmem [#allocation21], %s1048
        // Predicated region
        $region137: #{transformer_forward.2} parent=91 // pred_check
          %p1050 = pneg %p386
        $region138: #{transformer_forward.2} parent=91 // pred_check_branch
          %1052 = sbr.rel (%p1050) target = $region140
        $region139: #{transformer_forward.2} parent=91 // pred_region
          %1053 = dma.done %s1047, 16
        $region140: #{transformer_forward.2} parent=91 // pred_fallthru
          _
        %s1054 = sand.u32 %s67, 1
        %s1055 = scalar_lea.sflag [#allocation22], %s1054
        %s1056 = sand.u32 %s399, 1
        %s1057 = smul.addr %s1056, 64
        %s1058 = scalar_lea.vmem [#allocation23], %s1057
        // Predicated region
        $region141: #{transformer_forward.2} parent=91 // pred_check
          %p1059 = pneg %p412
        $region142: #{transformer_forward.2} parent=91 // pred_check_branch
          %1061 = sbr.rel (%p1059) target = $region144
        $region143: #{transformer_forward.2} parent=91 // pred_region
          %1062 = dma.done %s1055, 1024
        $region144: #{transformer_forward.2} parent=91 // pred_fallthru
          _
        %s1063 = sand.u32 %s67, 1
        %s1064 = scalar_lea.sflag [#allocation25], %s1063
        %s1065 = sand.u32 %s425, 1
        %s1066 = scalar_lea.vmem [#allocation24], %s1065
        // Predicated region
        $region145: #{transformer_forward.2} parent=91 // pred_check
          %p1067 = pneg %p438
        $region146: #{transformer_forward.2} parent=91 // pred_check_branch
          %1069 = sbr.rel (%p1067) target = $region148
        $region147: #{transformer_forward.2} parent=91 // pred_region
          %1070 = dma.done %s1064, 16
        $region148: #{transformer_forward.2} parent=91 // pred_fallthru
          _
        %s1071 = sand.u32 %s67, 1
        %s1072 = scalar_lea.sflag [#allocation25], %s1071
        %s1073 = sand.u32 %s451, 1
        %s1074 = smul.addr %s1073, 64
        %s1075 = scalar_lea.vmem [#allocation26], %s1074
        // Predicated region
        $region149: #{transformer_forward.2} parent=91 // pred_check
          %p1076 = pneg %p464
        $region150: #{transformer_forward.2} parent=91 // pred_check_branch
          %1078 = sbr.rel (%p1076) target = $region152
        $region151: #{transformer_forward.2} parent=91 // pred_region
          %1079 = dma.done %s1072, 1024
        $region152: #{transformer_forward.2} parent=91 // pred_fallthru
          _
        %s1080 = sand.u32 %s67, 1
        %s1081 = scalar_lea.sflag [#allocation28], %s1080
        %s1082 = sand.u32 %s477, 1
        %s1083 = scalar_lea.vmem [#allocation27], %s1082
        // Predicated region
        $region153: #{transformer_forward.2} parent=91 // pred_check
          %p1084 = pneg %p490
        $region154: #{transformer_forward.2} parent=91 // pred_check_branch
          %1086 = sbr.rel (%p1084) target = $region156
        $region155: #{transformer_forward.2} parent=91 // pred_region
          %1087 = dma.done %s1081, 16
        $region156: #{transformer_forward.2} parent=91 // pred_fallthru
          _
        %s1088 = sand.u32 %s67, 1
        %s1089 = scalar_lea.sflag [#allocation28], %s1088
        %s1090 = sand.u32 %s503, 1
        %s1091 = scalar_lea.vmem [#allocation29], %s1090
        // Predicated region
        $region157: #{transformer_forward.2} parent=91 // pred_check
          %p1092 = pneg %p516
        $region158: #{transformer_forward.2} parent=91 // pred_check_branch
          %1094 = sbr.rel (%p1092) target = $region160
        $region159: #{transformer_forward.2} parent=91 // pred_region
          %1095 = dma.done %s1089, 16
        $region160: #{transformer_forward.2} parent=91 // pred_fallthru
          _
        %s1096 = sand.u32 %s529, 1
        %s1097 = scalar_lea.sflag [#allocation31], %s1096
        %s1098 = sand.u32 %s529, 1
        %s1099 = scalar_lea.vmem [#allocation30], %s1098
        // Predicated region
        $region161: #{transformer_forward.2} parent=91 // pred_check
          %p1100 = pneg %p542
        $region162: #{transformer_forward.2} parent=91 // pred_check_branch
          %1102 = sbr.rel (%p1100) target = $region164
        $region163: #{transformer_forward.2} parent=91 // pred_region
          %1103 = dma.done %s1097, 16
        $region164: #{transformer_forward.2} parent=91 // pred_fallthru
          _
        %s1104 = sand.u32 %s87, 1
        %s1105 = scalar_lea.sflag [#allocation4], %s1104
        %s1106 = sand.u32 %s87, 1
        %s1107 = smul.addr %s1106, 8
        %s1108 = scalar_lea.vmem [#allocation3], %s1107
        %p1109 = pneg %p100
        %p1110 = pneg %p97
        %s1111 = sand.u32 %s67, 1
        %s1112 = scalar_lea.sflag [#allocation7], %s1111
        %s1113 = sand.u32 %s113, 1
        %s1114 = smul.addr %s1113, 8
        %s1115 = scalar_lea.vmem [#allocation6], %s1114
        %p1116 = pneg %p126
        %p1117 = pneg %p123
        %s1118 = sand.u32 %s67, 1
        %s1119 = scalar_lea.sflag [#allocation7], %s1118
        %s1120 = sand.u32 %s139, 1
        %s1121 = smul.addr %s1120, 64
        %s1122 = scalar_lea.vmem [#allocation8], %s1121
        %p1123 = pneg %p152
        %p1124 = pneg %p149
        %s1125 = sand.u32 %s67, 1
        %s1126 = scalar_lea.sflag [#allocation10], %s1125
        %s1127 = sand.u32 %s165, 1
        %s1128 = scalar_lea.vmem [#allocation9], %s1127
        %p1129 = pneg %p178
        %p1130 = pneg %p175
        %s1131 = sand.u32 %s67, 1
        %s1132 = scalar_lea.sflag [#allocation10], %s1131
        %s1133 = sand.u32 %s191, 1
        %s1134 = smul.addr %s1133, 64
        %s1135 = scalar_lea.vmem [#allocation11], %s1134
        %p1136 = pneg %p204
        %p1137 = pneg %p201
        %s1138 = sand.u32 %s67, 1
        %s1139 = scalar_lea.sflag [#allocation13], %s1138
        %s1140 = sand.u32 %s217, 1
        %s1141 = scalar_lea.vmem [#allocation12], %s1140
        %p1142 = pneg %p230
        %p1143 = pneg %p227
        %s1144 = sand.u32 %s67, 1
        %s1145 = scalar_lea.sflag [#allocation13], %s1144
        %s1146 = sand.u32 %s243, 1
        %s1147 = smul.addr %s1146, 64
        %s1148 = scalar_lea.vmem [#allocation14], %s1147
        %p1149 = pneg %p256
        %p1150 = pneg %p253
        %s1151 = sand.u32 %s67, 1
        %s1152 = scalar_lea.sflag [#allocation16], %s1151
        %s1153 = sand.u32 %s269, 1
        %s1154 = scalar_lea.vmem [#allocation15], %s1153
        %p1155 = pneg %p282
        %p1156 = pneg %p279
        %s1157 = sand.u32 %s67, 1
        %s1158 = scalar_lea.sflag [#allocation16], %s1157
        %s1159 = sand.u32 %s295, 1
        %s1160 = smul.addr %s1159, 64
        %s1161 = scalar_lea.vmem [#allocation17], %s1160
        %p1162 = pneg %p308
        %p1163 = pneg %p305
        %s1164 = sand.u32 %s67, 1
        %s1165 = scalar_lea.sflag [#allocation19], %s1164
        %s1166 = sand.u32 %s321, 1
        %s1167 = scalar_lea.vmem [#allocation18], %s1166
        %p1168 = pneg %p334
        %p1169 = pneg %p331
        %s1170 = sand.u32 %s67, 1
        %s1171 = scalar_lea.sflag [#allocation19], %s1170
        %s1172 = sand.u32 %s347, 1
        %s1173 = scalar_lea.vmem [#allocation20], %s1172
        %p1174 = pneg %p360
        %p1175 = pneg %p357
        %s1176 = sand.u32 %s67, 1
        %s1177 = scalar_lea.sflag [#allocation22], %s1176
        %s1178 = sand.u32 %s373, 1
        %s1179 = scalar_lea.vmem [#allocation21], %s1178
        %p1180 = pneg %p386
        %p1181 = pneg %p383
        %s1182 = sand.u32 %s67, 1
        %s1183 = scalar_lea.sflag [#allocation22], %s1182
        %s1184 = sand.u32 %s399, 1
        %s1185 = smul.addr %s1184, 64
        %s1186 = scalar_lea.vmem [#allocation23], %s1185
        %p1187 = pneg %p412
        %p1188 = pneg %p409
        %s1189 = sand.u32 %s67, 1
        %s1190 = scalar_lea.sflag [#allocation25], %s1189
        %s1191 = sand.u32 %s425, 1
        %s1192 = scalar_lea.vmem [#allocation24], %s1191
        %p1193 = pneg %p438
        %p1194 = pneg %p435
        %s1195 = sand.u32 %s67, 1
        %s1196 = scalar_lea.sflag [#allocation25], %s1195
        %s1197 = sand.u32 %s451, 1
        %s1198 = smul.addr %s1197, 64
        %s1199 = scalar_lea.vmem [#allocation26], %s1198
        %p1200 = pneg %p464
        %p1201 = pneg %p461
        %s1202 = sand.u32 %s67, 1
        %s1203 = scalar_lea.sflag [#allocation28], %s1202
        %s1204 = sand.u32 %s477, 1
        %s1205 = scalar_lea.vmem [#allocation27], %s1204
        %p1206 = pneg %p490
        %p1207 = pneg %p487
        %s1208 = sand.u32 %s67, 1
        %s1209 = scalar_lea.sflag [#allocation28], %s1208
        %s1210 = sand.u32 %s503, 1
        %s1211 = scalar_lea.vmem [#allocation29], %s1210
        %p1212 = pneg %p516
        %p1213 = pneg %p513
        %s1214 = sand.u32 %s529, 1
        %s1215 = scalar_lea.sflag [#allocation31], %s1214
        %s1216 = sand.u32 %s529, 1
        %s1217 = scalar_lea.vmem [#allocation30], %s1216
        %p1218 = pneg %p542
        %p1219 = pneg %p539
        %p1220 = pneg %p568
        %p1221 = pneg %p565
        %s1222 = sand.u32 %s555, 1
        %s1223 = scalar_lea.sflag [#allocation5], %s1222
        %s1224 = sand.u32 %s555, 1
        %s1225 = smul.addr %s1224, 8
        %s1226 = scalar_lea.vmem [#allocation32], %s1225
        %p1227 = pneg %p594
        %p1228 = pneg %p591
        %s1229 = sand.u32 %s581, 1
        %s1230 = scalar_lea.sflag [#allocation34], %s1229
        %s1231 = sand.u32 %s581, 1
        %s1232 = smul.addr %s1231, 32
        %s1233 = scalar_lea.vmem [#allocation33], %s1232
        %p1235 = scmp.eq.s32.totalorder %s72, 0
        // Predicated region
        $region165: #{transformer_forward.2} parent=91 // pred_check
          %p1236 = pneg %p1235
        $region166: #{transformer_forward.2} parent=91 // pred_check_branch
          %1238 = sbr.rel (%p1236) target = $region168
        $region167: #{transformer_forward.2} parent=91 // pred_region
          %v1239 = vld [vmem:[%s956] sm:$0xff]
          %1240 = vst [vmem:[#allocation2] sm:$0xff] %v1239
        $region168: #{transformer_forward.2} parent=91 // pred_fallthru
          _
        %v1241 = vld [vmem:[#allocation2] sm:$0xff]
        %v1242 = vlaneseq
        %v1243 = vand.u32 %v1242, 127
        %vm1244 = vcmp.lt.s32.totalorder %v1243, 32
        %v1245 = vsel %vm1244, 1, 0
        %v1246 = vcvt.s32.f32 %v1245
        %v1247 = vpack.c.bf16 %v1241, %v1241
        %v1248 = vld [vmem:[%s974] sm:$0xf]
        %v1249 = vld [vmem:[%s974 + $0x4] sm:$0xf]
        %v1250 = vld [vmem:[%s974 + $0x8] sm:$0xf]
        %v1251 = vld [vmem:[%s974 + $0xc] sm:$0xf]
        %v1252 = vld [vmem:[%s974 + $0x10] sm:$0xf]
        %v1253 = vld [vmem:[%s974 + $0x14] sm:$0xf]
        %v1254 = vld [vmem:[%s974 + $0x18] sm:$0xf]
        %v1255 = vld [vmem:[%s974 + $0x1c] sm:$0xf]
        %v1256 = vld [vmem:[%s974 + $0x20] sm:$0xf]
        %v1257 = vld [vmem:[%s974 + $0x24] sm:$0xf]
        %v1258 = vld [vmem:[%s974 + $0x28] sm:$0xf]
        %v1259 = vld [vmem:[%s974 + $0x2c] sm:$0xf]
        %v1260 = vld [vmem:[%s974 + $0x30] sm:$0xf]
        %v1261 = vld [vmem:[%s974 + $0x34] sm:$0xf]
        %v1262 = vld [vmem:[%s974 + $0x38] sm:$0xf]
        %v1263 = vld [vmem:[%s974 + $0x3c] sm:$0xf]
        %v1264 = vld [vmem:[%s982] sm:$0x1]
        %v1266 = vlaneseq
        %v1267 = vshrl.u32 %v1266, 7
        %v1268 = vsub.s32 0, %v1267
        %v1269 = vrot.slane %v1264, %v1268
        %v1287 = vunpack.c.l.b16 %v1248
        %v1288 = vunpack.c.l.b16 %v1249
        %v1289 = vunpack.c.l.b16 %v1250
        %v1290 = vunpack.c.l.b16 %v1251
        %v1291 = vunpack.c.l.b16 %v1252
        %v1292 = vunpack.c.l.b16 %v1253
        %v1293 = vunpack.c.l.b16 %v1254
        %v1294 = vunpack.c.l.b16 %v1255
        %v1295 = vunpack.c.l.b16 %v1256
        %v1296 = vunpack.c.l.b16 %v1257
        %v1297 = vunpack.c.l.b16 %v1258
        %v1298 = vunpack.c.l.b16 %v1259
        %v1299 = vunpack.c.l.b16 %v1260
        %v1300 = vunpack.c.l.b16 %v1261
        %v1301 = vunpack.c.l.b16 %v1262
        %v1302 = vunpack.c.l.b16 %v1263
        %v1303 = vpack.c.b16 %v1288, %v1287
        %v1304 = vpack.c.b16 %v1290, %v1289
        %v1305 = vpack.c.b16 %v1292, %v1291
        %v1306 = vpack.c.b16 %v1294, %v1293
        %v1307 = vpack.c.b16 %v1296, %v1295
        %v1308 = vpack.c.b16 %v1298, %v1297
        %v1309 = vpack.c.b16 %v1300, %v1299
        %v1310 = vpack.c.b16 %v1302, %v1301
        %1319 = vmatprep.subr.bf16.mxu0 0
        %1320 = vmatpush1.bf16.msra.mxu0 %v1303
        %1321 = vmatprep.subr.bf16.mxu0 0
        %1322 = vmatpush1.bf16.msra.mxu0 %v1304
        %1323 = vmatprep.subr.bf16.mxu0 0
        %1324 = vmatpush1.bf16.msra.mxu0 %v1305
        %1325 = vmatprep.subr.bf16.mxu0 0
        %1326 = vmatpush1.bf16.msra.mxu0 %v1306
        %1327 = vmatprep.subr.bf16.mxu0 0
        %1328 = vmatpush1.bf16.msra.mxu0 %v1307
        %1329 = vmatprep.subr.bf16.mxu0 0
        %1330 = vmatpush1.bf16.msra.mxu0 %v1308
        %1331 = vmatprep.subr.bf16.mxu0 0
        %1332 = vmatpush1.bf16.msra.mxu0 %v1309
        %1333 = vmatprep.subr.bf16.mxu0 0
        %1334 = vmatpush1.bf16.msra.mxu0 %v1310
        %1335 = vmatprep.subr.bf16.mxu0 0
        %1336 = vmatpush1.bf16.msra.mxu0 0
        %1337 = vmatprep.subr.bf16.mxu0 0
        %1338 = vmatpush1.bf16.msra.mxu0 0
        %1339 = vmatprep.subr.bf16.mxu0 0
        %1340 = vmatpush1.bf16.msra.mxu0 0
        %1341 = vmatprep.subr.bf16.mxu0 0
        %1342 = vmatpush1.bf16.msra.mxu0 0
        %1343 = vmatprep.subr.bf16.mxu0 0
        %1344 = vmatpush1.bf16.msra.mxu0 0
        %1345 = vmatprep.subr.bf16.mxu0 0
        %1346 = vmatpush1.bf16.msra.mxu0 0
        %1347 = vmatprep.subr.bf16.mxu0 0
        %1348 = vmatpush1.bf16.msra.mxu0 0
        %1349 = vmatprep.subr.bf16.mxu0 0
        %1350 = vmatpush1.bf16.msra.mxu0 0
        %1351 = vmatprep.mubr.bf16.mxu0 0
        %1352 = vmatmul.mubr.bf16.gmra.mrb[0].mxu0 %v1247
        %v1353 = vpop.f32.mrb[0].mxu0
        %v1354 = vadd.f32 %v1269, %v1353
        %v1355 = vpop.f32.mrb[0].mxu0
        %v1356 = vpop.f32.mrb[0].mxu0
        %v1357 = vpop.f32.mrb[0].mxu0
        %1358 = vdwg.mxu0
        %v1359 = vld [vmem:[%s991] sm:$0xf]
        %v1360 = vld [vmem:[%s991 + $0x4] sm:$0xf]
        %v1361 = vld [vmem:[%s991 + $0x8] sm:$0xf]
        %v1362 = vld [vmem:[%s991 + $0xc] sm:$0xf]
        %v1363 = vld [vmem:[%s991 + $0x10] sm:$0xf]
        %v1364 = vld [vmem:[%s991 + $0x14] sm:$0xf]
        %v1365 = vld [vmem:[%s991 + $0x18] sm:$0xf]
        %v1366 = vld [vmem:[%s991 + $0x1c] sm:$0xf]
        %v1367 = vld [vmem:[%s991 + $0x20] sm:$0xf]
        %v1368 = vld [vmem:[%s991 + $0x24] sm:$0xf]
        %v1369 = vld [vmem:[%s991 + $0x28] sm:$0xf]
        %v1370 = vld [vmem:[%s991 + $0x2c] sm:$0xf]
        %v1371 = vld [vmem:[%s991 + $0x30] sm:$0xf]
        %v1372 = vld [vmem:[%s991 + $0x34] sm:$0xf]
        %v1373 = vld [vmem:[%s991 + $0x38] sm:$0xf]
        %v1374 = vld [vmem:[%s991 + $0x3c] sm:$0xf]
        %v1375 = vld [vmem:[%s999] sm:$0x1]
        %v1377 = vlaneseq
        %v1378 = vshrl.u32 %v1377, 7
        %v1379 = vsub.s32 0, %v1378
        %v1380 = vrot.slane %v1375, %v1379
        %v1398 = vunpack.c.l.b16 %v1359
        %v1399 = vunpack.c.l.b16 %v1360
        %v1400 = vunpack.c.l.b16 %v1361
        %v1401 = vunpack.c.l.b16 %v1362
        %v1402 = vunpack.c.l.b16 %v1363
        %v1403 = vunpack.c.l.b16 %v1364
        %v1404 = vunpack.c.l.b16 %v1365
        %v1405 = vunpack.c.l.b16 %v1366
        %v1406 = vunpack.c.l.b16 %v1367
        %v1407 = vunpack.c.l.b16 %v1368
        %v1408 = vunpack.c.l.b16 %v1369
        %v1409 = vunpack.c.l.b16 %v1370
        %v1410 = vunpack.c.l.b16 %v1371
        %v1411 = vunpack.c.l.b16 %v1372
        %v1412 = vunpack.c.l.b16 %v1373
        %v1413 = vunpack.c.l.b16 %v1374
        %v1414 = vpack.c.b16 %v1399, %v1398
        %v1415 = vpack.c.b16 %v1401, %v1400
        %v1416 = vpack.c.b16 %v1403, %v1402
        %v1417 = vpack.c.b16 %v1405, %v1404
        %v1418 = vpack.c.b16 %v1407, %v1406
        %v1419 = vpack.c.b16 %v1409, %v1408
        %v1420 = vpack.c.b16 %v1411, %v1410
        %v1421 = vpack.c.b16 %v1413, %v1412
        %1430 = vmatprep.subr.bf16.mxu0 0
        %1431 = vmatpush1.bf16.msra.mxu0 %v1414
        %1432 = vmatprep.subr.bf16.mxu0 0
        %1433 = vmatpush1.bf16.msra.mxu0 %v1415
        %1434 = vmatprep.subr.bf16.mxu0 0
        %1435 = vmatpush1.bf16.msra.mxu0 %v1416
        %1436 = vmatprep.subr.bf16.mxu0 0
        %1437 = vmatpush1.bf16.msra.mxu0 %v1417
        %1438 = vmatprep.subr.bf16.mxu0 0
        %1439 = vmatpush1.bf16.msra.mxu0 %v1418
        %1440 = vmatprep.subr.bf16.mxu0 0
        %1441 = vmatpush1.bf16.msra.mxu0 %v1419
        %1442 = vmatprep.subr.bf16.mxu0 0
        %1443 = vmatpush1.bf16.msra.mxu0 %v1420
        %1444 = vmatprep.subr.bf16.mxu0 0
        %1445 = vmatpush1.bf16.msra.mxu0 %v1421
        %1446 = vmatprep.subr.bf16.mxu0 0
        %1447 = vmatpush1.bf16.msra.mxu0 0
        %1448 = vmatprep.subr.bf16.mxu0 0
        %1449 = vmatpush1.bf16.msra.mxu0 0
        %1450 = vmatprep.subr.bf16.mxu0 0
        %1451 = vmatpush1.bf16.msra.mxu0 0
        %1452 = vmatprep.subr.bf16.mxu0 0
        %1453 = vmatpush1.bf16.msra.mxu0 0
        %1454 = vmatprep.subr.bf16.mxu0 0
        %1455 = vmatpush1.bf16.msra.mxu0 0
        %1456 = vmatprep.subr.bf16.mxu0 0
        %1457 = vmatpush1.bf16.msra.mxu0 0
        %1458 = vmatprep.subr.bf16.mxu0 0
        %1459 = vmatpush1.bf16.msra.mxu0 0
        %1460 = vmatprep.subr.bf16.mxu0 0
        %1461 = vmatpush1.bf16.msra.mxu0 0
        %1462 = vmatprep.mubr.bf16.mxu0 0
        %1463 = vmatmul.mubr.bf16.gmra.mrb[0].mxu0 %v1247
        %v1464 = vpop.f32.mrb[0].mxu0
        %v1465 = vadd.f32 %v1380, %v1464
        %v1466 = vpop.f32.mrb[0].mxu0
        %v1467 = vpop.f32.mrb[0].mxu0
        %v1468 = vpop.f32.mrb[0].mxu0
        %1469 = vdwg.mxu0
        %v1470 = vld [vmem:[%s1008] sm:$0xf]
        %v1471 = vld [vmem:[%s1008 + $0x4] sm:$0xf]
        %v1472 = vld [vmem:[%s1008 + $0x8] sm:$0xf]
        %v1473 = vld [vmem:[%s1008 + $0xc] sm:$0xf]
        %v1474 = vld [vmem:[%s1008 + $0x10] sm:$0xf]
        %v1475 = vld [vmem:[%s1008 + $0x14] sm:$0xf]
        %v1476 = vld [vmem:[%s1008 + $0x18] sm:$0xf]
        %v1477 = vld [vmem:[%s1008 + $0x1c] sm:$0xf]
        %v1478 = vld [vmem:[%s1008 + $0x20] sm:$0xf]
        %v1479 = vld [vmem:[%s1008 + $0x24] sm:$0xf]
        %v1480 = vld [vmem:[%s1008 + $0x28] sm:$0xf]
        %v1481 = vld [vmem:[%s1008 + $0x2c] sm:$0xf]
        %v1482 = vld [vmem:[%s1008 + $0x30] sm:$0xf]
        %v1483 = vld [vmem:[%s1008 + $0x34] sm:$0xf]
        %v1484 = vld [vmem:[%s1008 + $0x38] sm:$0xf]
        %v1485 = vld [vmem:[%s1008 + $0x3c] sm:$0xf]
        %v1486 = vld [vmem:[%s1016] sm:$0x1]
        %v1488 = vlaneseq
        %v1489 = vshrl.u32 %v1488, 7
        %v1490 = vsub.s32 0, %v1489
        %v1491 = vrot.slane %v1486, %v1490
        %v1509 = vunpack.c.l.b16 %v1470
        %v1510 = vunpack.c.l.b16 %v1471
        %v1511 = vunpack.c.l.b16 %v1472
        %v1512 = vunpack.c.l.b16 %v1473
        %v1513 = vunpack.c.l.b16 %v1474
        %v1514 = vunpack.c.l.b16 %v1475
        %v1515 = vunpack.c.l.b16 %v1476
        %v1516 = vunpack.c.l.b16 %v1477
        %v1517 = vunpack.c.l.b16 %v1478
        %v1518 = vunpack.c.l.b16 %v1479
        %v1519 = vunpack.c.l.b16 %v1480
        %v1520 = vunpack.c.l.b16 %v1481
        %v1521 = vunpack.c.l.b16 %v1482
        %v1522 = vunpack.c.l.b16 %v1483
        %v1523 = vunpack.c.l.b16 %v1484
        %v1524 = vunpack.c.l.b16 %v1485
        %v1525 = vpack.c.b16 %v1510, %v1509
        %v1526 = vpack.c.b16 %v1512, %v1511
        %v1527 = vpack.c.b16 %v1514, %v1513
        %v1528 = vpack.c.b16 %v1516, %v1515
        %v1529 = vpack.c.b16 %v1518, %v1517
        %v1530 = vpack.c.b16 %v1520, %v1519
        %v1531 = vpack.c.b16 %v1522, %v1521
        %v1532 = vpack.c.b16 %v1524, %v1523
        %1541 = vmatprep.subr.bf16.mxu0 0
        %1542 = vmatpush1.bf16.msra.mxu0 %v1525
        %1543 = vmatprep.subr.bf16.mxu0 0
        %1544 = vmatpush1.bf16.msra.mxu0 %v1526
        %1545 = vmatprep.subr.bf16.mxu0 0
        %1546 = vmatpush1.bf16.msra.mxu0 %v1527
        %1547 = vmatprep.subr.bf16.mxu0 0
        %1548 = vmatpush1.bf16.msra.mxu0 %v1528
        %1549 = vmatprep.subr.bf16.mxu0 0
        %1550 = vmatpush1.bf16.msra.mxu0 %v1529
        %1551 = vmatprep.subr.bf16.mxu0 0
        %1552 = vmatpush1.bf16.msra.mxu0 %v1530
        %1553 = vmatprep.subr.bf16.mxu0 0
        %1554 = vmatpush1.bf16.msra.mxu0 %v1531
        %1555 = vmatprep.subr.bf16.mxu0 0
        %1556 = vmatpush1.bf16.msra.mxu0 %v1532
        %1557 = vmatprep.subr.bf16.mxu0 0
        %1558 = vmatpush1.bf16.msra.mxu0 0
        %1559 = vmatprep.subr.bf16.mxu0 0
        %1560 = vmatpush1.bf16.msra.mxu0 0
        %1561 = vmatprep.subr.bf16.mxu0 0
        %1562 = vmatpush1.bf16.msra.mxu0 0
        %1563 = vmatprep.subr.bf16.mxu0 0
        %1564 = vmatpush1.bf16.msra.mxu0 0
        %1565 = vmatprep.subr.bf16.mxu0 0
        %1566 = vmatpush1.bf16.msra.mxu0 0
        %1567 = vmatprep.subr.bf16.mxu0 0
        %1568 = vmatpush1.bf16.msra.mxu0 0
        %1569 = vmatprep.subr.bf16.mxu0 0
        %1570 = vmatpush1.bf16.msra.mxu0 0
        %1571 = vmatprep.subr.bf16.mxu0 0
        %1572 = vmatpush1.bf16.msra.mxu0 0
        %1573 = vmatprep.mubr.bf16.mxu0 0
        %1574 = vmatmul.mubr.bf16.gmra.mrb[0].mxu0 %v1247
        %v1575 = vpop.f32.mrb[0].mxu0
        %v1576 = vadd.f32 %v1491, %v1575
        %v1577 = vpop.f32.mrb[0].mxu0
        %v1578 = vpop.f32.mrb[0].mxu0
        %v1579 = vpop.f32.mrb[0].mxu0
        %1580 = vdwg.mxu0
        %1582 = vrot.lane.b32.xlu0 %v1354, 96
        %v1583 = vpop.permute.xlu0 %1582
        %1585 = vrot.lane.b32.xlu0 %v1354, 64
        %v1586 = vpop.permute.xlu0 %1585
        %1588 = vrot.lane.b32.xlu0 %v1354, 32
        %v1589 = vpop.permute.xlu0 %1588
        %v1591 = vcombine.low %v1354, %v1586
        %v1592 = vcombine.high %v1354, %v1586
        %v1594 = vunpack.c.l.s4 1983009808
        %v1595 = vunpack.c.0.s8 %v1594
        %v1596 = vlaneseq
        %v1597 = vshrl.u32 %v1596, 7
        %v1598 = vsub.s32 %v1595, %v1597
        %v1599 = vrot.slane %v1591, %v1598
        %v1601 = vunpack.c.l.s4 1983009808
        %v1602 = vunpack.c.0.s8 %v1601
        %v1603 = vlaneseq
        %v1604 = vshrl.u32 %v1603, 7
        %v1605 = vsub.s32 %v1602, %v1604
        %v1606 = vrot.slane %v1592, %v1605
        %v1607 = vcombine.low %v1583, %v1589
        %v1608 = vcombine.high %v1583, %v1589
        %v1610 = vunpack.c.l.s4 1983009808
        %v1611 = vunpack.c.0.s8 %v1610
        %v1612 = vlaneseq
        %v1613 = vshrl.u32 %v1612, 7
        %v1614 = vsub.s32 %v1611, %v1613
        %v1615 = vrot.slane %v1607, %v1614
        %v1617 = vunpack.c.l.s4 1983009808
        %v1618 = vunpack.c.0.s8 %v1617
        %v1619 = vlaneseq
        %v1620 = vshrl.u32 %v1619, 7
        %v1621 = vsub.s32 %v1618, %v1620
        %v1622 = vrot.slane %v1608, %v1621
        %v1623 = vcombine.low %v1599, %v1615
        %v1624 = vcombine.high %v1599, %v1615
        %v1626 = vunpack.c.l.s4 1934713408
        %v1627 = vunpack.c.0.s8 %v1626
        %v1628 = vlaneseq
        %v1629 = vshrl.u32 %v1628, 7
        %v1630 = vsub.s32 %v1627, %v1629
        %v1631 = vrot.slane %v1623, %v1630
        %v1633 = vunpack.c.l.s4 1934713408
        %v1634 = vunpack.c.0.s8 %v1633
        %v1635 = vlaneseq
        %v1636 = vshrl.u32 %v1635, 7
        %v1637 = vsub.s32 %v1634, %v1636
        %v1638 = vrot.slane %v1624, %v1637
        %v1639 = vcombine.low %v1606, %v1622
        %v1640 = vcombine.high %v1606, %v1622
        %v1642 = vunpack.c.l.s4 1934713408
        %v1643 = vunpack.c.0.s8 %v1642
        %v1644 = vlaneseq
        %v1645 = vshrl.u32 %v1644, 7
        %v1646 = vsub.s32 %v1643, %v1645
        %v1647 = vrot.slane %v1639, %v1646
        %v1649 = vunpack.c.l.s4 1934713408
        %v1650 = vunpack.c.0.s8 %v1649
        %v1651 = vlaneseq
        %v1652 = vshrl.u32 %v1651, 7
        %v1653 = vsub.s32 %v1650, %v1652
        %v1654 = vrot.slane %v1640, %v1653
        %v1655 = vcombine.high %v1631, 0.0
        %v1656 = vcombine.high %v1638, 0.0
        %v1657 = vcombine.high %v1647, 0.0
        %v1658 = vcombine.high %v1654, 0.0
        %v1659 = vcombine.low %v1631, %v1638
        %v1661 = vunpack.c.l.s4 1983009808
        %v1662 = vunpack.c.0.s8 %v1661
        %v1663 = vlaneseq
        %v1664 = vshrl.u32 %v1663, 7
        %v1665 = vsub.s32 %v1662, %v1664
        %v1666 = vrot.slane %v1659, %v1665
        %v1667 = vcombine.low %v1655, %v1656
        %v1669 = vunpack.c.l.s4 1983009808
        %v1670 = vunpack.c.0.s8 %v1669
        %v1671 = vlaneseq
        %v1672 = vshrl.u32 %v1671, 7
        %v1673 = vsub.s32 %v1670, %v1672
        %v1674 = vrot.slane %v1667, %v1673
        %v1675 = vcombine.low %v1647, %v1654
        %v1677 = vunpack.c.l.s4 1983009808
        %v1678 = vunpack.c.0.s8 %v1677
        %v1679 = vlaneseq
        %v1680 = vshrl.u32 %v1679, 7
        %v1681 = vsub.s32 %v1678, %v1680
        %v1682 = vrot.slane %v1675, %v1681
        %v1683 = vcombine.low %v1657, %v1658
        %v1685 = vunpack.c.l.s4 1983009808
        %v1686 = vunpack.c.0.s8 %v1685
        %v1687 = vlaneseq
        %v1688 = vshrl.u32 %v1687, 7
        %v1689 = vsub.s32 %v1686, %v1688
        %v1690 = vrot.slane %v1683, %v1689
        %v1691 = vcombine.low %v1666, %v1674
        %v1692 = vcombine.high %v1666, %v1674
        %v1694 = vunpack.c.l.s4 1934713408
        %v1695 = vunpack.c.0.s8 %v1694
        %v1696 = vlaneseq
        %v1697 = vshrl.u32 %v1696, 7
        %v1698 = vsub.s32 %v1695, %v1697
        %v1699 = vrot.slane %v1691, %v1698
        %v1701 = vunpack.c.l.s4 1934713408
        %v1702 = vunpack.c.0.s8 %v1701
        %v1703 = vlaneseq
        %v1704 = vshrl.u32 %v1703, 7
        %v1705 = vsub.s32 %v1702, %v1704
        %v1706 = vrot.slane %v1692, %v1705
        %v1707 = vcombine.low %v1682, %v1690
        %v1708 = vcombine.high %v1682, %v1690
        %v1710 = vunpack.c.l.s4 1934713408
        %v1711 = vunpack.c.0.s8 %v1710
        %v1712 = vlaneseq
        %v1713 = vshrl.u32 %v1712, 7
        %v1714 = vsub.s32 %v1711, %v1713
        %v1715 = vrot.slane %v1707, %v1714
        %v1717 = vunpack.c.l.s4 1934713408
        %v1718 = vunpack.c.0.s8 %v1717
        %v1719 = vlaneseq
        %v1720 = vshrl.u32 %v1719, 7
        %v1721 = vsub.s32 %v1718, %v1720
        %v1722 = vrot.slane %v1708, %v1721
        %v1723 = vcombine.low %v1699, %v1715
        %v1724 = vcombine.high %v1699, %v1715
        %v1725 = vcombine.low %v1706, %v1722
        %v1726 = vcombine.high %v1706, %v1722
        %v1727 = vpack.c.bf16 %v1723, %v1723
        %v1728 = vpack.c.bf16 %v1724, %v1724
        %v1729 = vpack.c.bf16 %v1725, %v1725
        %v1730 = vpack.c.bf16 %v1726, %v1726
        %1732 = vrot.lane.b32.xlu0 %v1465, 96
        %v1733 = vpop.permute.xlu0 %1732
        %1735 = vrot.lane.b32.xlu0 %v1465, 64
        %v1736 = vpop.permute.xlu0 %1735
        %1738 = vrot.lane.b32.xlu0 %v1465, 32
        %v1739 = vpop.permute.xlu0 %1738
        %v1741 = vcombine.low %v1465, %v1736
        %v1742 = vcombine.high %v1465, %v1736
        %v1744 = vunpack.c.l.s4 1983009808
        %v1745 = vunpack.c.0.s8 %v1744
        %v1746 = vlaneseq
        %v1747 = vshrl.u32 %v1746, 7
        %v1748 = vsub.s32 %v1745, %v1747
        %v1749 = vrot.slane %v1741, %v1748
        %v1751 = vunpack.c.l.s4 1983009808
        %v1752 = vunpack.c.0.s8 %v1751
        %v1753 = vlaneseq
        %v1754 = vshrl.u32 %v1753, 7
        %v1755 = vsub.s32 %v1752, %v1754
        %v1756 = vrot.slane %v1742, %v1755
        %v1757 = vcombine.low %v1733, %v1739
        %v1758 = vcombine.high %v1733, %v1739
        %v1760 = vunpack.c.l.s4 1983009808
        %v1761 = vunpack.c.0.s8 %v1760
        %v1762 = vlaneseq
        %v1763 = vshrl.u32 %v1762, 7
        %v1764 = vsub.s32 %v1761, %v1763
        %v1765 = vrot.slane %v1757, %v1764
        %v1767 = vunpack.c.l.s4 1983009808
        %v1768 = vunpack.c.0.s8 %v1767
        %v1769 = vlaneseq
        %v1770 = vshrl.u32 %v1769, 7
        %v1771 = vsub.s32 %v1768, %v1770
        %v1772 = vrot.slane %v1758, %v1771
        %v1773 = vcombine.low %v1749, %v1765
        %v1774 = vcombine.high %v1749, %v1765
        %v1776 = vunpack.c.l.s4 1934713408
        %v1777 = vunpack.c.0.s8 %v1776
        %v1778 = vlaneseq
        %v1779 = vshrl.u32 %v1778, 7
        %v1780 = vsub.s32 %v1777, %v1779
        %v1781 = vrot.slane %v1773, %v1780
        %v1783 = vunpack.c.l.s4 1934713408
        %v1784 = vunpack.c.0.s8 %v1783
        %v1785 = vlaneseq
        %v1786 = vshrl.u32 %v1785, 7
        %v1787 = vsub.s32 %v1784, %v1786
        %v1788 = vrot.slane %v1774, %v1787
        %v1789 = vcombine.low %v1756, %v1772
        %v1790 = vcombine.high %v1756, %v1772
        %v1792 = vunpack.c.l.s4 1934713408
        %v1793 = vunpack.c.0.s8 %v1792
        %v1794 = vlaneseq
        %v1795 = vshrl.u32 %v1794, 7
        %v1796 = vsub.s32 %v1793, %v1795
        %v1797 = vrot.slane %v1789, %v1796
        %v1799 = vunpack.c.l.s4 1934713408
        %v1800 = vunpack.c.0.s8 %v1799
        %v1801 = vlaneseq
        %v1802 = vshrl.u32 %v1801, 7
        %v1803 = vsub.s32 %v1800, %v1802
        %v1804 = vrot.slane %v1790, %v1803
        %v1805 = vcombine.high %v1781, 0.0
        %v1806 = vcombine.high %v1788, 0.0
        %v1807 = vcombine.high %v1797, 0.0
        %v1808 = vcombine.high %v1804, 0.0
        %v1809 = vcombine.low %v1781, %v1788
        %v1811 = vunpack.c.l.s4 1983009808
        %v1812 = vunpack.c.0.s8 %v1811
        %v1813 = vlaneseq
        %v1814 = vshrl.u32 %v1813, 7
        %v1815 = vsub.s32 %v1812, %v1814
        %v1816 = vrot.slane %v1809, %v1815
        %v1817 = vcombine.low %v1805, %v1806
        %v1819 = vunpack.c.l.s4 1983009808
        %v1820 = vunpack.c.0.s8 %v1819
        %v1821 = vlaneseq
        %v1822 = vshrl.u32 %v1821, 7
        %v1823 = vsub.s32 %v1820, %v1822
        %v1824 = vrot.slane %v1817, %v1823
        %v1825 = vcombine.low %v1797, %v1804
        %v1827 = vunpack.c.l.s4 1983009808
        %v1828 = vunpack.c.0.s8 %v1827
        %v1829 = vlaneseq
        %v1830 = vshrl.u32 %v1829, 7
        %v1831 = vsub.s32 %v1828, %v1830
        %v1832 = vrot.slane %v1825, %v1831
        %v1833 = vcombine.low %v1807, %v1808
        %v1835 = vunpack.c.l.s4 1983009808
        %v1836 = vunpack.c.0.s8 %v1835
        %v1837 = vlaneseq
        %v1838 = vshrl.u32 %v1837, 7
        %v1839 = vsub.s32 %v1836, %v1838
        %v1840 = vrot.slane %v1833, %v1839
        %v1841 = vcombine.low %v1816, %v1824
        %v1842 = vcombine.high %v1816, %v1824
        %v1844 = vunpack.c.l.s4 1934713408
        %v1845 = vunpack.c.0.s8 %v1844
        %v1846 = vlaneseq
        %v1847 = vshrl.u32 %v1846, 7
        %v1848 = vsub.s32 %v1845, %v1847
        %v1849 = vrot.slane %v1841, %v1848
        %v1851 = vunpack.c.l.s4 1934713408
        %v1852 = vunpack.c.0.s8 %v1851
        %v1853 = vlaneseq
        %v1854 = vshrl.u32 %v1853, 7
        %v1855 = vsub.s32 %v1852, %v1854
        %v1856 = vrot.slane %v1842, %v1855
        %v1857 = vcombine.low %v1832, %v1840
        %v1858 = vcombine.high %v1832, %v1840
        %v1860 = vunpack.c.l.s4 1934713408
        %v1861 = vunpack.c.0.s8 %v1860
        %v1862 = vlaneseq
        %v1863 = vshrl.u32 %v1862, 7
        %v1864 = vsub.s32 %v1861, %v1863
        %v1865 = vrot.slane %v1857, %v1864
        %v1867 = vunpack.c.l.s4 1934713408
        %v1868 = vunpack.c.0.s8 %v1867
        %v1869 = vlaneseq
        %v1870 = vshrl.u32 %v1869, 7
        %v1871 = vsub.s32 %v1868, %v1870
        %v1872 = vrot.slane %v1858, %v1871
        %v1873 = vcombine.low %v1849, %v1865
        %v1874 = vcombine.high %v1849, %v1865
        %v1875 = vcombine.low %v1856, %v1872
        %v1876 = vcombine.high %v1856, %v1872
        %v1877 = vpack.c.bf16 %v1873, %v1873
        %v1878 = vpack.c.bf16 %v1874, %v1874
        %v1879 = vpack.c.bf16 %v1875, %v1875
        %v1880 = vpack.c.bf16 %v1876, %v1876
        %1882 = vrot.lane.b32.xlu0 %v1576, 96
        %v1883 = vpop.permute.xlu0 %1882
        %1885 = vrot.lane.b32.xlu0 %v1576, 64
        %v1886 = vpop.permute.xlu0 %1885
        %1888 = vrot.lane.b32.xlu0 %v1576, 32
        %v1889 = vpop.permute.xlu0 %1888
        %v1891 = vcombine.low %v1576, %v1886
        %v1892 = vcombine.high %v1576, %v1886
        %v1894 = vunpack.c.l.s4 1983009808
        %v1895 = vunpack.c.0.s8 %v1894
        %v1896 = vlaneseq
        %v1897 = vshrl.u32 %v1896, 7
        %v1898 = vsub.s32 %v1895, %v1897
        %v1899 = vrot.slane %v1891, %v1898
        %v1901 = vunpack.c.l.s4 1983009808
        %v1902 = vunpack.c.0.s8 %v1901
        %v1903 = vlaneseq
        %v1904 = vshrl.u32 %v1903, 7
        %v1905 = vsub.s32 %v1902, %v1904
        %v1906 = vrot.slane %v1892, %v1905
        %v1907 = vcombine.low %v1883, %v1889
        %v1908 = vcombine.high %v1883, %v1889
        %v1910 = vunpack.c.l.s4 1983009808
        %v1911 = vunpack.c.0.s8 %v1910
        %v1912 = vlaneseq
        %v1913 = vshrl.u32 %v1912, 7
        %v1914 = vsub.s32 %v1911, %v1913
        %v1915 = vrot.slane %v1907, %v1914
        %v1917 = vunpack.c.l.s4 1983009808
        %v1918 = vunpack.c.0.s8 %v1917
        %v1919 = vlaneseq
        %v1920 = vshrl.u32 %v1919, 7
        %v1921 = vsub.s32 %v1918, %v1920
        %v1922 = vrot.slane %v1908, %v1921
        %v1923 = vcombine.low %v1899, %v1915
        %v1924 = vcombine.high %v1899, %v1915
        %v1926 = vunpack.c.l.s4 1934713408
        %v1927 = vunpack.c.0.s8 %v1926
        %v1928 = vlaneseq
        %v1929 = vshrl.u32 %v1928, 7
        %v1930 = vsub.s32 %v1927, %v1929
        %v1931 = vrot.slane %v1923, %v1930
        %v1933 = vunpack.c.l.s4 1934713408
        %v1934 = vunpack.c.0.s8 %v1933
        %v1935 = vlaneseq
        %v1936 = vshrl.u32 %v1935, 7
        %v1937 = vsub.s32 %v1934, %v1936
        %v1938 = vrot.slane %v1924, %v1937
        %v1939 = vcombine.low %v1906, %v1922
        %v1940 = vcombine.high %v1906, %v1922
        %v1942 = vunpack.c.l.s4 1934713408
        %v1943 = vunpack.c.0.s8 %v1942
        %v1944 = vlaneseq
        %v1945 = vshrl.u32 %v1944, 7
        %v1946 = vsub.s32 %v1943, %v1945
        %v1947 = vrot.slane %v1939, %v1946
        %v1949 = vunpack.c.l.s4 1934713408
        %v1950 = vunpack.c.0.s8 %v1949
        %v1951 = vlaneseq
        %v1952 = vshrl.u32 %v1951, 7
        %v1953 = vsub.s32 %v1950, %v1952
        %v1954 = vrot.slane %v1940, %v1953
        %v1955 = vcombine.high %v1931, 0.0
        %v1956 = vcombine.high %v1938, 0.0
        %v1957 = vcombine.high %v1947, 0.0
        %v1958 = vcombine.high %v1954, 0.0
        %v1959 = vcombine.low %v1931, %v1938
        %v1961 = vunpack.c.l.s4 1983009808
        %v1962 = vunpack.c.0.s8 %v1961
        %v1963 = vlaneseq
        %v1964 = vshrl.u32 %v1963, 7
        %v1965 = vsub.s32 %v1962, %v1964
        %v1966 = vrot.slane %v1959, %v1965
        %v1967 = vcombine.low %v1955, %v1956
        %v1969 = vunpack.c.l.s4 1983009808
        %v1970 = vunpack.c.0.s8 %v1969
        %v1971 = vlaneseq
        %v1972 = vshrl.u32 %v1971, 7
        %v1973 = vsub.s32 %v1970, %v1972
        %v1974 = vrot.slane %v1967, %v1973
        %v1975 = vcombine.low %v1947, %v1954
        %v1977 = vunpack.c.l.s4 1983009808
        %v1978 = vunpack.c.0.s8 %v1977
        %v1979 = vlaneseq
        %v1980 = vshrl.u32 %v1979, 7
        %v1981 = vsub.s32 %v1978, %v1980
        %v1982 = vrot.slane %v1975, %v1981
        %v1983 = vcombine.low %v1957, %v1958
        %v1985 = vunpack.c.l.s4 1983009808
        %v1986 = vunpack.c.0.s8 %v1985
        %v1987 = vlaneseq
        %v1988 = vshrl.u32 %v1987, 7
        %v1989 = vsub.s32 %v1986, %v1988
        %v1990 = vrot.slane %v1983, %v1989
        %v1991 = vcombine.low %v1966, %v1974
        %v1992 = vcombine.high %v1966, %v1974
        %v1994 = vunpack.c.l.s4 1934713408
        %v1995 = vunpack.c.0.s8 %v1994
        %v1996 = vlaneseq
        %v1997 = vshrl.u32 %v1996, 7
        %v1998 = vsub.s32 %v1995, %v1997
        %v1999 = vrot.slane %v1991, %v1998
        %v2001 = vunpack.c.l.s4 1934713408
        %v2002 = vunpack.c.0.s8 %v2001
        %v2003 = vlaneseq
        %v2004 = vshrl.u32 %v2003, 7
        %v2005 = vsub.s32 %v2002, %v2004
        %v2006 = vrot.slane %v1992, %v2005
        %v2007 = vcombine.low %v1982, %v1990
        %v2008 = vcombine.high %v1982, %v1990
        %v2010 = vunpack.c.l.s4 1934713408
        %v2011 = vunpack.c.0.s8 %v2010
        %v2012 = vlaneseq
        %v2013 = vshrl.u32 %v2012, 7
        %v2014 = vsub.s32 %v2011, %v2013
        %v2015 = vrot.slane %v2007, %v2014
        %v2017 = vunpack.c.l.s4 1934713408
        %v2018 = vunpack.c.0.s8 %v2017
        %v2019 = vlaneseq
        %v2020 = vshrl.u32 %v2019, 7
        %v2021 = vsub.s32 %v2018, %v2020
        %v2022 = vrot.slane %v2008, %v2021
        %v2023 = vcombine.low %v1999, %v2015
        %v2024 = vcombine.high %v1999, %v2015
        %v2025 = vcombine.low %v2006, %v2022
        %v2026 = vcombine.high %v2006, %v2022
        %v2027 = vpack.c.bf16 %v2023, %v2023
        %v2028 = vpack.c.bf16 %v2024, %v2024
        %v2029 = vpack.c.bf16 %v2025, %v2025
        %v2030 = vpack.c.bf16 %v2026, %v2026
        %v2031 = vld [vmem:[%s965] sm:$0xff]
        %vm2032 = vcmask 261120
        %v2034 = vsel %vm2032, %v1727, 0
        %v2037 = vsel %vm2032, %v1877, 0
        %2039 = vmatprep.subr.bf16.mxu0 0
        %2040 = vmatpush1.bf16.xpose.msra.mxu0 %v2037
        %2041 = vmatprep.subr.bf16.mxu0 0
        %2042 = vmatpush1.bf16.xpose.msra.mxu0 0
        %2043 = vmatprep.subr.bf16.mxu0 0
        %2044 = vmatpush1.bf16.xpose.msra.mxu0 0
        %2045 = vmatprep.subr.bf16.mxu0 0
        %2046 = vmatpush1.bf16.xpose.msra.mxu0 0
        %2047 = vmatprep.subr.bf16.mxu0 0
        %2048 = vmatpush1.bf16.xpose.msra.mxu0 0
        %2049 = vmatprep.subr.bf16.mxu0 0
        %2050 = vmatpush1.bf16.xpose.msra.mxu0 0
        %2051 = vmatprep.subr.bf16.mxu0 0
        %2052 = vmatpush1.bf16.xpose.msra.mxu0 0
        %2053 = vmatprep.subr.bf16.mxu0 0
        %2054 = vmatpush1.bf16.xpose.msra.mxu0 0
        %2055 = vmatprep.subr.bf16.mxu0 0
        %2056 = vmatpush1.bf16.xpose.msra.mxu0 0
        %2057 = vmatprep.subr.bf16.mxu0 0
        %2058 = vmatpush1.bf16.xpose.msra.mxu0 0
        %2059 = vmatprep.subr.bf16.mxu0 0
        %2060 = vmatpush1.bf16.xpose.msra.mxu0 0
        %2061 = vmatprep.subr.bf16.mxu0 0
        %2062 = vmatpush1.bf16.xpose.msra.mxu0 0
        %2063 = vmatprep.subr.bf16.mxu0 0
        %2064 = vmatpush1.bf16.xpose.msra.mxu0 0
        %2065 = vmatprep.subr.bf16.mxu0 0
        %2066 = vmatpush1.bf16.xpose.msra.mxu0 0
        %2067 = vmatprep.subr.bf16.mxu0 0
        %2068 = vmatpush1.bf16.xpose.msra.mxu0 0
        %2069 = vmatprep.subr.bf16.mxu0 0
        %2070 = vmatpush1.bf16.xpose.msra.mxu0 0
        %2071 = vmatprep.mubr.bf16.mxu0 0
        %2072 = vmatmul.mubr.bf16.gmra.mrb[0].mxu0 %v2034
        %v2073 = vpop.f32.mrb[0].mxu0
        %v2074 = vadd.f32 %v2031, %v2073
        %v2075 = vpop.f32.mrb[0].mxu0
        %v2076 = vpop.f32.mrb[0].mxu0
        %v2077 = vpop.f32.mrb[0].mxu0
        %2078 = vdwg.mxu0
        %v2080 = vsel %vm2032, %v1728, 0
        %v2083 = vsel %vm2032, %v1878, 0
        %2085 = vmatprep.subr.bf16.mxu0 0
        %2086 = vmatpush1.bf16.xpose.msra.mxu0 %v2083
        %2087 = vmatprep.subr.bf16.mxu0 0
        %2088 = vmatpush1.bf16.xpose.msra.mxu0 0
        %2089 = vmatprep.subr.bf16.mxu0 0
        %2090 = vmatpush1.bf16.xpose.msra.mxu0 0
        %2091 = vmatprep.subr.bf16.mxu0 0
        %2092 = vmatpush1.bf16.xpose.msra.mxu0 0
        %2093 = vmatprep.subr.bf16.mxu0 0
        %2094 = vmatpush1.bf16.xpose.msra.mxu0 0
        %2095 = vmatprep.subr.bf16.mxu0 0
        %2096 = vmatpush1.bf16.xpose.msra.mxu0 0
        %2097 = vmatprep.subr.bf16.mxu0 0
        %2098 = vmatpush1.bf16.xpose.msra.mxu0 0
        %2099 = vmatprep.subr.bf16.mxu0 0
        %2100 = vmatpush1.bf16.xpose.msra.mxu0 0
        %2101 = vmatprep.subr.bf16.mxu0 0
        %2102 = vmatpush1.bf16.xpose.msra.mxu0 0
        %2103 = vmatprep.subr.bf16.mxu0 0
        %2104 = vmatpush1.bf16.xpose.msra.mxu0 0
        %2105 = vmatprep.subr.bf16.mxu0 0
        %2106 = vmatpush1.bf16.xpose.msra.mxu0 0
        %2107 = vmatprep.subr.bf16.mxu0 0
        %2108 = vmatpush1.bf16.xpose.msra.mxu0 0
        %2109 = vmatprep.subr.bf16.mxu0 0
        %2110 = vmatpush1.bf16.xpose.msra.mxu0 0
        %2111 = vmatprep.subr.bf16.mxu0 0
        %2112 = vmatpush1.bf16.xpose.msra.mxu0 0
        %2113 = vmatprep.subr.bf16.mxu0 0
        %2114 = vmatpush1.bf16.xpose.msra.mxu0 0
        %2115 = vmatprep.subr.bf16.mxu0 0
        %2116 = vmatpush1.bf16.xpose.msra.mxu0 0
        %2117 = vmatprep.mubr.bf16.mxu0 0
        %2118 = vmatmul.mubr.bf16.gmra.mrb[0].mxu0 %v2080
        %v2119 = vpop.f32.mrb[0].mxu0
        %v2120 = vadd.f32 %v2031, %v2119
        %v2121 = vpop.f32.mrb[0].mxu0
        %v2122 = vpop.f32.mrb[0].mxu0
        %v2123 = vpop.f32.mrb[0].mxu0
        %2124 = vdwg.mxu0
        %v2126 = vsel %vm2032, %v1729, 0
        %v2129 = vsel %vm2032, %v1879, 0
        %2131 = vmatprep.subr.bf16.mxu0 0
        %2132 = vmatpush1.bf16.xpose.msra.mxu0 %v2129
        %2133 = vmatprep.subr.bf16.mxu0 0
        %2134 = vmatpush1.bf16.xpose.msra.mxu0 0
        %2135 = vmatprep.subr.bf16.mxu0 0
        %2136 = vmatpush1.bf16.xpose.msra.mxu0 0
        %2137 = vmatprep.subr.bf16.mxu0 0
        %2138 = vmatpush1.bf16.xpose.msra.mxu0 0
        %2139 = vmatprep.subr.bf16.mxu0 0
        %2140 = vmatpush1.bf16.xpose.msra.mxu0 0
        %2141 = vmatprep.subr.bf16.mxu0 0
        %2142 = vmatpush1.bf16.xpose.msra.mxu0 0
        %2143 = vmatprep.subr.bf16.mxu0 0
        %2144 = vmatpush1.bf16.xpose.msra.mxu0 0
        %2145 = vmatprep.subr.bf16.mxu0 0
        %2146 = vmatpush1.bf16.xpose.msra.mxu0 0
        %2147 = vmatprep.subr.bf16.mxu0 0
        %2148 = vmatpush1.bf16.xpose.msra.mxu0 0
        %2149 = vmatprep.subr.bf16.mxu0 0
        %2150 = vmatpush1.bf16.xpose.msra.mxu0 0
        %2151 = vmatprep.subr.bf16.mxu0 0
        %2152 = vmatpush1.bf16.xpose.msra.mxu0 0
        %2153 = vmatprep.subr.bf16.mxu0 0
        %2154 = vmatpush1.bf16.xpose.msra.mxu0 0
        %2155 = vmatprep.subr.bf16.mxu0 0
        %2156 = vmatpush1.bf16.xpose.msra.mxu0 0
        %2157 = vmatprep.subr.bf16.mxu0 0
        %2158 = vmatpush1.bf16.xpose.msra.mxu0 0
        %2159 = vmatprep.subr.bf16.mxu0 0
        %2160 = vmatpush1.bf16.xpose.msra.mxu0 0
        %2161 = vmatprep.subr.bf16.mxu0 0
        %2162 = vmatpush1.bf16.xpose.msra.mxu0 0
        %2163 = vmatprep.mubr.bf16.mxu0 0
        %2164 = vmatmul.mubr.bf16.gmra.mrb[0].mxu0 %v2126
        %v2165 = vpop.f32.mrb[0].mxu0
        %v2166 = vadd.f32 %v2031, %v2165
        %v2167 = vpop.f32.mrb[0].mxu0
        %v2168 = vpop.f32.mrb[0].mxu0
        %v2169 = vpop.f32.mrb[0].mxu0
        %2170 = vdwg.mxu0
        %v2172 = vsel %vm2032, %v1730, 0
        %v2175 = vsel %vm2032, %v1880, 0
        %2177 = vmatprep.subr.bf16.mxu0 0
        %2178 = vmatpush1.bf16.xpose.msra.mxu0 %v2175
        %2179 = vmatprep.subr.bf16.mxu0 0
        %2180 = vmatpush1.bf16.xpose.msra.mxu0 0
        %2181 = vmatprep.subr.bf16.mxu0 0
        %2182 = vmatpush1.bf16.xpose.msra.mxu0 0
        %2183 = vmatprep.subr.bf16.mxu0 0
        %2184 = vmatpush1.bf16.xpose.msra.mxu0 0
        %2185 = vmatprep.subr.bf16.mxu0 0
        %2186 = vmatpush1.bf16.xpose.msra.mxu0 0
        %2187 = vmatprep.subr.bf16.mxu0 0
        %2188 = vmatpush1.bf16.xpose.msra.mxu0 0
        %2189 = vmatprep.subr.bf16.mxu0 0
        %2190 = vmatpush1.bf16.xpose.msra.mxu0 0
        %2191 = vmatprep.subr.bf16.mxu0 0
        %2192 = vmatpush1.bf16.xpose.msra.mxu0 0
        %2193 = vmatprep.subr.bf16.mxu0 0
        %2194 = vmatpush1.bf16.xpose.msra.mxu0 0
        %2195 = vmatprep.subr.bf16.mxu0 0
        %2196 = vmatpush1.bf16.xpose.msra.mxu0 0
        %2197 = vmatprep.subr.bf16.mxu0 0
        %2198 = vmatpush1.bf16.xpose.msra.mxu0 0
        %2199 = vmatprep.subr.bf16.mxu0 0
        %2200 = vmatpush1.bf16.xpose.msra.mxu0 0
        %2201 = vmatprep.subr.bf16.mxu0 0
        %2202 = vmatpush1.bf16.xpose.msra.mxu0 0
        %2203 = vmatprep.subr.bf16.mxu0 0
        %2204 = vmatpush1.bf16.xpose.msra.mxu0 0
        %2205 = vmatprep.subr.bf16.mxu0 0
        %2206 = vmatpush1.bf16.xpose.msra.mxu0 0
        %2207 = vmatprep.subr.bf16.mxu0 0
        %2208 = vmatpush1.bf16.xpose.msra.mxu0 0
        %2209 = vmatprep.mubr.bf16.mxu0 0
        %2210 = vmatmul.mubr.bf16.gmra.mrb[0].mxu0 %v2172
        %v2211 = vpop.f32.mrb[0].mxu0
        %v2212 = vadd.f32 %v2031, %v2211
        %v2213 = vpop.f32.mrb[0].mxu0
        %v2214 = vpop.f32.mrb[0].mxu0
        %v2215 = vpop.f32.mrb[0].mxu0
        %2216 = vdwg.mxu0
        %vm2217 = vcmask 64512
        %v2218 = vsel %vm2217, %v2074, -inf
        %2219 = vmax.xlane.f32.xlu0 %v2218
        %v2220 = vpop.xlane.xlu0 %2219
        %v2221 = vsel %vm2217, %v2120, -inf
        %2222 = vmax.xlane.f32.xlu0 %v2221
        %v2223 = vpop.xlane.xlu0 %2222
        %v2224 = vsel %vm2217, %v2166, -inf
        %2225 = vmax.xlane.f32.xlu0 %v2224
        %v2226 = vpop.xlane.xlu0 %2225
        %v2227 = vsel %vm2217, %v2212, -inf
        %2228 = vmax.xlane.f32.xlu0 %v2227
        %v2229 = vpop.xlane.xlu0 %2228
        %v2230 = vsub.f32 %v2074, %v2220
        %v2231 = vsub.f32 %v2120, %v2223
        %v2232 = vsub.f32 %v2166, %v2226
        %v2233 = vsub.f32 %v2212, %v2229
        %v2234 = vmul.f32 %v2230, 1.442695
        %v2235 = vpow.pop %v2234
        %v2236 = vmul.f32 %v2231, 1.442695
        %v2237 = vpow.pop %v2236
        %v2238 = vmul.f32 %v2232, 1.442695
        %v2239 = vpow.pop %v2238
        %v2240 = vmul.f32 %v2233, 1.442695
        %v2241 = vpow.pop %v2240
        %v2242 = vsel %vm2217, %v2235, 0.0
        %2243 = vadd.xlane.f32.xlu0 %v2242
        %v2244 = vpop.xlane.xlu0 %2243
        %v2245 = vsel %vm2217, %v2237, 0.0
        %2246 = vadd.xlane.f32.xlu0 %v2245
        %v2247 = vpop.xlane.xlu0 %2246
        %v2248 = vsel %vm2217, %v2239, 0.0
        %2249 = vadd.xlane.f32.xlu0 %v2248
        %v2250 = vpop.xlane.xlu0 %2249
        %v2251 = vsel %vm2217, %v2241, 0.0
        %2252 = vadd.xlane.f32.xlu0 %v2251
        %v2253 = vpop.xlane.xlu0 %2252
        %v2254 = vrcp.pop %v2244
        %v2255 = vrcp.pop %v2247
        %v2256 = vrcp.pop %v2250
        %v2257 = vrcp.pop %v2253
        %v2258 = vmul.f32 %v2235, %v2254
        %v2259 = vmul.f32 %v2237, %v2255
        %v2260 = vmul.f32 %v2239, %v2256
        %v2261 = vmul.f32 %v2241, %v2257
        %v2262 = vsel %vm2217, %v2031, -inf
        %2263 = vmax.xlane.f32.xlu0 %v2262
        %v2264 = vpop.xlane.xlu0 %2263
        %vm2265 = vcmp.gt.f32.partialorder %v2264, -0.5
        %v2266 = vsel %vm2265, 1, 0
        %v2267 = vcvt.s32.f32 %v2266
        %v2268 = vmul.f32 %v2258, %v2267
        %v2269 = vmul.f32 %v2259, %v2267
        %v2270 = vmul.f32 %v2260, %v2267
        %v2271 = vmul.f32 %v2261, %v2267
        %v2272 = vpack.c.bf16 %v2268, %v2268
        %v2273 = vpack.c.bf16 %v2269, %v2269
        %v2274 = vpack.c.bf16 %v2270, %v2270
        %v2275 = vpack.c.bf16 %v2271, %v2271
        %v2277 = vsel %vm2217, %v2272, 0
        %vm2279 = vcmask 1043456
        %v2281 = vsel %vm2279, %v2027, 0
        %2283 = vmatprep.subr.bf16.mxu0 0
        %2284 = vmatpush1.bf16.msra.mxu0 %v2281
        %2285 = vmatprep.subr.bf16.mxu0 0
        %2286 = vmatpush1.bf16.msra.mxu0 0
        %2287 = vmatprep.subr.bf16.mxu0 0
        %2288 = vmatpush1.bf16.msra.mxu0 0
        %2289 = vmatprep.subr.bf16.mxu0 0
        %2290 = vmatpush1.bf16.msra.mxu0 0
        %2291 = vmatprep.subr.bf16.mxu0 0
        %2292 = vmatpush1.bf16.msra.mxu0 0
        %2293 = vmatprep.subr.bf16.mxu0 0
        %2294 = vmatpush1.bf16.msra.mxu0 0
        %2295 = vmatprep.subr.bf16.mxu0 0
        %2296 = vmatpush1.bf16.msra.mxu0 0
        %2297 = vmatprep.subr.bf16.mxu0 0
        %2298 = vmatpush1.bf16.msra.mxu0 0
        %2299 = vmatprep.subr.bf16.mxu0 0
        %2300 = vmatpush1.bf16.msra.mxu0 0
        %2301 = vmatprep.subr.bf16.mxu0 0
        %2302 = vmatpush1.bf16.msra.mxu0 0
        %2303 = vmatprep.subr.bf16.mxu0 0
        %2304 = vmatpush1.bf16.msra.mxu0 0
        %2305 = vmatprep.subr.bf16.mxu0 0
        %2306 = vmatpush1.bf16.msra.mxu0 0
        %2307 = vmatprep.subr.bf16.mxu0 0
        %2308 = vmatpush1.bf16.msra.mxu0 0
        %2309 = vmatprep.subr.bf16.mxu0 0
        %2310 = vmatpush1.bf16.msra.mxu0 0
        %2311 = vmatprep.subr.bf16.mxu0 0
        %2312 = vmatpush1.bf16.msra.mxu0 0
        %2313 = vmatprep.subr.bf16.mxu0 0
        %2314 = vmatpush1.bf16.msra.mxu0 0
        %2315 = vmatprep.mubr.bf16.mxu0 0
        %2316 = vmatmul.mubr.bf16.gmra.mrb[0].mxu0 %v2277
        %v2317 = vpop.f32.mrb[0].mxu0
        %v2318 = vadd.f32 0.0, %v2317
        %v2319 = vpop.f32.mrb[0].mxu0
        %v2320 = vpop.f32.mrb[0].mxu0
        %v2321 = vpop.f32.mrb[0].mxu0
        %2322 = vdwg.mxu0
        %v2324 = vsel %vm2217, %v2273, 0
        %v2327 = vsel %vm2279, %v2028, 0
        %2329 = vmatprep.subr.bf16.mxu0 0
        %2330 = vmatpush1.bf16.msra.mxu0 %v2327
        %2331 = vmatprep.subr.bf16.mxu0 0
        %2332 = vmatpush1.bf16.msra.mxu0 0
        %2333 = vmatprep.subr.bf16.mxu0 0
        %2334 = vmatpush1.bf16.msra.mxu0 0
        %2335 = vmatprep.subr.bf16.mxu0 0
        %2336 = vmatpush1.bf16.msra.mxu0 0
        %2337 = vmatprep.subr.bf16.mxu0 0
        %2338 = vmatpush1.bf16.msra.mxu0 0
        %2339 = vmatprep.subr.bf16.mxu0 0
        %2340 = vmatpush1.bf16.msra.mxu0 0
        %2341 = vmatprep.subr.bf16.mxu0 0
        %2342 = vmatpush1.bf16.msra.mxu0 0
        %2343 = vmatprep.subr.bf16.mxu0 0
        %2344 = vmatpush1.bf16.msra.mxu0 0
        %2345 = vmatprep.subr.bf16.mxu0 0
        %2346 = vmatpush1.bf16.msra.mxu0 0
        %2347 = vmatprep.subr.bf16.mxu0 0
        %2348 = vmatpush1.bf16.msra.mxu0 0
        %2349 = vmatprep.subr.bf16.mxu0 0
        %2350 = vmatpush1.bf16.msra.mxu0 0
        %2351 = vmatprep.subr.bf16.mxu0 0
        %2352 = vmatpush1.bf16.msra.mxu0 0
        %2353 = vmatprep.subr.bf16.mxu0 0
        %2354 = vmatpush1.bf16.msra.mxu0 0
        %2355 = vmatprep.subr.bf16.mxu0 0
        %2356 = vmatpush1.bf16.msra.mxu0 0
        %2357 = vmatprep.subr.bf16.mxu0 0
        %2358 = vmatpush1.bf16.msra.mxu0 0
        %2359 = vmatprep.subr.bf16.mxu0 0
        %2360 = vmatpush1.bf16.msra.mxu0 0
        %2361 = vmatprep.mubr.bf16.mxu0 0
        %2362 = vmatmul.mubr.bf16.gmra.mrb[0].mxu0 %v2324
        %v2363 = vpop.f32.mrb[0].mxu0
        %v2364 = vadd.f32 0.0, %v2363
        %v2365 = vpop.f32.mrb[0].mxu0
        %v2366 = vpop.f32.mrb[0].mxu0
        %v2367 = vpop.f32.mrb[0].mxu0
        %2368 = vdwg.mxu0
        %v2370 = vsel %vm2217, %v2274, 0
        %v2373 = vsel %vm2279, %v2029, 0
        %2375 = vmatprep.subr.bf16.mxu0 0
        %2376 = vmatpush1.bf16.msra.mxu0 %v2373
        %2377 = vmatprep.subr.bf16.mxu0 0
        %2378 = vmatpush1.bf16.msra.mxu0 0
        %2379 = vmatprep.subr.bf16.mxu0 0
        %2380 = vmatpush1.bf16.msra.mxu0 0
        %2381 = vmatprep.subr.bf16.mxu0 0
        %2382 = vmatpush1.bf16.msra.mxu0 0
        %2383 = vmatprep.subr.bf16.mxu0 0
        %2384 = vmatpush1.bf16.msra.mxu0 0
        %2385 = vmatprep.subr.bf16.mxu0 0
        %2386 = vmatpush1.bf16.msra.mxu0 0
        %2387 = vmatprep.subr.bf16.mxu0 0
        %2388 = vmatpush1.bf16.msra.mxu0 0
        %2389 = vmatprep.subr.bf16.mxu0 0
        %2390 = vmatpush1.bf16.msra.mxu0 0
        %2391 = vmatprep.subr.bf16.mxu0 0
        %2392 = vmatpush1.bf16.msra.mxu0 0
        %2393 = vmatprep.subr.bf16.mxu0 0
        %2394 = vmatpush1.bf16.msra.mxu0 0
        %2395 = vmatprep.subr.bf16.mxu0 0
        %2396 = vmatpush1.bf16.msra.mxu0 0
        %2397 = vmatprep.subr.bf16.mxu0 0
        %2398 = vmatpush1.bf16.msra.mxu0 0
        %2399 = vmatprep.subr.bf16.mxu0 0
        %2400 = vmatpush1.bf16.msra.mxu0 0
        %2401 = vmatprep.subr.bf16.mxu0 0
        %2402 = vmatpush1.bf16.msra.mxu0 0
        %2403 = vmatprep.subr.bf16.mxu0 0
        %2404 = vmatpush1.bf16.msra.mxu0 0
        %2405 = vmatprep.subr.bf16.mxu0 0
        %2406 = vmatpush1.bf16.msra.mxu0 0
        %2407 = vmatprep.mubr.bf16.mxu0 0
        %2408 = vmatmul.mubr.bf16.gmra.mrb[0].mxu0 %v2370
        %v2409 = vpop.f32.mrb[0].mxu0
        %v2410 = vadd.f32 0.0, %v2409
        %v2411 = vpop.f32.mrb[0].mxu0
        %v2412 = vpop.f32.mrb[0].mxu0
        %v2413 = vpop.f32.mrb[0].mxu0
        %2414 = vdwg.mxu0
        %v2416 = vsel %vm2217, %v2275, 0
        %v2419 = vsel %vm2279, %v2030, 0
        %2421 = vmatprep.subr.bf16.mxu0 0
        %2422 = vmatpush1.bf16.msra.mxu0 %v2419
        %2423 = vmatprep.subr.bf16.mxu0 0
        %2424 = vmatpush1.bf16.msra.mxu0 0
        %2425 = vmatprep.subr.bf16.mxu0 0
        %2426 = vmatpush1.bf16.msra.mxu0 0
        %2427 = vmatprep.subr.bf16.mxu0 0
        %2428 = vmatpush1.bf16.msra.mxu0 0
        %2429 = vmatprep.subr.bf16.mxu0 0
        %2430 = vmatpush1.bf16.msra.mxu0 0
        %2431 = vmatprep.subr.bf16.mxu0 0
        %2432 = vmatpush1.bf16.msra.mxu0 0
        %2433 = vmatprep.subr.bf16.mxu0 0
        %2434 = vmatpush1.bf16.msra.mxu0 0
        %2435 = vmatprep.subr.bf16.mxu0 0
        %2436 = vmatpush1.bf16.msra.mxu0 0
        %2437 = vmatprep.subr.bf16.mxu0 0
        %2438 = vmatpush1.bf16.msra.mxu0 0
        %2439 = vmatprep.subr.bf16.mxu0 0
        %2440 = vmatpush1.bf16.msra.mxu0 0
        %2441 = vmatprep.subr.bf16.mxu0 0
        %2442 = vmatpush1.bf16.msra.mxu0 0
        %2443 = vmatprep.subr.bf16.mxu0 0
        %2444 = vmatpush1.bf16.msra.mxu0 0
        %2445 = vmatprep.subr.bf16.mxu0 0
        %2446 = vmatpush1.bf16.msra.mxu0 0
        %2447 = vmatprep.subr.bf16.mxu0 0
        %2448 = vmatpush1.bf16.msra.mxu0 0
        %2449 = vmatprep.subr.bf16.mxu0 0
        %2450 = vmatpush1.bf16.msra.mxu0 0
        %2451 = vmatprep.subr.bf16.mxu0 0
        %2452 = vmatpush1.bf16.msra.mxu0 0
        %2453 = vmatprep.mubr.bf16.mxu0 0
        %2454 = vmatmul.mubr.bf16.gmra.mrb[0].mxu0 %v2416
        %v2455 = vpop.f32.mrb[0].mxu0
        %v2456 = vadd.f32 0.0, %v2455
        %v2457 = vpop.f32.mrb[0].mxu0
        %v2458 = vpop.f32.mrb[0].mxu0
        %v2459 = vpop.f32.mrb[0].mxu0
        %2460 = vdwg.mxu0
        %v2461 = vcombine.low %v2318, %v2410
        %v2462 = vcombine.high %v2318, %v2410
        %v2464 = vunpack.c.l.s4 1983009808
        %v2465 = vunpack.c.0.s8 %v2464
        %v2466 = vlaneseq
        %v2467 = vshrl.u32 %v2466, 7
        %v2468 = vsub.s32 %v2465, %v2467
        %v2469 = vrot.slane %v2461, %v2468
        %v2471 = vunpack.c.l.s4 1983009808
        %v2472 = vunpack.c.0.s8 %v2471
        %v2473 = vlaneseq
        %v2474 = vshrl.u32 %v2473, 7
        %v2475 = vsub.s32 %v2472, %v2474
        %v2476 = vrot.slane %v2462, %v2475
        %v2477 = vcombine.low %v2364, %v2456
        %v2478 = vcombine.high %v2364, %v2456
        %v2480 = vunpack.c.l.s4 1983009808
        %v2481 = vunpack.c.0.s8 %v2480
        %v2482 = vlaneseq
        %v2483 = vshrl.u32 %v2482, 7
        %v2484 = vsub.s32 %v2481, %v2483
        %v2485 = vrot.slane %v2477, %v2484
        %v2487 = vunpack.c.l.s4 1983009808
        %v2488 = vunpack.c.0.s8 %v2487
        %v2489 = vlaneseq
        %v2490 = vshrl.u32 %v2489, 7
        %v2491 = vsub.s32 %v2488, %v2490
        %v2492 = vrot.slane %v2478, %v2491
        %v2493 = vcombine.low %v2469, %v2485
        %v2494 = vcombine.high %v2469, %v2485
        %v2496 = vunpack.c.l.s4 1934713408
        %v2497 = vunpack.c.0.s8 %v2496
        %v2498 = vlaneseq
        %v2499 = vshrl.u32 %v2498, 7
        %v2500 = vsub.s32 %v2497, %v2499
        %v2501 = vrot.slane %v2493, %v2500
        %v2503 = vunpack.c.l.s4 1934713408
        %v2504 = vunpack.c.0.s8 %v2503
        %v2505 = vlaneseq
        %v2506 = vshrl.u32 %v2505, 7
        %v2507 = vsub.s32 %v2504, %v2506
        %v2508 = vrot.slane %v2494, %v2507
        %v2509 = vcombine.low %v2476, %v2492
        %v2510 = vcombine.high %v2476, %v2492
        %v2512 = vunpack.c.l.s4 1934713408
        %v2513 = vunpack.c.0.s8 %v2512
        %v2514 = vlaneseq
        %v2515 = vshrl.u32 %v2514, 7
        %v2516 = vsub.s32 %v2513, %v2515
        %v2517 = vrot.slane %v2509, %v2516
        %v2519 = vunpack.c.l.s4 1934713408
        %v2520 = vunpack.c.0.s8 %v2519
        %v2521 = vlaneseq
        %v2522 = vshrl.u32 %v2521, 7
        %v2523 = vsub.s32 %v2520, %v2522
        %v2524 = vrot.slane %v2510, %v2523
        %v2525 = vcombine.high %v2501, 0.0
        %v2526 = vcombine.high %v2508, 0.0
        %v2527 = vcombine.high %v2517, 0.0
        %v2528 = vcombine.high %v2524, 0.0
        %v2529 = vcombine.low %v2501, %v2508
        %v2531 = vunpack.c.l.s4 1983009808
        %v2532 = vunpack.c.0.s8 %v2531
        %v2533 = vlaneseq
        %v2534 = vshrl.u32 %v2533, 7
        %v2535 = vsub.s32 %v2532, %v2534
        %v2536 = vrot.slane %v2529, %v2535
        %v2537 = vcombine.low %v2525, %v2526
        %v2539 = vunpack.c.l.s4 1983009808
        %v2540 = vunpack.c.0.s8 %v2539
        %v2541 = vlaneseq
        %v2542 = vshrl.u32 %v2541, 7
        %v2543 = vsub.s32 %v2540, %v2542
        %v2544 = vrot.slane %v2537, %v2543
        %v2545 = vcombine.low %v2517, %v2524
        %v2547 = vunpack.c.l.s4 1983009808
        %v2548 = vunpack.c.0.s8 %v2547
        %v2549 = vlaneseq
        %v2550 = vshrl.u32 %v2549, 7
        %v2551 = vsub.s32 %v2548, %v2550
        %v2552 = vrot.slane %v2545, %v2551
        %v2553 = vcombine.low %v2527, %v2528
        %v2555 = vunpack.c.l.s4 1983009808
        %v2556 = vunpack.c.0.s8 %v2555
        %v2557 = vlaneseq
        %v2558 = vshrl.u32 %v2557, 7
        %v2559 = vsub.s32 %v2556, %v2558
        %v2560 = vrot.slane %v2553, %v2559
        %v2561 = vcombine.low %v2536, %v2544
        %v2562 = vcombine.high %v2536, %v2544
        %v2564 = vunpack.c.l.s4 1934713408
        %v2565 = vunpack.c.0.s8 %v2564
        %v2566 = vlaneseq
        %v2567 = vshrl.u32 %v2566, 7
        %v2568 = vsub.s32 %v2565, %v2567
        %v2569 = vrot.slane %v2561, %v2568
        %v2571 = vunpack.c.l.s4 1934713408
        %v2572 = vunpack.c.0.s8 %v2571
        %v2573 = vlaneseq
        %v2574 = vshrl.u32 %v2573, 7
        %v2575 = vsub.s32 %v2572, %v2574
        %v2576 = vrot.slane %v2562, %v2575
        %v2577 = vcombine.low %v2552, %v2560
        %v2578 = vcombine.high %v2552, %v2560
        %v2580 = vunpack.c.l.s4 1934713408
        %v2581 = vunpack.c.0.s8 %v2580
        %v2582 = vlaneseq
        %v2583 = vshrl.u32 %v2582, 7
        %v2584 = vsub.s32 %v2581, %v2583
        %v2585 = vrot.slane %v2577, %v2584
        %v2587 = vunpack.c.l.s4 1934713408
        %v2588 = vunpack.c.0.s8 %v2587
        %v2589 = vlaneseq
        %v2590 = vshrl.u32 %v2589, 7
        %v2591 = vsub.s32 %v2588, %v2590
        %v2592 = vrot.slane %v2578, %v2591
        %v2593 = vcombine.low %v2569, %v2585
        %v2594 = vcombine.high %v2569, %v2585
        %v2595 = vcombine.low %v2576, %v2592
        %v2596 = vcombine.high %v2576, %v2592
        %2598 = vrot.lane.b32.xlu0 %v2594, 32
        %v2599 = vpop.permute.xlu0 %2598
        %2602 = vrot.lane.b32.xlu0 %v2595, 64
        %v2603 = vpop.permute.xlu0 %2602
        %2606 = vrot.lane.b32.xlu0 %v2596, 96
        %v2607 = vpop.permute.xlu0 %2606
        %v2609 = vsel %vm2032, %v2593, %v2599
        %vm2610 = vcmask 523264
        %v2611 = vsel %vm2610, %v2609, %v2603
        %vm2612 = vcmask 785408
        %v2613 = vsel %vm2612, %v2611, %v2607
        %v2614 = vpack.c.bf16 %v2613, %v2613
        %v2615 = vld [vmem:[%s1025] sm:$0xf]
        %v2616 = vld [vmem:[%s1025 + $0x4] sm:$0xf]
        %v2617 = vld [vmem:[%s1025 + $0x8] sm:$0xf]
        %v2618 = vld [vmem:[%s1025 + $0xc] sm:$0xf]
        %v2619 = vld [vmem:[%s1025 + $0x10] sm:$0xf]
        %v2620 = vld [vmem:[%s1025 + $0x14] sm:$0xf]
        %v2621 = vld [vmem:[%s1025 + $0x18] sm:$0xf]
        %v2622 = vld [vmem:[%s1025 + $0x1c] sm:$0xf]
        %v2623 = vld [vmem:[%s1025 + $0x20] sm:$0xf]
        %v2624 = vld [vmem:[%s1025 + $0x24] sm:$0xf]
        %v2625 = vld [vmem:[%s1025 + $0x28] sm:$0xf]
        %v2626 = vld [vmem:[%s1025 + $0x2c] sm:$0xf]
        %v2627 = vld [vmem:[%s1025 + $0x30] sm:$0xf]
        %v2628 = vld [vmem:[%s1025 + $0x34] sm:$0xf]
        %v2629 = vld [vmem:[%s1025 + $0x38] sm:$0xf]
        %v2630 = vld [vmem:[%s1025 + $0x3c] sm:$0xf]
        %v2631 = vld [vmem:[%s1033] sm:$0x1]
        %v2633 = vlaneseq
        %v2634 = vshrl.u32 %v2633, 7
        %v2635 = vsub.s32 0, %v2634
        %v2636 = vrot.slane %v2631, %v2635
        %v2654 = vunpack.c.l.b16 %v2615
        %v2655 = vunpack.c.l.b16 %v2616
        %v2656 = vunpack.c.l.b16 %v2617
        %v2657 = vunpack.c.l.b16 %v2618
        %v2658 = vunpack.c.l.b16 %v2619
        %v2659 = vunpack.c.l.b16 %v2620
        %v2660 = vunpack.c.l.b16 %v2621
        %v2661 = vunpack.c.l.b16 %v2622
        %v2662 = vunpack.c.l.b16 %v2623
        %v2663 = vunpack.c.l.b16 %v2624
        %v2664 = vunpack.c.l.b16 %v2625
        %v2665 = vunpack.c.l.b16 %v2626
        %v2666 = vunpack.c.l.b16 %v2627
        %v2667 = vunpack.c.l.b16 %v2628
        %v2668 = vunpack.c.l.b16 %v2629
        %v2669 = vunpack.c.l.b16 %v2630
        %v2670 = vpack.c.b16 %v2655, %v2654
        %v2671 = vpack.c.b16 %v2657, %v2656
        %v2672 = vpack.c.b16 %v2659, %v2658
        %v2673 = vpack.c.b16 %v2661, %v2660
        %v2674 = vpack.c.b16 %v2663, %v2662
        %v2675 = vpack.c.b16 %v2665, %v2664
        %v2676 = vpack.c.b16 %v2667, %v2666
        %v2677 = vpack.c.b16 %v2669, %v2668
        %2686 = vmatprep.subr.bf16.mxu0 0
        %2687 = vmatpush1.bf16.msra.mxu0 %v2670
        %2688 = vmatprep.subr.bf16.mxu0 0
        %2689 = vmatpush1.bf16.msra.mxu0 %v2671
        %2690 = vmatprep.subr.bf16.mxu0 0
        %2691 = vmatpush1.bf16.msra.mxu0 %v2672
        %2692 = vmatprep.subr.bf16.mxu0 0
        %2693 = vmatpush1.bf16.msra.mxu0 %v2673
        %2694 = vmatprep.subr.bf16.mxu0 0
        %2695 = vmatpush1.bf16.msra.mxu0 %v2674
        %2696 = vmatprep.subr.bf16.mxu0 0
        %2697 = vmatpush1.bf16.msra.mxu0 %v2675
        %2698 = vmatprep.subr.bf16.mxu0 0
        %2699 = vmatpush1.bf16.msra.mxu0 %v2676
        %2700 = vmatprep.subr.bf16.mxu0 0
        %2701 = vmatpush1.bf16.msra.mxu0 %v2677
        %2702 = vmatprep.subr.bf16.mxu0 0
        %2703 = vmatpush1.bf16.msra.mxu0 0
        %2704 = vmatprep.subr.bf16.mxu0 0
        %2705 = vmatpush1.bf16.msra.mxu0 0
        %2706 = vmatprep.subr.bf16.mxu0 0
        %2707 = vmatpush1.bf16.msra.mxu0 0
        %2708 = vmatprep.subr.bf16.mxu0 0
        %2709 = vmatpush1.bf16.msra.mxu0 0
        %2710 = vmatprep.subr.bf16.mxu0 0
        %2711 = vmatpush1.bf16.msra.mxu0 0
        %2712 = vmatprep.subr.bf16.mxu0 0
        %2713 = vmatpush1.bf16.msra.mxu0 0
        %2714 = vmatprep.subr.bf16.mxu0 0
        %2715 = vmatpush1.bf16.msra.mxu0 0
        %2716 = vmatprep.subr.bf16.mxu0 0
        %2717 = vmatpush1.bf16.msra.mxu0 0
        %2718 = vmatprep.mubr.bf16.mxu0 0
        %2719 = vmatmul.mubr.bf16.gmra.mrb[0].mxu0 %v2614
        %v2720 = vpop.f32.mrb[0].mxu0
        %v2721 = vadd.f32 %v2636, %v2720
        %v2722 = vpop.f32.mrb[0].mxu0
        %v2723 = vpop.f32.mrb[0].mxu0
        %v2724 = vpop.f32.mrb[0].mxu0
        %2725 = vdwg.mxu0
        %v2726 = vadd.f32 %v1241, %v2721
        %v2727 = vld [vmem:[%s1041] sm:$0x1]
        %v2728 = vld [vmem:[%s1049] sm:$0x1]
        %2729 = vadd.xlane.f32.xlu0 %v2726
        %v2730 = vpop.xlane.xlu0 %2729
        %v2731 = vrcp.pop 32.0
        %v2732 = vmul.f32 %v2730, %v2731
        %v2733 = vsub.f32 %v2726, %v2732
        %v2734 = vmul.f32 %v2733, %v1246
        %v2735 = vmul.f32 %v2734, %v2734
        %2736 = vadd.xlane.f32.xlu0 %v2735
        %v2737 = vpop.xlane.xlu0 %2736
        %v2738 = vmul.f32 %v2737, %v2731
        %v2739 = vadd.f32 %v2738, 1e-05
        %v2740 = vrsqrt.pop %v2739
        %v2741 = vmul.f32 %v2734, %v2740
        %v2743 = vlaneseq
        %v2744 = vshrl.u32 %v2743, 7
        %v2745 = vsub.s32 0, %v2744
        %v2746 = vrot.slane %v2727, %v2745
        %v2748 = vmul.f32 %v2741, %v2746
        %v2750 = vlaneseq
        %v2751 = vshrl.u32 %v2750, 7
        %v2752 = vsub.s32 0, %v2751
        %v2753 = vrot.slane %v2728, %v2752
        %v2755 = vadd.f32 %v2748, %v2753
        %v2756 = vpack.c.bf16 %v2755, %v2755
        %v2757 = vld [vmem:[%s1058] sm:$0xf]
        %v2758 = vld [vmem:[%s1058 + $0x4] sm:$0xf]
        %v2759 = vld [vmem:[%s1058 + $0x8] sm:$0xf]
        %v2760 = vld [vmem:[%s1058 + $0xc] sm:$0xf]
        %v2761 = vld [vmem:[%s1058 + $0x10] sm:$0xf]
        %v2762 = vld [vmem:[%s1058 + $0x14] sm:$0xf]
        %v2763 = vld [vmem:[%s1058 + $0x18] sm:$0xf]
        %v2764 = vld [vmem:[%s1058 + $0x1c] sm:$0xf]
        %v2765 = vld [vmem:[%s1058 + $0x20] sm:$0xf]
        %v2766 = vld [vmem:[%s1058 + $0x24] sm:$0xf]
        %v2767 = vld [vmem:[%s1058 + $0x28] sm:$0xf]
        %v2768 = vld [vmem:[%s1058 + $0x2c] sm:$0xf]
        %v2769 = vld [vmem:[%s1058 + $0x30] sm:$0xf]
        %v2770 = vld [vmem:[%s1058 + $0x34] sm:$0xf]
        %v2771 = vld [vmem:[%s1058 + $0x38] sm:$0xf]
        %v2772 = vld [vmem:[%s1058 + $0x3c] sm:$0xf]
        %v2773 = vld [vmem:[%s1066] sm:$0x1]
        %v2775 = vlaneseq
        %v2776 = vshrl.u32 %v2775, 7
        %v2777 = vsub.s32 0, %v2776
        %v2778 = vrot.slane %v2773, %v2777
        %v2796 = vunpack.c.l.b16 %v2757
        %v2797 = vunpack.c.l.b16 %v2758
        %v2798 = vunpack.c.l.b16 %v2759
        %v2799 = vunpack.c.l.b16 %v2760
        %v2800 = vunpack.c.l.b16 %v2761
        %v2801 = vunpack.c.l.b16 %v2762
        %v2802 = vunpack.c.l.b16 %v2763
        %v2803 = vunpack.c.l.b16 %v2764
        %v2804 = vunpack.c.l.b16 %v2765
        %v2805 = vunpack.c.l.b16 %v2766
        %v2806 = vunpack.c.l.b16 %v2767
        %v2807 = vunpack.c.l.b16 %v2768
        %v2808 = vunpack.c.l.b16 %v2769
        %v2809 = vunpack.c.l.b16 %v2770
        %v2810 = vunpack.c.l.b16 %v2771
        %v2811 = vunpack.c.l.b16 %v2772
        %v2812 = vpack.c.b16 %v2797, %v2796
        %v2813 = vpack.c.b16 %v2799, %v2798
        %v2814 = vpack.c.b16 %v2801, %v2800
        %v2815 = vpack.c.b16 %v2803, %v2802
        %v2816 = vpack.c.b16 %v2805, %v2804
        %v2817 = vpack.c.b16 %v2807, %v2806
        %v2818 = vpack.c.b16 %v2809, %v2808
        %v2819 = vpack.c.b16 %v2811, %v2810
        %2828 = vmatprep.subr.bf16.mxu0 0
        %2829 = vmatpush1.bf16.msra.mxu0 %v2812
        %2830 = vmatprep.subr.bf16.mxu0 0
        %2831 = vmatpush1.bf16.msra.mxu0 %v2813
        %2832 = vmatprep.subr.bf16.mxu0 0
        %2833 = vmatpush1.bf16.msra.mxu0 %v2814
        %2834 = vmatprep.subr.bf16.mxu0 0
        %2835 = vmatpush1.bf16.msra.mxu0 %v2815
        %2836 = vmatprep.subr.bf16.mxu0 0
        %2837 = vmatpush1.bf16.msra.mxu0 %v2816
        %2838 = vmatprep.subr.bf16.mxu0 0
        %2839 = vmatpush1.bf16.msra.mxu0 %v2817
        %2840 = vmatprep.subr.bf16.mxu0 0
        %2841 = vmatpush1.bf16.msra.mxu0 %v2818
        %2842 = vmatprep.subr.bf16.mxu0 0
        %2843 = vmatpush1.bf16.msra.mxu0 %v2819
        %2844 = vmatprep.subr.bf16.mxu0 0
        %2845 = vmatpush1.bf16.msra.mxu0 0
        %2846 = vmatprep.subr.bf16.mxu0 0
        %2847 = vmatpush1.bf16.msra.mxu0 0
        %2848 = vmatprep.subr.bf16.mxu0 0
        %2849 = vmatpush1.bf16.msra.mxu0 0
        %2850 = vmatprep.subr.bf16.mxu0 0
        %2851 = vmatpush1.bf16.msra.mxu0 0
        %2852 = vmatprep.subr.bf16.mxu0 0
        %2853 = vmatpush1.bf16.msra.mxu0 0
        %2854 = vmatprep.subr.bf16.mxu0 0
        %2855 = vmatpush1.bf16.msra.mxu0 0
        %2856 = vmatprep.subr.bf16.mxu0 0
        %2857 = vmatpush1.bf16.msra.mxu0 0
        %2858 = vmatprep.subr.bf16.mxu0 0
        %2859 = vmatpush1.bf16.msra.mxu0 0
        %2860 = vmatprep.mubr.bf16.mxu0 0
        %2861 = vmatmul.mubr.bf16.gmra.mrb[0].mxu0 %v2756
        %v2862 = vpop.f32.mrb[0].mxu0
        %v2863 = vadd.f32 %v2778, %v2862
        %v2864 = vpop.f32.mrb[0].mxu0
        %v2865 = vpop.f32.mrb[0].mxu0
        %v2866 = vpop.f32.mrb[0].mxu0
        %2867 = vdwg.mxu0
        %v2868 = vmax.f32 %v2863, 0.0
        %v2869 = vpack.c.bf16 %v2868, %v2868
        %v2870 = vld [vmem:[%s1075] sm:$0xf]
        %v2871 = vld [vmem:[%s1075 + $0x4] sm:$0xf]
        %v2872 = vld [vmem:[%s1075 + $0x8] sm:$0xf]
        %v2873 = vld [vmem:[%s1075 + $0xc] sm:$0xf]
        %v2874 = vld [vmem:[%s1075 + $0x10] sm:$0xf]
        %v2875 = vld [vmem:[%s1075 + $0x14] sm:$0xf]
        %v2876 = vld [vmem:[%s1075 + $0x18] sm:$0xf]
        %v2877 = vld [vmem:[%s1075 + $0x1c] sm:$0xf]
        %v2878 = vld [vmem:[%s1075 + $0x20] sm:$0xf]
        %v2879 = vld [vmem:[%s1075 + $0x24] sm:$0xf]
        %v2880 = vld [vmem:[%s1075 + $0x28] sm:$0xf]
        %v2881 = vld [vmem:[%s1075 + $0x2c] sm:$0xf]
        %v2882 = vld [vmem:[%s1075 + $0x30] sm:$0xf]
        %v2883 = vld [vmem:[%s1075 + $0x34] sm:$0xf]
        %v2884 = vld [vmem:[%s1075 + $0x38] sm:$0xf]
        %v2885 = vld [vmem:[%s1075 + $0x3c] sm:$0xf]
        %v2886 = vld [vmem:[%s1083] sm:$0x1]
        %v2888 = vlaneseq
        %v2889 = vshrl.u32 %v2888, 7
        %v2890 = vsub.s32 0, %v2889
        %v2891 = vrot.slane %v2886, %v2890
        %v2909 = vunpack.c.l.b16 %v2870
        %v2910 = vunpack.c.l.b16 %v2871
        %v2911 = vunpack.c.l.b16 %v2872
        %v2912 = vunpack.c.l.b16 %v2873
        %v2913 = vunpack.c.l.b16 %v2874
        %v2914 = vunpack.c.l.b16 %v2875
        %v2915 = vunpack.c.l.b16 %v2876
        %v2916 = vunpack.c.l.b16 %v2877
        %v2917 = vunpack.c.l.b16 %v2878
        %v2918 = vunpack.c.l.b16 %v2879
        %v2919 = vunpack.c.l.b16 %v2880
        %v2920 = vunpack.c.l.b16 %v2881
        %v2921 = vunpack.c.l.b16 %v2882
        %v2922 = vunpack.c.l.b16 %v2883
        %v2923 = vunpack.c.l.b16 %v2884
        %v2924 = vunpack.c.l.b16 %v2885
        %v2925 = vpack.c.b16 %v2910, %v2909
        %v2926 = vpack.c.b16 %v2912, %v2911
        %v2927 = vpack.c.b16 %v2914, %v2913
        %v2928 = vpack.c.b16 %v2916, %v2915
        %v2929 = vpack.c.b16 %v2918, %v2917
        %v2930 = vpack.c.b16 %v2920, %v2919
        %v2931 = vpack.c.b16 %v2922, %v2921
        %v2932 = vpack.c.b16 %v2924, %v2923
        %2941 = vmatprep.subr.bf16.mxu0 0
        %2942 = vmatpush1.bf16.msra.mxu0 %v2925
        %2943 = vmatprep.subr.bf16.mxu0 0
        %2944 = vmatpush1.bf16.msra.mxu0 %v2926
        %2945 = vmatprep.subr.bf16.mxu0 0
        %2946 = vmatpush1.bf16.msra.mxu0 %v2927
        %2947 = vmatprep.subr.bf16.mxu0 0
        %2948 = vmatpush1.bf16.msra.mxu0 %v2928
        %2949 = vmatprep.subr.bf16.mxu0 0
        %2950 = vmatpush1.bf16.msra.mxu0 %v2929
        %2951 = vmatprep.subr.bf16.mxu0 0
        %2952 = vmatpush1.bf16.msra.mxu0 %v2930
        %2953 = vmatprep.subr.bf16.mxu0 0
        %2954 = vmatpush1.bf16.msra.mxu0 %v2931
        %2955 = vmatprep.subr.bf16.mxu0 0
        %2956 = vmatpush1.bf16.msra.mxu0 %v2932
        %2957 = vmatprep.subr.bf16.mxu0 0
        %2958 = vmatpush1.bf16.msra.mxu0 0
        %2959 = vmatprep.subr.bf16.mxu0 0
        %2960 = vmatpush1.bf16.msra.mxu0 0
        %2961 = vmatprep.subr.bf16.mxu0 0
        %2962 = vmatpush1.bf16.msra.mxu0 0
        %2963 = vmatprep.subr.bf16.mxu0 0
        %2964 = vmatpush1.bf16.msra.mxu0 0
        %2965 = vmatprep.subr.bf16.mxu0 0
        %2966 = vmatpush1.bf16.msra.mxu0 0
        %2967 = vmatprep.subr.bf16.mxu0 0
        %2968 = vmatpush1.bf16.msra.mxu0 0
        %2969 = vmatprep.subr.bf16.mxu0 0
        %2970 = vmatpush1.bf16.msra.mxu0 0
        %2971 = vmatprep.subr.bf16.mxu0 0
        %2972 = vmatpush1.bf16.msra.mxu0 0
        %2973 = vmatprep.mubr.bf16.mxu0 0
        %2974 = vmatmul.mubr.bf16.gmra.mrb[0].mxu0 %v2869
        %v2975 = vpop.f32.mrb[0].mxu0
        %v2976 = vadd.f32 %v2891, %v2975
        %v2977 = vpop.f32.mrb[0].mxu0
        %v2978 = vpop.f32.mrb[0].mxu0
        %v2979 = vpop.f32.mrb[0].mxu0
        %2980 = vdwg.mxu0
        %v2981 = vadd.f32 %v2755, %v2976
        %v2982 = vld [vmem:[%s1091] sm:$0x1]
        %v2983 = vld [vmem:[%s1099] sm:$0x1]
        %2984 = vadd.xlane.f32.xlu0 %v2981
        %v2985 = vpop.xlane.xlu0 %2984
        %v2986 = vmul.f32 %v2985, %v2731
        %v2987 = vsub.f32 %v2981, %v2986
        %v2988 = vmul.f32 %v2987, %v1246
        %v2989 = vmul.f32 %v2988, %v2988
        %2990 = vadd.xlane.f32.xlu0 %v2989
        %v2991 = vpop.xlane.xlu0 %2990
        %v2992 = vmul.f32 %v2991, %v2731
        %v2993 = vadd.f32 %v2992, 1e-05
        %v2994 = vrsqrt.pop %v2993
        %v2995 = vmul.f32 %v2988, %v2994
        %v2997 = vlaneseq
        %v2998 = vshrl.u32 %v2997, 7
        %v2999 = vsub.s32 0, %v2998
        %v3000 = vrot.slane %v2982, %v2999
        %v3002 = vmul.f32 %v2995, %v3000
        %v3004 = vlaneseq
        %v3005 = vshrl.u32 %v3004, 7
        %v3006 = vsub.s32 0, %v3005
        %v3007 = vrot.slane %v2983, %v3006
        %v3009 = vadd.f32 %v3002, %v3007
        %3010 = vst [vmem:[#allocation2] sm:$0xff] %v3009
        %p3011 = scmp.eq.s32.totalorder %s72, 1
        // Predicated region
        $region169: #{transformer_forward.2} parent=91 // pred_check
          %p3012 = pneg %p3011
        $region170: #{transformer_forward.2} parent=91 // pred_check_branch
          %3014 = sbr.rel (%p3012) target = $region172
        $region171: #{transformer_forward.2} parent=91 // pred_region
          %3015 = vst [vmem:[%s1226] sm:$0xff] %v3009
          %3016 = vst.msk [vmem:[%s1233] sm:$0xff] %vm2217, %v2268
          %3017 = vst.msk [vmem:[%s1233 + $0x8] sm:$0xff] %vm2217, %v2269
          %3018 = vst.msk [vmem:[%s1233 + $0x10] sm:$0xff] %vm2217, %v2270
          %3019 = vst.msk [vmem:[%s1233 + $0x18] sm:$0xff] %vm2217, %v2271
        $region172: #{transformer_forward.2} parent=91 // pred_fallthru
          _
        %s3020 = sand.u32 %s555, 1
        %s3021 = scalar_lea.sflag [#allocation5], %s3020
        %s3022 = sand.u32 %s555, 1
        %s3023 = smul.addr %s3022, 8
        %s3024 = scalar_lea.vmem [#allocation32], %s3023
        %s3025 = sand.u32 %s581, 1
        %s3026 = scalar_lea.sflag [#allocation34], %s3025
        %s3027 = sand.u32 %s581, 1
        %s3028 = smul.addr %s3027, 32
        %s3029 = scalar_lea.vmem [#allocation33], %s3028
        // Predicated region
        $region173: #{transformer_forward.2} parent=91 // pred_check
          %p3030 = pneg %p565
        $region174: #{transformer_forward.2} parent=91 // pred_check_branch
          %3032 = sbr.rel (%p3030) target = $region176
        $region175: #{transformer_forward.2} parent=91 // pred_region
          %s3034 = ssub.s32 128, 128
          %3035 = vsyncadd %s3021, %s3034
          %s3036 = smul.addr %s71, 128
          %s3037 = scalar_lea.hbm %s18, %s3036
          %s3039 = sshll.u32 %s3024, 4
          %s3040 = int_to_ptr.vmem [resolvable:$true] %s3039
          %3042 = dma.vmem_to_hbm [thread:$0]  %s3040, 128, %s3037, %s3021
        $region176: #{transformer_forward.2} parent=91 // pred_fallthru
          _
        // Predicated region
        $region177: #{transformer_forward.2} parent=91 // pred_check
          %p3043 = pneg %p591
        $region178: #{transformer_forward.2} parent=91 // pred_check_branch
          %3045 = sbr.rel (%p3043) target = $region180
        $region179: #{transformer_forward.2} parent=91 // pred_region
          %s3047 = ssub.s32 512, 512
          %3048 = vsyncadd %s3026, %s3047
          %s3049 = smul.addr %s71, 4
          %s3050 = smul.addr %s3049, 128
          %s3051 = scalar_lea.hbm %s19, %s3050
          %s3052 = sshll.u32 %s3029, 4
          %s3053 = int_to_ptr.vmem [resolvable:$true] %s3052
          %3058 = dma.vmem_to_hbm [thread:$0]  %s3053, 512, %s3051, %s3026, 128, 128, 8
        $region180: #{transformer_forward.2} parent=91 // pred_fallthru
          _
      $region92: #{transformer_forward.2} parent=5 // pred_fallthru
        _
      %p3059 = scmp.le.s32.totalorder 2, %s62
      // Predicated region
      $region181: #{transformer_forward.2} parent=5 // pred_check
        %p3060 = pneg %p3059
      $region182: #{transformer_forward.2} parent=5 // pred_check_branch
        %3062 = sbr.rel (%p3060) target = $region184
      $region183: #{transformer_forward.2} parent=5 // pred_region
        %s3063 = ssub.s32 %s62, 2
        // Predicated region
        $region185: #{transformer_forward.2} parent=183 // pred_check
          %p3064 = pneg %p571
        $region186: #{transformer_forward.2} parent=183 // pred_check_branch
          %3066 = sbr.rel (%p3064) target = $region188
        $region187: #{transformer_forward.2} parent=183 // pred_region
          %s3067 = sand.u32 %s556, 1
          %s3068 = scalar_lea.sflag [#allocation5], %s3067
          %s3069 = sand.u32 %s556, 1
          %s3070 = smul.addr %s3069, 8
          %s3071 = scalar_lea.vmem [#allocation32], %s3070
          %3072 = dma.done %s3068, 128
        $region188: #{transformer_forward.2} parent=183 // pred_fallthru
          _
        // Predicated region
        $region189: #{transformer_forward.2} parent=183 // pred_check
          %p3073 = pneg %p597
        $region190: #{transformer_forward.2} parent=183 // pred_check_branch
          %3075 = sbr.rel (%p3073) target = $region192
        $region191: #{transformer_forward.2} parent=183 // pred_region
          %s3076 = sand.u32 %s582, 1
          %s3077 = scalar_lea.sflag [#allocation34], %s3076
          %s3078 = sand.u32 %s582, 1
          %s3079 = smul.addr %s3078, 32
          %s3080 = scalar_lea.vmem [#allocation33], %s3079
          %3081 = dma.done %s3077, 512
        $region192: #{transformer_forward.2} parent=183 // pred_fallthru
          _
      $region184: #{transformer_forward.2} parent=5 // pred_fallthru
        _
    $region6: #{transformer_forward.2} parent=1 // loop_footer
      %s66 = sadd.s32 1, %s62
    $region7: #{transformer_forward.2} parent=1 // loop_footer_branch
      %61 = sbr.rel target = $region3
    $region8: #{transformer_forward.2} parent=1 // loop_exit
      _
    %3082 = vsyncpa [#allocation4], 1
    %s3083 = scalar_lea.sflag [#allocation4], 1
    %3084 = vsyncpa %s3083, 1
    %3085 = vsyncpa [#allocation7], 1
    %s3086 = scalar_lea.sflag [#allocation7], 1
    %3087 = vsyncpa %s3086, 1
    %3088 = vsyncpa [#allocation10], 1
    %s3089 = scalar_lea.sflag [#allocation10], 1
    %3090 = vsyncpa %s3089, 1
    %3091 = vsyncpa [#allocation13], 1
    %s3092 = scalar_lea.sflag [#allocation13], 1
    %3093 = vsyncpa %s3092, 1
    %3094 = vsyncpa [#allocation16], 1
    %s3095 = scalar_lea.sflag [#allocation16], 1
    %3096 = vsyncpa %s3095, 1
    %3097 = vsyncpa [#allocation19], 1
    %s3098 = scalar_lea.sflag [#allocation19], 1
    %3099 = vsyncpa %s3098, 1
    %3100 = vsyncpa [#allocation22], 1
    %s3101 = scalar_lea.sflag [#allocation22], 1
    %3102 = vsyncpa %s3101, 1
    %3103 = vsyncpa [#allocation25], 1
    %s3104 = scalar_lea.sflag [#allocation25], 1
    %3105 = vsyncpa %s3104, 1
    %3106 = vsyncpa [#allocation28], 1
    %s3107 = scalar_lea.sflag [#allocation28], 1
    %3108 = vsyncpa %s3107, 1
    %3109 = vsyncpa [#allocation31], 1
    %s3110 = scalar_lea.sflag [#allocation31], 1
    %3111 = vsyncpa %s3110, 1
    %3112 = vsyncpa [#allocation5], 1
    %s3113 = scalar_lea.sflag [#allocation5], 1
    %3114 = vsyncpa %s3113, 1
    %3115 = vsyncpa [#allocation34], 1
    %s3116 = scalar_lea.sflag [#allocation34], 1
    %3117 = vsyncpa %s3116, 1

</llo_original>
